<compile_context>
chip_gen: v7x
topology: tpu7x:2x2x1
jax: 0.10.0
libtpu: 0.0.40
codegen_flags: <defaults>
</compile_context>

<pallas_src>
import numpy as np
import jax
import jax.numpy as jnp
from jax.experimental import pallas as pl
from jax.experimental.pallas import tpu as pltpu

C = 2                    # conv channels (in == out == 2)
H = 16                   # height
W = 32                   # width
HW = H * W               # 512 flattened spatial size per channel
FLAT = C * HW            # 1024, matches out.view(-1, 1024)
PAD = 128                # lane padding each side of the flattened row (covers |shift| <= 33,
                         # and keeps the interior store lane-aligned)
PADW = HW + 2 * PAD      # 768
QB = 1                   # Encoder.B (1 bit per sigmoid output)
# TODO(synk): general B>1 Num2Bit bit-unpacking (extra bit axis) not implemented; B==1 here.


def _encoder_kernel(x_ref, w1_ref, b1_ref, w2_ref, b2_ref, wfc_ref, bfc_ref,
                    bits_ref, ori_ref, pad_ref):
    """Fused encoder for one batch tile.

    x_ref   : (TB, FLAT)        VMEM  flattened NCHW input tile (lane-dense)
    w1_ref  : (C*C*9,)          SMEM  conv1 weight (OIHW, flattened)
    b1_ref  : (C,)              SMEM  conv1 bias
    w2_ref  : (C*C*9,)          SMEM  conv2 weight
    b2_ref  : (C,)              SMEM  conv2 bias
    wfc_ref : (C, HW, out_dim)  VMEM  fc weight, resident across grid steps
    bfc_ref : (1, out_dim)      VMEM  fc bias
    bits_ref: (TB, out_dim)     VMEM  quantized bits (B == 1)
    ori_ref : (TB, out_dim)     VMEM  pre-quantization sigmoid (PyTorch self.out_ori)
    pad_ref : (C, TB, PADW)     VMEM  scratch: zero-padded flattened channel rows
    """
    tb = x_ref.shape[0]

    # Column-validity masks: a flattened lane shift of +-1 wraps across image rows,
    # so taps reading column w-1 (kw==0) are invalid at w==0 and taps reading w+1
    # (kw==2) are invalid at w==W-1.  Row over/underflow lands in the zero padding
    # (the single in-buffer wrap cases are exactly the ones these masks kill).
    lane = jax.lax.broadcasted_iota(jnp.int32, (1, HW), 1)
    w_idx = lane % W
    mask_l = w_idx >= 1            # valid lanes for kw == 0 taps
    mask_r = w_idx <= (W - 2)      # valid lanes for kw == 2 taps

    # Zero only the padding borders (lane-aligned stores); the interior lanes are
    # fully overwritten by every conv call, so this is all the clearing needed and
    # it is correct even when the parallel grid axis is sharded across cores.
    zero_border = jnp.zeros((C, tb, PAD), jnp.float32)
    pad_ref[:, :, :PAD] = zero_border
    pad_ref[:, :, PAD + HW:] = zero_border

    def conv3x3_relu(chans, w_ref, b_ref):
        # chans: list of C values of shape (tb, HW). Returns list of C values.
        for ci in range(C):
            pad_ref[ci, :, PAD:PAD + HW] = chans[ci]     # lane-aligned interior store
        acc = [jnp.zeros((tb, HW), jnp.float32) + b_ref[co] for co in range(C)]
        for ci in range(C):
            padded = pad_ref[ci]                          # (tb, PADW), aligned load
            for kh in range(3):
                for kw in range(3):
                    d = (kh - 1) * W + (kw - 1)           # flattened lane shift
                    tap = padded[:, PAD + d:PAD + d + HW]
                    if kw == 0:
                        tap = jnp.where(mask_l, tap, 0.0)
                    elif kw == 2:
                        tap = jnp.where(mask_r, tap, 0.0)
                    k = kh * 3 + kw
                    for co in range(C):                   # each weight scalar used once
                        acc[co] = acc[co] + w_ref[(co * C + ci) * 9 + k] * tap
        return [jnp.maximum(a, 0.0) for a in acc]         # ReLU

    # Input channels as lane-aligned 512-wide slices of the flat tile.
    x_ch = [x_ref[:, ci * HW:(ci + 1) * HW] for ci in range(C)]
    h1 = conv3x3_relu(x_ch, w1_ref, b1_ref)               # conv1 + relu
    h2 = conv3x3_relu(h1, w2_ref, b2_ref)                 # conv2 + relu

    # fc over the flattened (C, H, W) features: C MXU matmuls with K = HW, fp32 acc.
    y = jnp.dot(h2[0], wfc_ref[0], preferred_element_type=jnp.float32)
    for ci in range(1, C):
        y = y + jnp.dot(h2[ci], wfc_ref[ci], preferred_element_type=jnp.float32)
    y = y + bfc_ref[...]

    s = jax.nn.sigmoid(y)
    ori_ref[...] = s
    # Quantization (B=1): n = round(s * 2^B - 0.5); Num2Bit keeps the LSB of uint8(n).
    n = jnp.round(s * (2.0 ** QB) - 0.5)
    bits_ref[...] = jnp.bitwise_and(n.astype(jnp.int32), 1).astype(jnp.float32)


def prepare_params(w1, b1, w2, b2, w_fc, b_fc):
    """One-time parameter preparation into kernel-ready layouts (no per-call transpose)."""
    out_dim = w_fc.shape[0]
    return (jnp.asarray(w1, jnp.float32).reshape(-1),
            jnp.asarray(b1, jnp.float32),
            jnp.asarray(w2, jnp.float32).reshape(-1),
            jnp.asarray(b2, jnp.float32),
            jnp.asarray(w_fc, jnp.float32).T.reshape(C, HW, out_dim),
            jnp.asarray(b_fc, jnp.float32).reshape(1, out_dim))


def encoder_forward(x, params, *, block_batch=128):
    """x: (batch, 2, 16, 32) float32 NCHW.  Returns (bits, out_ori)."""
    w1f, b1, w2f, b2, wfc_r, bfc2 = params
    out_dim = wfc_r.shape[-1]
    bn = x.shape[0]
    tb = min(block_batch, bn)
    bp = ((bn + tb - 1) // tb) * tb
    if bp != bn:
        x = jnp.pad(x, ((0, bp - bn), (0, 0), (0, 0), (0, 0)))
    x_flat = x.reshape(bp, FLAT)       # contiguous NCHW view -> free reshape, lane-dense

    bits, ori = pl.pallas_call(
        _encoder_kernel,
        out_shape=(jax.ShapeDtypeStruct((bp, out_dim), jnp.float32),
                   jax.ShapeDtypeStruct((bp, out_dim), jnp.float32)),
        grid=(bp // tb,),
        in_specs=[
            pl.BlockSpec((tb, FLAT), lambda i: (i, 0)),                # x tile
            pl.BlockSpec(memory_space=pltpu.MemorySpace.SMEM),         # w1 (36,)
            pl.BlockSpec(memory_space=pltpu.MemorySpace.SMEM),         # b1 (2,)
            pl.BlockSpec(memory_space=pltpu.MemorySpace.SMEM),         # w2 (36,)
            pl.BlockSpec(memory_space=pltpu.MemorySpace.SMEM),         # b2 (2,)
            pl.BlockSpec((C, HW, out_dim), lambda i: (0, 0, 0)),       # resident fc weight
            pl.BlockSpec((1, out_dim), lambda i: (0, 0)),              # resident fc bias
        ],
        out_specs=(pl.BlockSpec((tb, out_dim), lambda i: (i, 0)),
                   pl.BlockSpec((tb, out_dim), lambda i: (i, 0))),
        scratch_shapes=[pltpu.VMEM((C, tb, PADW), jnp.float32)],
        compiler_params=pltpu.CompilerParams(dimension_semantics=("parallel",)),
    )(x_flat, w1f, b1, w2f, b2, wfc_r, bfc2)

    if bp != bn:
        bits, ori = bits[:bn], ori[:bn]
    return bits, ori


def ref_forward(x, w1, b1, w2, b2, w_fc, b_fc):
    """Pure-JAX reference of the PyTorch forward."""
    def conv(xin, w, b):
        y = jax.lax.conv_general_dilated(
            xin, w, window_strides=(1, 1), padding="SAME",
            dimension_numbers=("NCHW", "OIHW", "NCHW"))
        return jax.nn.relu(y + b[None, :, None, None])

    h = conv(x, w1, b1)
    h = conv(h, w2, b2)
    flat = h.reshape(x.shape[0], -1)
    s = jax.nn.sigmoid(flat @ w_fc.T + b_fc)
    n = jnp.round(s * (2.0 ** QB) - 0.5)
    bits = jnp.bitwise_and(n.astype(jnp.int32), 1).astype(jnp.float32)
    return bits, s


if __name__ == "__main__":
    key = jax.random.PRNGKey(0)
    ks = jax.random.split(key, 7)

    batch = 16                 # small batch; block_batch=8 -> grid=(2,), exercises tiling
    feedback_bits = 128        # fc: 1024 -> feedback_bits / B (lane-dense output)

    # Deterministic synthetic parameters (shapes from Encoder.__init__).
    x = jax.random.normal(ks[0], (batch, C, H, W), jnp.float32)
    w1 = 0.10 * jax.random.normal(ks[1], (C, C, 3, 3), jnp.float32)   # conv1 weight (OIHW)
    b1 = 0.10 * jax.random.normal(ks[2], (C,), jnp.float32)
    w2 = 0.10 * jax.random.normal(ks[3], (C, C, 3, 3), jnp.float32)   # conv2 weight (OIHW)
    b2 = 0.10 * jax.random.normal(ks[4], (C,), jnp.float32)
    w_fc = 0.03 * jax.random.normal(ks[5], (feedback_bits, FLAT), jnp.float32)  # (out, in)
    b_fc = 0.10 * jax.random.normal(ks[6], (feedback_bits,), jnp.float32)

    params = prepare_params(w1, b1, w2, b2, w_fc, b_fc)
    bits, out_ori = encoder_forward(x, params, block_batch=8)
    bits = jax.block_until_ready(bits)
    out_ori = jax.block_until_ready(out_ori)

    # Sanity checks against a pure-JAX reference.
    ref_bits, ref_sig = ref_forward(x, w1, b1, w2, b2, w_fc, b_fc)
    bits_np = np.asarray(bits)
    ori_np = np.asarray(out_ori)

    assert bits.shape == (batch, feedback_bits) and bits.dtype == jnp.float32
    assert out_ori.shape == (batch, feedback_bits)
    assert np.allclose(ori_np, np.asarray(ref_sig), atol=2e-3, rtol=2e-3)
    assert np.all(np.isin(bits_np, [0.0, 1.0]))
    # Self-consistency: emitted bits are exactly the quantization of the emitted sigmoid.
    recomputed = np.bitwise_and(
        np.round(ori_np * (2.0 ** QB) - 0.5).astype(np.int32), 1).astype(np.float32)
    assert np.array_equal(bits_np, recomputed)
    # Agreement with the reference bits (allowing only threshold-adjacent flips).
    assert np.mean(bits_np == np.asarray(ref_bits)) > 0.99

    print("KERNEL_OK")
</pallas_src>

<mosaic_0001>
module attributes {stable_mosaic.version = 11 : i64} {
  func.func @_encoder_kernel(%arg0: i32, %arg1: memref<8x1024xf32, #tpu.memory_space<vmem>>, %arg2: memref<36xf32, #tpu.memory_space<smem>>, %arg3: memref<2xf32, #tpu.memory_space<smem>>, %arg4: memref<36xf32, #tpu.memory_space<smem>>, %arg5: memref<2xf32, #tpu.memory_space<smem>>, %arg6: memref<2x512x128xf32, #tpu.memory_space<vmem>>, %arg7: memref<1x128xf32, #tpu.memory_space<vmem>>, %arg8: memref<8x128xf32, #tpu.memory_space<vmem>>, %arg9: memref<8x128xf32, #tpu.memory_space<vmem>>, %arg10: memref<2x8x768xf32, #tpu.memory_space<vmem>>) attributes {dimension_semantics = [#tpu.dimension_semantics<parallel>], iteration_bounds = array<i64: 2>, scalar_prefetch = 0 : i64, scratch_operands = 1 : i64, tpu.core_type = #tpu.core_type<tc>, window_params = [{transform_indices = @transform_0, window_bounds = array<i64: 8, 1024>}, {transform_indices = @transform_1, window_bounds = array<i64: 36>}, {transform_indices = @transform_2, window_bounds = array<i64: 2>}, {transform_indices = @transform_3, window_bounds = array<i64: 36>}, {transform_indices = @transform_4, window_bounds = array<i64: 2>}, {pipeline_mode = #tpu.pipeline_mode<synchronous>, transform_indices = @transform_5, window_bounds = array<i64: 2, 512, 128>}, {pipeline_mode = #tpu.pipeline_mode<synchronous>, transform_indices = @transform_6, window_bounds = array<i64: 1, 128>}, {transform_indices = @transform_7, window_bounds = array<i64: 8, 128>}, {transform_indices = @transform_8, window_bounds = array<i64: 8, 128>}]} {
    %0 = tpu.iota {dimensions = array<i32: 1>} : vector<1x512xi32>
    %c32_i32 = arith.constant 32 : i32
    %c0_i32 = arith.constant 0 : i32
    %1 = arith.cmpi eq, %c32_i32, %c0_i32 : i32
    %c1_i32 = arith.constant 1 : i32
    %2 = arith.select %1, %c1_i32, %c32_i32 : i32
    %3 = vector.broadcast %2 : i32 to vector<1x512xi32>
    %4 = arith.remsi %0, %3 : vector<1x512xi32>
    %c0_i32_0 = arith.constant 0 : i32
    %5 = vector.broadcast %c0_i32_0 : i32 to vector<1x512xi32>
    %6 = arith.cmpi ne, %4, %5 : vector<1x512xi32>
    %c0_i32_1 = arith.constant 0 : i32
    %7 = vector.broadcast %c0_i32_1 : i32 to vector<1x512xi32>
    %8 = arith.cmpi slt, %4, %7 : vector<1x512xi32>
    %c0_i32_2 = arith.constant 0 : i32
    %9 = arith.cmpi slt, %2, %c0_i32_2 : i32
    %10 = vector.broadcast %9 : i1 to vector<1x512xi1>
    %11 = vector.broadcast %10 : vector<1x512xi1> to vector<1x512xi1>
    %12 = arith.xori %8, %11 : vector<1x512xi1>
    %13 = arith.andi %12, %6 : vector<1x512xi1>
    %14 = vector.broadcast %2 : i32 to vector<1x512xi32>
    %15 = arith.addi %4, %14 : vector<1x512xi32>
    %16 = arith.select %13, %15, %4 : vector<1x512xi1>, vector<1x512xi32>
    %c1_i32_3 = arith.constant 1 : i32
    %17 = vector.broadcast %c1_i32_3 : i32 to vector<1x512xi32>
    %18 = arith.cmpi sge, %16, %17 : vector<1x512xi32>
    %c30_i32 = arith.constant 30 : i32
    %19 = vector.broadcast %c30_i32 : i32 to vector<1x512xi32>
    %20 = arith.cmpi sle, %16, %19 : vector<1x512xi32>
    %cst = arith.constant 0.000000e+00 : f32
    %21 = vector.broadcast %cst : f32 to vector<2x8x128xf32>
    %c0 = arith.constant 0 : index
    %c0_4 = arith.constant 0 : index
    %c0_5 = arith.constant 0 : index
    %22 = vector.load %arg10[%c0, %c0_4, %c0_5] : memref<2x8x768xf32, #tpu.memory_space<vmem>>, vector<2x8x128xf32>
    tpu.vector_store %arg10[%c0, %c0_4, %c0_5], %21 {strides = array<i32>} : memref<2x8x768xf32, #tpu.memory_space<vmem>>, vector<2x8x128xf32>,
    %c0_6 = arith.constant 0 : index
    %c0_7 = arith.constant 0 : index
    %c640 = arith.constant 640 : index
    %23 = vector.load %arg10[%c0_6, %c0_7, %c640] : memref<2x8x768xf32, #tpu.memory_space<vmem>>, vector<2x8x128xf32>
    tpu.vector_store %arg10[%c0_6, %c0_7, %c640], %21 {strides = array<i32>} : memref<2x8x768xf32, #tpu.memory_space<vmem>>, vector<2x8x128xf32>,
    %c0_8 = arith.constant 0 : index
    %c0_9 = arith.constant 0 : index
    %24 = vector.load %arg1[%c0_8, %c0_9] : memref<8x1024xf32, #tpu.memory_space<vmem>>, vector<8x512xf32>
    %c0_10 = arith.constant 0 : index
    %c512 = arith.constant 512 : index
    %25 = vector.load %arg1[%c0_10, %c512] : memref<8x1024xf32, #tpu.memory_space<vmem>>, vector<8x512xf32>
    %c0_11 = arith.constant 0 : index
    %c0_12 = arith.constant 0 : index
    %c128 = arith.constant 128 : index
    %26 = vector.load %arg10[%c0_11, %c0_12, %c128] : memref<2x8x768xf32, #tpu.memory_space<vmem>>, vector<1x8x512xf32>
    %27 = vector.shape_cast %26 : vector<1x8x512xf32> to vector<8x512xf32>
    %28 = vector.shape_cast %24 : vector<8x512xf32> to vector<1x8x512xf32>
    tpu.vector_store %arg10[%c0_11, %c0_12, %c128], %28 {strides = array<i32>} : memref<2x8x768xf32, #tpu.memory_space<vmem>>, vector<1x8x512xf32>,
    %c1 = arith.constant 1 : index
    %c0_13 = arith.constant 0 : index
    %c128_14 = arith.constant 128 : index
    %29 = vector.load %arg10[%c1, %c0_13, %c128_14] : memref<2x8x768xf32, #tpu.memory_space<vmem>>, vector<1x8x512xf32>
    %30 = vector.shape_cast %29 : vector<1x8x512xf32> to vector<8x512xf32>
    %31 = vector.shape_cast %25 : vector<8x512xf32> to vector<1x8x512xf32>
    tpu.vector_store %arg10[%c1, %c0_13, %c128_14], %31 {strides = array<i32>} : memref<2x8x768xf32, #tpu.memory_space<vmem>>, vector<1x8x512xf32>,
    %cst_15 = arith.constant 0.000000e+00 : f32
    %32 = vector.broadcast %cst_15 : f32 to vector<8x512xf32>
    %c0_16 = arith.constant 0 : index
    %33 = memref.load %arg3[%c0_16] : memref<2xf32, #tpu.memory_space<smem>>
    %34 = vector.broadcast %33 : f32 to vector<8x512xf32>
    %35 = arith.addf %32, %34 : vector<8x512xf32>
    %cst_17 = arith.constant 0.000000e+00 : f32
    %36 = vector.broadcast %cst_17 : f32 to vector<8x512xf32>
    %c1_18 = arith.constant 1 : index
    %37 = memref.load %arg3[%c1_18] : memref<2xf32, #tpu.memory_space<smem>>
    %38 = vector.broadcast %37 : f32 to vector<8x512xf32>
    %39 = arith.addf %36, %38 : vector<8x512xf32>
    %c0_19 = arith.constant 0 : index
    %c0_20 = arith.constant 0 : index
    %c0_21 = arith.constant 0 : index
    %40 = vector.load %arg10[%c0_19, %c0_20, %c0_21] : memref<2x8x768xf32, #tpu.memory_space<vmem>>, vector<1x8x768xf32>
    %41 = vector.shape_cast %40 : vector<1x8x768xf32> to vector<8x768xf32>
    %42 = vector.extract_strided_slice %41 {offsets = [0, 95], sizes = [8, 512], strides = [1, 1]} : vector<8x768xf32> to vector<8x512xf32>
    %cst_22 = arith.constant 0.000000e+00 : f32
    %43 = vector.shape_cast %18 : vector<1x512xi1> to vector<1x512xi1>
    %44 = vector.broadcast %43 : vector<1x512xi1> to vector<8x512xi1>
    %45 = vector.broadcast %cst_22 : f32 to vector<8x512xf32>
    %46 = arith.select %44, %42, %45 : vector<8x512xi1>, vector<8x512xf32>
    %c0_23 = arith.constant 0 : index
    %47 = memref.load %arg2[%c0_23] : memref<36xf32, #tpu.memory_space<smem>>
    %48 = vector.broadcast %47 : f32 to vector<8x512xf32>
    %49 = arith.mulf %48, %46 : vector<8x512xf32>
    %50 = arith.addf %35, %49 : vector<8x512xf32>
    %c18 = arith.constant 18 : index
    %51 = memref.load %arg2[%c18] : memref<36xf32, #tpu.memory_space<smem>>
    %52 = vector.broadcast %51 : f32 to vector<8x512xf32>
    %53 = arith.mulf %52, %46 : vector<8x512xf32>
    %54 = arith.addf %39, %53 : vector<8x512xf32>
    %55 = vector.extract_strided_slice %41 {offsets = [0, 96], sizes = [8, 512], strides = [1, 1]} : vector<8x768xf32> to vector<8x512xf32>
    %c1_24 = arith.constant 1 : index
    %56 = memref.load %arg2[%c1_24] : memref<36xf32, #tpu.memory_space<smem>>
    %57 = vector.broadcast %56 : f32 to vector<8x512xf32>
    %58 = arith.mulf %57, %55 : vector<8x512xf32>
    %59 = arith.addf %50, %58 : vector<8x512xf32>
    %c19 = arith.constant 19 : index
    %60 = memref.load %arg2[%c19] : memref<36xf32, #tpu.memory_space<smem>>
    %61 = vector.broadcast %60 : f32 to vector<8x512xf32>
    %62 = arith.mulf %61, %55 : vector<8x512xf32>
    %63 = arith.addf %54, %62 : vector<8x512xf32>
    %64 = vector.extract_strided_slice %41 {offsets = [0, 97], sizes = [8, 512], strides = [1, 1]} : vector<8x768xf32> to vector<8x512xf32>
    %cst_25 = arith.constant 0.000000e+00 : f32
    %65 = vector.shape_cast %20 : vector<1x512xi1> to vector<1x512xi1>
    %66 = vector.broadcast %65 : vector<1x512xi1> to vector<8x512xi1>
    %67 = vector.broadcast %cst_25 : f32 to vector<8x512xf32>
    %68 = arith.select %66, %64, %67 : vector<8x512xi1>, vector<8x512xf32>
    %c2 = arith.constant 2 : index
    %69 = memref.load %arg2[%c2] : memref<36xf32, #tpu.memory_space<smem>>
    %70 = vector.broadcast %69 : f32 to vector<8x512xf32>
    %71 = arith.mulf %70, %68 : vector<8x512xf32>
    %72 = arith.addf %59, %71 : vector<8x512xf32>
    %c20 = arith.constant 20 : index
    %73 = memref.load %arg2[%c20] : memref<36xf32, #tpu.memory_space<smem>>
    %74 = vector.broadcast %73 : f32 to vector<8x512xf32>
    %75 = arith.mulf %74, %68 : vector<8x512xf32>
    %76 = arith.addf %63, %75 : vector<8x512xf32>
    %77 = vector.extract_strided_slice %41 {offsets = [0, 127], sizes = [8, 512], strides = [1, 1]} : vector<8x768xf32> to vector<8x512xf32>
    %cst_26 = arith.constant 0.000000e+00 : f32
    %78 = vector.shape_cast %18 : vector<1x512xi1> to vector<1x512xi1>
    %79 = vector.broadcast %78 : vector<1x512xi1> to vector<8x512xi1>
    %80 = vector.broadcast %cst_26 : f32 to vector<8x512xf32>
    %81 = arith.select %79, %77, %80 : vector<8x512xi1>, vector<8x512xf32>
    %c3 = arith.constant 3 : index
    %82 = memref.load %arg2[%c3] : memref<36xf32, #tpu.memory_space<smem>>
    %83 = vector.broadcast %82 : f32 to vector<8x512xf32>
    %84 = arith.mulf %83, %81 : vector<8x512xf32>
    %85 = arith.addf %72, %84 : vector<8x512xf32>
    %c21 = arith.constant 21 : index
    %86 = memref.load %arg2[%c21] : memref<36xf32, #tpu.memory_space<smem>>
    %87 = vector.broadcast %86 : f32 to vector<8x512xf32>
    %88 = arith.mulf %87, %81 : vector<8x512xf32>
    %89 = arith.addf %76, %88 : vector<8x512xf32>
    %90 = vector.extract_strided_slice %41 {offsets = [0, 128], sizes = [8, 512], strides = [1, 1]} : vector<8x768xf32> to vector<8x512xf32>
    %c4 = arith.constant 4 : index
    %91 = memref.load %arg2[%c4] : memref<36xf32, #tpu.memory_space<smem>>
    %92 = vector.broadcast %91 : f32 to vector<8x512xf32>
    %93 = arith.mulf %92, %90 : vector<8x512xf32>
    %94 = arith.addf %85, %93 : vector<8x512xf32>
    %c22 = arith.constant 22 : index
    %95 = memref.load %arg2[%c22] : memref<36xf32, #tpu.memory_space<smem>>
    %96 = vector.broadcast %95 : f32 to vector<8x512xf32>
    %97 = arith.mulf %96, %90 : vector<8x512xf32>
    %98 = arith.addf %89, %97 : vector<8x512xf32>
    %99 = vector.extract_strided_slice %41 {offsets = [0, 129], sizes = [8, 512], strides = [1, 1]} : vector<8x768xf32> to vector<8x512xf32>
    %cst_27 = arith.constant 0.000000e+00 : f32
    %100 = vector.shape_cast %20 : vector<1x512xi1> to vector<1x512xi1>
    %101 = vector.broadcast %100 : vector<1x512xi1> to vector<8x512xi1>
    %102 = vector.broadcast %cst_27 : f32 to vector<8x512xf32>
    %103 = arith.select %101, %99, %102 : vector<8x512xi1>, vector<8x512xf32>
    %c5 = arith.constant 5 : index
    %104 = memref.load %arg2[%c5] : memref<36xf32, #tpu.memory_space<smem>>
    %105 = vector.broadcast %104 : f32 to vector<8x512xf32>
    %106 = arith.mulf %105, %103 : vector<8x512xf32>
    %107 = arith.addf %94, %106 : vector<8x512xf32>
    %c23 = arith.constant 23 : index
    %108 = memref.load %arg2[%c23] : memref<36xf32, #tpu.memory_space<smem>>
    %109 = vector.broadcast %108 : f32 to vector<8x512xf32>
    %110 = arith.mulf %109, %103 : vector<8x512xf32>
    %111 = arith.addf %98, %110 : vector<8x512xf32>
    %112 = vector.extract_strided_slice %41 {offsets = [0, 159], sizes = [8, 512], strides = [1, 1]} : vector<8x768xf32> to vector<8x512xf32>
    %cst_28 = arith.constant 0.000000e+00 : f32
    %113 = vector.shape_cast %18 : vector<1x512xi1> to vector<1x512xi1>
    %114 = vector.broadcast %113 : vector<1x512xi1> to vector<8x512xi1>
    %115 = vector.broadcast %cst_28 : f32 to vector<8x512xf32>
    %116 = arith.select %114, %112, %115 : vector<8x512xi1>, vector<8x512xf32>
    %c6 = arith.constant 6 : index
    %117 = memref.load %arg2[%c6] : memref<36xf32, #tpu.memory_space<smem>>
    %118 = vector.broadcast %117 : f32 to vector<8x512xf32>
    %119 = arith.mulf %118, %116 : vector<8x512xf32>
    %120 = arith.addf %107, %119 : vector<8x512xf32>
    %c24 = arith.constant 24 : index
    %121 = memref.load %arg2[%c24] : memref<36xf32, #tpu.memory_space<smem>>
    %122 = vector.broadcast %121 : f32 to vector<8x512xf32>
    %123 = arith.mulf %122, %116 : vector<8x512xf32>
    %124 = arith.addf %111, %123 : vector<8x512xf32>
    %125 = vector.extract_strided_slice %41 {offsets = [0, 160], sizes = [8, 512], strides = [1, 1]} : vector<8x768xf32> to vector<8x512xf32>
    %c7 = arith.constant 7 : index
    %126 = memref.load %arg2[%c7] : memref<36xf32, #tpu.memory_space<smem>>
    %127 = vector.broadcast %126 : f32 to vector<8x512xf32>
    %128 = arith.mulf %127, %125 : vector<8x512xf32>
    %129 = arith.addf %120, %128 : vector<8x512xf32>
    %c25 = arith.constant 25 : index
    %130 = memref.load %arg2[%c25] : memref<36xf32, #tpu.memory_space<smem>>
    %131 = vector.broadcast %130 : f32 to vector<8x512xf32>
    %132 = arith.mulf %131, %125 : vector<8x512xf32>
    %133 = arith.addf %124, %132 : vector<8x512xf32>
    %134 = vector.extract_strided_slice %41 {offsets = [0, 161], sizes = [8, 512], strides = [1, 1]} : vector<8x768xf32> to vector<8x512xf32>
    %cst_29 = arith.constant 0.000000e+00 : f32
    %135 = vector.shape_cast %20 : vector<1x512xi1> to vector<1x512xi1>
    %136 = vector.broadcast %135 : vector<1x512xi1> to vector<8x512xi1>
    %137 = vector.broadcast %cst_29 : f32 to vector<8x512xf32>
    %138 = arith.select %136, %134, %137 : vector<8x512xi1>, vector<8x512xf32>
    %c8 = arith.constant 8 : index
    %139 = memref.load %arg2[%c8] : memref<36xf32, #tpu.memory_space<smem>>
    %140 = vector.broadcast %139 : f32 to vector<8x512xf32>
    %141 = arith.mulf %140, %138 : vector<8x512xf32>
    %142 = arith.addf %129, %141 : vector<8x512xf32>
    %c26 = arith.constant 26 : index
    %143 = memref.load %arg2[%c26] : memref<36xf32, #tpu.memory_space<smem>>
    %144 = vector.broadcast %143 : f32 to vector<8x512xf32>
    %145 = arith.mulf %144, %138 : vector<8x512xf32>
    %146 = arith.addf %133, %145 : vector<8x512xf32>
    %c1_30 = arith.constant 1 : index
    %c0_31 = arith.constant 0 : index
    %c0_32 = arith.constant 0 : index
    %147 = vector.load %arg10[%c1_30, %c0_31, %c0_32] : memref<2x8x768xf32, #tpu.memory_space<vmem>>, vector<1x8x768xf32>
    %148 = vector.shape_cast %147 : vector<1x8x768xf32> to vector<8x768xf32>
    %149 = vector.extract_strided_slice %148 {offsets = [0, 95], sizes = [8, 512], strides = [1, 1]} : vector<8x768xf32> to vector<8x512xf32>
    %cst_33 = arith.constant 0.000000e+00 : f32
    %150 = vector.shape_cast %18 : vector<1x512xi1> to vector<1x512xi1>
    %151 = vector.broadcast %150 : vector<1x512xi1> to vector<8x512xi1>
    %152 = vector.broadcast %cst_33 : f32 to vector<8x512xf32>
    %153 = arith.select %151, %149, %152 : vector<8x512xi1>, vector<8x512xf32>
    %c9 = arith.constant 9 : index
    %154 = memref.load %arg2[%c9] : memref<36xf32, #tpu.memory_space<smem>>
    %155 = vector.broadcast %154 : f32 to vector<8x512xf32>
    %156 = arith.mulf %155, %153 : vector<8x512xf32>
    %157 = arith.addf %142, %156 : vector<8x512xf32>
    %c27 = arith.constant 27 : index
    %158 = memref.load %arg2[%c27] : memref<36xf32, #tpu.memory_space<smem>>
    %159 = vector.broadcast %158 : f32 to vector<8x512xf32>
    %160 = arith.mulf %159, %153 : vector<8x512xf32>
    %161 = arith.addf %146, %160 : vector<8x512xf32>
    %162 = vector.extract_strided_slice %148 {offsets = [0, 96], sizes = [8, 512], strides = [1, 1]} : vector<8x768xf32> to vector<8x512xf32>
    %c10 = arith.constant 10 : index
    %163 = memref.load %arg2[%c10] : memref<36xf32, #tpu.memory_space<smem>>
    %164 = vector.broadcast %163 : f32 to vector<8x512xf32>
    %165 = arith.mulf %164, %162 : vector<8x512xf32>
    %166 = arith.addf %157, %165 : vector<8x512xf32>
    %c28 = arith.constant 28 : index
    %167 = memref.load %arg2[%c28] : memref<36xf32, #tpu.memory_space<smem>>
    %168 = vector.broadcast %167 : f32 to vector<8x512xf32>
    %169 = arith.mulf %168, %162 : vector<8x512xf32>
    %170 = arith.addf %161, %169 : vector<8x512xf32>
    %171 = vector.extract_strided_slice %148 {offsets = [0, 97], sizes = [8, 512], strides = [1, 1]} : vector<8x768xf32> to vector<8x512xf32>
    %cst_34 = arith.constant 0.000000e+00 : f32
    %172 = vector.shape_cast %20 : vector<1x512xi1> to vector<1x512xi1>
    %173 = vector.broadcast %172 : vector<1x512xi1> to vector<8x512xi1>
    %174 = vector.broadcast %cst_34 : f32 to vector<8x512xf32>
    %175 = arith.select %173, %171, %174 : vector<8x512xi1>, vector<8x512xf32>
    %c11 = arith.constant 11 : index
    %176 = memref.load %arg2[%c11] : memref<36xf32, #tpu.memory_space<smem>>
    %177 = vector.broadcast %176 : f32 to vector<8x512xf32>
    %178 = arith.mulf %177, %175 : vector<8x512xf32>
    %179 = arith.addf %166, %178 : vector<8x512xf32>
    %c29 = arith.constant 29 : index
    %180 = memref.load %arg2[%c29] : memref<36xf32, #tpu.memory_space<smem>>
    %181 = vector.broadcast %180 : f32 to vector<8x512xf32>
    %182 = arith.mulf %181, %175 : vector<8x512xf32>
    %183 = arith.addf %170, %182 : vector<8x512xf32>
    %184 = vector.extract_strided_slice %148 {offsets = [0, 127], sizes = [8, 512], strides = [1, 1]} : vector<8x768xf32> to vector<8x512xf32>
    %cst_35 = arith.constant 0.000000e+00 : f32
    %185 = vector.shape_cast %18 : vector<1x512xi1> to vector<1x512xi1>
    %186 = vector.broadcast %185 : vector<1x512xi1> to vector<8x512xi1>
    %187 = vector.broadcast %cst_35 : f32 to vector<8x512xf32>
    %188 = arith.select %186, %184, %187 : vector<8x512xi1>, vector<8x512xf32>
    %c12 = arith.constant 12 : index
    %189 = memref.load %arg2[%c12] : memref<36xf32, #tpu.memory_space<smem>>
    %190 = vector.broadcast %189 : f32 to vector<8x512xf32>
    %191 = arith.mulf %190, %188 : vector<8x512xf32>
    %192 = arith.addf %179, %191 : vector<8x512xf32>
    %c30 = arith.constant 30 : index
    %193 = memref.load %arg2[%c30] : memref<36xf32, #tpu.memory_space<smem>>
    %194 = vector.broadcast %193 : f32 to vector<8x512xf32>
    %195 = arith.mulf %194, %188 : vector<8x512xf32>
    %196 = arith.addf %183, %195 : vector<8x512xf32>
    %197 = vector.extract_strided_slice %148 {offsets = [0, 128], sizes = [8, 512], strides = [1, 1]} : vector<8x768xf32> to vector<8x512xf32>
    %c13 = arith.constant 13 : index
    %198 = memref.load %arg2[%c13] : memref<36xf32, #tpu.memory_space<smem>>
    %199 = vector.broadcast %198 : f32 to vector<8x512xf32>
    %200 = arith.mulf %199, %197 : vector<8x512xf32>
    %201 = arith.addf %192, %200 : vector<8x512xf32>
    %c31 = arith.constant 31 : index
    %202 = memref.load %arg2[%c31] : memref<36xf32, #tpu.memory_space<smem>>
    %203 = vector.broadcast %202 : f32 to vector<8x512xf32>
    %204 = arith.mulf %203, %197 : vector<8x512xf32>
    %205 = arith.addf %196, %204 : vector<8x512xf32>
    %206 = vector.extract_strided_slice %148 {offsets = [0, 129], sizes = [8, 512], strides = [1, 1]} : vector<8x768xf32> to vector<8x512xf32>
    %cst_36 = arith.constant 0.000000e+00 : f32
    %207 = vector.shape_cast %20 : vector<1x512xi1> to vector<1x512xi1>
    %208 = vector.broadcast %207 : vector<1x512xi1> to vector<8x512xi1>
    %209 = vector.broadcast %cst_36 : f32 to vector<8x512xf32>
    %210 = arith.select %208, %206, %209 : vector<8x512xi1>, vector<8x512xf32>
    %c14 = arith.constant 14 : index
    %211 = memref.load %arg2[%c14] : memref<36xf32, #tpu.memory_space<smem>>
    %212 = vector.broadcast %211 : f32 to vector<8x512xf32>
    %213 = arith.mulf %212, %210 : vector<8x512xf32>
    %214 = arith.addf %201, %213 : vector<8x512xf32>
    %c32 = arith.constant 32 : index
    %215 = memref.load %arg2[%c32] : memref<36xf32, #tpu.memory_space<smem>>
    %216 = vector.broadcast %215 : f32 to vector<8x512xf32>
    %217 = arith.mulf %216, %210 : vector<8x512xf32>
    %218 = arith.addf %205, %217 : vector<8x512xf32>
    %219 = vector.extract_strided_slice %148 {offsets = [0, 159], sizes = [8, 512], strides = [1, 1]} : vector<8x768xf32> to vector<8x512xf32>
    %cst_37 = arith.constant 0.000000e+00 : f32
    %220 = vector.shape_cast %18 : vector<1x512xi1> to vector<1x512xi1>
    %221 = vector.broadcast %220 : vector<1x512xi1> to vector<8x512xi1>
    %222 = vector.broadcast %cst_37 : f32 to vector<8x512xf32>
    %223 = arith.select %221, %219, %222 : vector<8x512xi1>, vector<8x512xf32>
    %c15 = arith.constant 15 : index
    %224 = memref.load %arg2[%c15] : memref<36xf32, #tpu.memory_space<smem>>
    %225 = vector.broadcast %224 : f32 to vector<8x512xf32>
    %226 = arith.mulf %225, %223 : vector<8x512xf32>
    %227 = arith.addf %214, %226 : vector<8x512xf32>
    %c33 = arith.constant 33 : index
    %228 = memref.load %arg2[%c33] : memref<36xf32, #tpu.memory_space<smem>>
    %229 = vector.broadcast %228 : f32 to vector<8x512xf32>
    %230 = arith.mulf %229, %223 : vector<8x512xf32>
    %231 = arith.addf %218, %230 : vector<8x512xf32>
    %232 = vector.extract_strided_slice %148 {offsets = [0, 160], sizes = [8, 512], strides = [1, 1]} : vector<8x768xf32> to vector<8x512xf32>
    %c16 = arith.constant 16 : index
    %233 = memref.load %arg2[%c16] : memref<36xf32, #tpu.memory_space<smem>>
    %234 = vector.broadcast %233 : f32 to vector<8x512xf32>
    %235 = arith.mulf %234, %232 : vector<8x512xf32>
    %236 = arith.addf %227, %235 : vector<8x512xf32>
    %c34 = arith.constant 34 : index
    %237 = memref.load %arg2[%c34] : memref<36xf32, #tpu.memory_space<smem>>
    %238 = vector.broadcast %237 : f32 to vector<8x512xf32>
    %239 = arith.mulf %238, %232 : vector<8x512xf32>
    %240 = arith.addf %231, %239 : vector<8x512xf32>
    %241 = vector.extract_strided_slice %148 {offsets = [0, 161], sizes = [8, 512], strides = [1, 1]} : vector<8x768xf32> to vector<8x512xf32>
    %cst_38 = arith.constant 0.000000e+00 : f32
    %242 = vector.shape_cast %20 : vector<1x512xi1> to vector<1x512xi1>
    %243 = vector.broadcast %242 : vector<1x512xi1> to vector<8x512xi1>
    %244 = vector.broadcast %cst_38 : f32 to vector<8x512xf32>
    %245 = arith.select %243, %241, %244 : vector<8x512xi1>, vector<8x512xf32>
    %c17 = arith.constant 17 : index
    %246 = memref.load %arg2[%c17] : memref<36xf32, #tpu.memory_space<smem>>
    %247 = vector.broadcast %246 : f32 to vector<8x512xf32>
    %248 = arith.mulf %247, %245 : vector<8x512xf32>
    %249 = arith.addf %236, %248 : vector<8x512xf32>
    %c35 = arith.constant 35 : index
    %250 = memref.load %arg2[%c35] : memref<36xf32, #tpu.memory_space<smem>>
    %251 = vector.broadcast %250 : f32 to vector<8x512xf32>
    %252 = arith.mulf %251, %245 : vector<8x512xf32>
    %253 = arith.addf %240, %252 : vector<8x512xf32>
    %cst_39 = arith.constant 0.000000e+00 : f32
    %254 = vector.broadcast %cst_39 : f32 to vector<8x512xf32>
    %255 = arith.maximumf %249, %254 : vector<8x512xf32>
    %cst_40 = arith.constant 0.000000e+00 : f32
    %256 = vector.broadcast %cst_40 : f32 to vector<8x512xf32>
    %257 = arith.maximumf %253, %256 : vector<8x512xf32>
    %c0_41 = arith.constant 0 : index
    %c0_42 = arith.constant 0 : index
    %c128_43 = arith.constant 128 : index
    %258 = vector.load %arg10[%c0_41, %c0_42, %c128_43] : memref<2x8x768xf32, #tpu.memory_space<vmem>>, vector<1x8x512xf32>
    %259 = vector.shape_cast %258 : vector<1x8x512xf32> to vector<8x512xf32>
    %260 = vector.shape_cast %255 : vector<8x512xf32> to vector<1x8x512xf32>
    tpu.vector_store %arg10[%c0_41, %c0_42, %c128_43], %260 {strides = array<i32>} : memref<2x8x768xf32, #tpu.memory_space<vmem>>, vector<1x8x512xf32>,
    %c1_44 = arith.constant 1 : index
    %c0_45 = arith.constant 0 : index
    %c128_46 = arith.constant 128 : index
    %261 = vector.load %arg10[%c1_44, %c0_45, %c128_46] : memref<2x8x768xf32, #tpu.memory_space<vmem>>, vector<1x8x512xf32>
    %262 = vector.shape_cast %261 : vector<1x8x512xf32> to vector<8x512xf32>
    %263 = vector.shape_cast %257 : vector<8x512xf32> to vector<1x8x512xf32>
    tpu.vector_store %arg10[%c1_44, %c0_45, %c128_46], %263 {strides = array<i32>} : memref<2x8x768xf32, #tpu.memory_space<vmem>>, vector<1x8x512xf32>,
    %cst_47 = arith.constant 0.000000e+00 : f32
    %264 = vector.broadcast %cst_47 : f32 to vector<8x512xf32>
    %c0_48 = arith.constant 0 : index
    %265 = memref.load %arg5[%c0_48] : memref<2xf32, #tpu.memory_space<smem>>
    %266 = vector.broadcast %265 : f32 to vector<8x512xf32>
    %267 = arith.addf %264, %266 : vector<8x512xf32>
    %cst_49 = arith.constant 0.000000e+00 : f32
    %268 = vector.broadcast %cst_49 : f32 to vector<8x512xf32>
    %c1_50 = arith.constant 1 : index
    %269 = memref.load %arg5[%c1_50] : memref<2xf32, #tpu.memory_space<smem>>
    %270 = vector.broadcast %269 : f32 to vector<8x512xf32>
    %271 = arith.addf %268, %270 : vector<8x512xf32>
    %c0_51 = arith.constant 0 : index
    %c0_52 = arith.constant 0 : index
    %c0_53 = arith.constant 0 : index
    %272 = vector.load %arg10[%c0_51, %c0_52, %c0_53] : memref<2x8x768xf32, #tpu.memory_space<vmem>>, vector<1x8x768xf32>
    %273 = vector.shape_cast %272 : vector<1x8x768xf32> to vector<8x768xf32>
    %274 = vector.extract_strided_slice %273 {offsets = [0, 95], sizes = [8, 512], strides = [1, 1]} : vector<8x768xf32> to vector<8x512xf32>
    %cst_54 = arith.constant 0.000000e+00 : f32
    %275 = vector.shape_cast %18 : vector<1x512xi1> to vector<1x512xi1>
    %276 = vector.broadcast %275 : vector<1x512xi1> to vector<8x512xi1>
    %277 = vector.broadcast %cst_54 : f32 to vector<8x512xf32>
    %278 = arith.select %276, %274, %277 : vector<8x512xi1>, vector<8x512xf32>
    %c0_55 = arith.constant 0 : index
    %279 = memref.load %arg4[%c0_55] : memref<36xf32, #tpu.memory_space<smem>>
    %280 = vector.broadcast %279 : f32 to vector<8x512xf32>
    %281 = arith.mulf %280, %278 : vector<8x512xf32>
    %282 = arith.addf %267, %281 : vector<8x512xf32>
    %c18_56 = arith.constant 18 : index
    %283 = memref.load %arg4[%c18_56] : memref<36xf32, #tpu.memory_space<smem>>
    %284 = vector.broadcast %283 : f32 to vector<8x512xf32>
    %285 = arith.mulf %284, %278 : vector<8x512xf32>
    %286 = arith.addf %271, %285 : vector<8x512xf32>
    %287 = vector.extract_strided_slice %273 {offsets = [0, 96], sizes = [8, 512], strides = [1, 1]} : vector<8x768xf32> to vector<8x512xf32>
    %c1_57 = arith.constant 1 : index
    %288 = memref.load %arg4[%c1_57] : memref<36xf32, #tpu.memory_space<smem>>
    %289 = vector.broadcast %288 : f32 to vector<8x512xf32>
    %290 = arith.mulf %289, %287 : vector<8x512xf32>
    %291 = arith.addf %282, %290 : vector<8x512xf32>
    %c19_58 = arith.constant 19 : index
    %292 = memref.load %arg4[%c19_58] : memref<36xf32, #tpu.memory_space<smem>>
    %293 = vector.broadcast %292 : f32 to vector<8x512xf32>
    %294 = arith.mulf %293, %287 : vector<8x512xf32>
    %295 = arith.addf %286, %294 : vector<8x512xf32>
    %296 = vector.extract_strided_slice %273 {offsets = [0, 97], sizes = [8, 512], strides = [1, 1]} : vector<8x768xf32> to vector<8x512xf32>
    %cst_59 = arith.constant 0.000000e+00 : f32
    %297 = vector.shape_cast %20 : vector<1x512xi1> to vector<1x512xi1>
    %298 = vector.broadcast %297 : vector<1x512xi1> to vector<8x512xi1>
    %299 = vector.broadcast %cst_59 : f32 to vector<8x512xf32>
    %300 = arith.select %298, %296, %299 : vector<8x512xi1>, vector<8x512xf32>
    %c2_60 = arith.constant 2 : index
    %301 = memref.load %arg4[%c2_60] : memref<36xf32, #tpu.memory_space<smem>>
    %302 = vector.broadcast %301 : f32 to vector<8x512xf32>
    %303 = arith.mulf %302, %300 : vector<8x512xf32>
    %304 = arith.addf %291, %303 : vector<8x512xf32>
    %c20_61 = arith.constant 20 : index
    %305 = memref.load %arg4[%c20_61] : memref<36xf32, #tpu.memory_space<smem>>
    %306 = vector.broadcast %305 : f32 to vector<8x512xf32>
    %307 = arith.mulf %306, %300 : vector<8x512xf32>
    %308 = arith.addf %295, %307 : vector<8x512xf32>
    %309 = vector.extract_strided_slice %273 {offsets = [0, 127], sizes = [8, 512], strides = [1, 1]} : vector<8x768xf32> to vector<8x512xf32>
    %cst_62 = arith.constant 0.000000e+00 : f32
    %310 = vector.shape_cast %18 : vector<1x512xi1> to vector<1x512xi1>
    %311 = vector.broadcast %310 : vector<1x512xi1> to vector<8x512xi1>
    %312 = vector.broadcast %cst_62 : f32 to vector<8x512xf32>
    %313 = arith.select %311, %309, %312 : vector<8x512xi1>, vector<8x512xf32>
    %c3_63 = arith.constant 3 : index
    %314 = memref.load %arg4[%c3_63] : memref<36xf32, #tpu.memory_space<smem>>
    %315 = vector.broadcast %314 : f32 to vector<8x512xf32>
    %316 = arith.mulf %315, %313 : vector<8x512xf32>
    %317 = arith.addf %304, %316 : vector<8x512xf32>
    %c21_64 = arith.constant 21 : index
    %318 = memref.load %arg4[%c21_64] : memref<36xf32, #tpu.memory_space<smem>>
    %319 = vector.broadcast %318 : f32 to vector<8x512xf32>
    %320 = arith.mulf %319, %313 : vector<8x512xf32>
    %321 = arith.addf %308, %320 : vector<8x512xf32>
    %322 = vector.extract_strided_slice %273 {offsets = [0, 128], sizes = [8, 512], strides = [1, 1]} : vector<8x768xf32> to vector<8x512xf32>
    %c4_65 = arith.constant 4 : index
    %323 = memref.load %arg4[%c4_65] : memref<36xf32, #tpu.memory_space<smem>>
    %324 = vector.broadcast %323 : f32 to vector<8x512xf32>
    %325 = arith.mulf %324, %322 : vector<8x512xf32>
    %326 = arith.addf %317, %325 : vector<8x512xf32>
    %c22_66 = arith.constant 22 : index
    %327 = memref.load %arg4[%c22_66] : memref<36xf32, #tpu.memory_space<smem>>
    %328 = vector.broadcast %327 : f32 to vector<8x512xf32>
    %329 = arith.mulf %328, %322 : vector<8x512xf32>
    %330 = arith.addf %321, %329 : vector<8x512xf32>
    %331 = vector.extract_strided_slice %273 {offsets = [0, 129], sizes = [8, 512], strides = [1, 1]} : vector<8x768xf32> to vector<8x512xf32>
    %cst_67 = arith.constant 0.000000e+00 : f32
    %332 = vector.shape_cast %20 : vector<1x512xi1> to vector<1x512xi1>
    %333 = vector.broadcast %332 : vector<1x512xi1> to vector<8x512xi1>
    %334 = vector.broadcast %cst_67 : f32 to vector<8x512xf32>
    %335 = arith.select %333, %331, %334 : vector<8x512xi1>, vector<8x512xf32>
    %c5_68 = arith.constant 5 : index
    %336 = memref.load %arg4[%c5_68] : memref<36xf32, #tpu.memory_space<smem>>
    %337 = vector.broadcast %336 : f32 to vector<8x512xf32>
    %338 = arith.mulf %337, %335 : vector<8x512xf32>
    %339 = arith.addf %326, %338 : vector<8x512xf32>
    %c23_69 = arith.constant 23 : index
    %340 = memref.load %arg4[%c23_69] : memref<36xf32, #tpu.memory_space<smem>>
    %341 = vector.broadcast %340 : f32 to vector<8x512xf32>
    %342 = arith.mulf %341, %335 : vector<8x512xf32>
    %343 = arith.addf %330, %342 : vector<8x512xf32>
    %344 = vector.extract_strided_slice %273 {offsets = [0, 159], sizes = [8, 512], strides = [1, 1]} : vector<8x768xf32> to vector<8x512xf32>
    %cst_70 = arith.constant 0.000000e+00 : f32
    %345 = vector.shape_cast %18 : vector<1x512xi1> to vector<1x512xi1>
    %346 = vector.broadcast %345 : vector<1x512xi1> to vector<8x512xi1>
    %347 = vector.broadcast %cst_70 : f32 to vector<8x512xf32>
    %348 = arith.select %346, %344, %347 : vector<8x512xi1>, vector<8x512xf32>
    %c6_71 = arith.constant 6 : index
    %349 = memref.load %arg4[%c6_71] : memref<36xf32, #tpu.memory_space<smem>>
    %350 = vector.broadcast %349 : f32 to vector<8x512xf32>
    %351 = arith.mulf %350, %348 : vector<8x512xf32>
    %352 = arith.addf %339, %351 : vector<8x512xf32>
    %c24_72 = arith.constant 24 : index
    %353 = memref.load %arg4[%c24_72] : memref<36xf32, #tpu.memory_space<smem>>
    %354 = vector.broadcast %353 : f32 to vector<8x512xf32>
    %355 = arith.mulf %354, %348 : vector<8x512xf32>
    %356 = arith.addf %343, %355 : vector<8x512xf32>
    %357 = vector.extract_strided_slice %273 {offsets = [0, 160], sizes = [8, 512], strides = [1, 1]} : vector<8x768xf32> to vector<8x512xf32>
    %c7_73 = arith.constant 7 : index
    %358 = memref.load %arg4[%c7_73] : memref<36xf32, #tpu.memory_space<smem>>
    %359 = vector.broadcast %358 : f32 to vector<8x512xf32>
    %360 = arith.mulf %359, %357 : vector<8x512xf32>
    %361 = arith.addf %352, %360 : vector<8x512xf32>
    %c25_74 = arith.constant 25 : index
    %362 = memref.load %arg4[%c25_74] : memref<36xf32, #tpu.memory_space<smem>>
    %363 = vector.broadcast %362 : f32 to vector<8x512xf32>
    %364 = arith.mulf %363, %357 : vector<8x512xf32>
    %365 = arith.addf %356, %364 : vector<8x512xf32>
    %366 = vector.extract_strided_slice %273 {offsets = [0, 161], sizes = [8, 512], strides = [1, 1]} : vector<8x768xf32> to vector<8x512xf32>
    %cst_75 = arith.constant 0.000000e+00 : f32
    %367 = vector.shape_cast %20 : vector<1x512xi1> to vector<1x512xi1>
    %368 = vector.broadcast %367 : vector<1x512xi1> to vector<8x512xi1>
    %369 = vector.broadcast %cst_75 : f32 to vector<8x512xf32>
    %370 = arith.select %368, %366, %369 : vector<8x512xi1>, vector<8x512xf32>
    %c8_76 = arith.constant 8 : index
    %371 = memref.load %arg4[%c8_76] : memref<36xf32, #tpu.memory_space<smem>>
    %372 = vector.broadcast %371 : f32 to vector<8x512xf32>
    %373 = arith.mulf %372, %370 : vector<8x512xf32>
    %374 = arith.addf %361, %373 : vector<8x512xf32>
    %c26_77 = arith.constant 26 : index
    %375 = memref.load %arg4[%c26_77] : memref<36xf32, #tpu.memory_space<smem>>
    %376 = vector.broadcast %375 : f32 to vector<8x512xf32>
    %377 = arith.mulf %376, %370 : vector<8x512xf32>
    %378 = arith.addf %365, %377 : vector<8x512xf32>
    %c1_78 = arith.constant 1 : index
    %c0_79 = arith.constant 0 : index
    %c0_80 = arith.constant 0 : index
    %379 = vector.load %arg10[%c1_78, %c0_79, %c0_80] : memref<2x8x768xf32, #tpu.memory_space<vmem>>, vector<1x8x768xf32>
    %380 = vector.shape_cast %379 : vector<1x8x768xf32> to vector<8x768xf32>
    %381 = vector.extract_strided_slice %380 {offsets = [0, 95], sizes = [8, 512], strides = [1, 1]} : vector<8x768xf32> to vector<8x512xf32>
    %cst_81 = arith.constant 0.000000e+00 : f32
    %382 = vector.shape_cast %18 : vector<1x512xi1> to vector<1x512xi1>
    %383 = vector.broadcast %382 : vector<1x512xi1> to vector<8x512xi1>
    %384 = vector.broadcast %cst_81 : f32 to vector<8x512xf32>
    %385 = arith.select %383, %381, %384 : vector<8x512xi1>, vector<8x512xf32>
    %c9_82 = arith.constant 9 : index
    %386 = memref.load %arg4[%c9_82] : memref<36xf32, #tpu.memory_space<smem>>
    %387 = vector.broadcast %386 : f32 to vector<8x512xf32>
    %388 = arith.mulf %387, %385 : vector<8x512xf32>
    %389 = arith.addf %374, %388 : vector<8x512xf32>
    %c27_83 = arith.constant 27 : index
    %390 = memref.load %arg4[%c27_83] : memref<36xf32, #tpu.memory_space<smem>>
    %391 = vector.broadcast %390 : f32 to vector<8x512xf32>
    %392 = arith.mulf %391, %385 : vector<8x512xf32>
    %393 = arith.addf %378, %392 : vector<8x512xf32>
    %394 = vector.extract_strided_slice %380 {offsets = [0, 96], sizes = [8, 512], strides = [1, 1]} : vector<8x768xf32> to vector<8x512xf32>
    %c10_84 = arith.constant 10 : index
    %395 = memref.load %arg4[%c10_84] : memref<36xf32, #tpu.memory_space<smem>>
    %396 = vector.broadcast %395 : f32 to vector<8x512xf32>
    %397 = arith.mulf %396, %394 : vector<8x512xf32>
    %398 = arith.addf %389, %397 : vector<8x512xf32>
    %c28_85 = arith.constant 28 : index
    %399 = memref.load %arg4[%c28_85] : memref<36xf32, #tpu.memory_space<smem>>
    %400 = vector.broadcast %399 : f32 to vector<8x512xf32>
    %401 = arith.mulf %400, %394 : vector<8x512xf32>
    %402 = arith.addf %393, %401 : vector<8x512xf32>
    %403 = vector.extract_strided_slice %380 {offsets = [0, 97], sizes = [8, 512], strides = [1, 1]} : vector<8x768xf32> to vector<8x512xf32>
    %cst_86 = arith.constant 0.000000e+00 : f32
    %404 = vector.shape_cast %20 : vector<1x512xi1> to vector<1x512xi1>
    %405 = vector.broadcast %404 : vector<1x512xi1> to vector<8x512xi1>
    %406 = vector.broadcast %cst_86 : f32 to vector<8x512xf32>
    %407 = arith.select %405, %403, %406 : vector<8x512xi1>, vector<8x512xf32>
    %c11_87 = arith.constant 11 : index
    %408 = memref.load %arg4[%c11_87] : memref<36xf32, #tpu.memory_space<smem>>
    %409 = vector.broadcast %408 : f32 to vector<8x512xf32>
    %410 = arith.mulf %409, %407 : vector<8x512xf32>
    %411 = arith.addf %398, %410 : vector<8x512xf32>
    %c29_88 = arith.constant 29 : index
    %412 = memref.load %arg4[%c29_88] : memref<36xf32, #tpu.memory_space<smem>>
    %413 = vector.broadcast %412 : f32 to vector<8x512xf32>
    %414 = arith.mulf %413, %407 : vector<8x512xf32>
    %415 = arith.addf %402, %414 : vector<8x512xf32>
    %416 = vector.extract_strided_slice %380 {offsets = [0, 127], sizes = [8, 512], strides = [1, 1]} : vector<8x768xf32> to vector<8x512xf32>
    %cst_89 = arith.constant 0.000000e+00 : f32
    %417 = vector.shape_cast %18 : vector<1x512xi1> to vector<1x512xi1>
    %418 = vector.broadcast %417 : vector<1x512xi1> to vector<8x512xi1>
    %419 = vector.broadcast %cst_89 : f32 to vector<8x512xf32>
    %420 = arith.select %418, %416, %419 : vector<8x512xi1>, vector<8x512xf32>
    %c12_90 = arith.constant 12 : index
    %421 = memref.load %arg4[%c12_90] : memref<36xf32, #tpu.memory_space<smem>>
    %422 = vector.broadcast %421 : f32 to vector<8x512xf32>
    %423 = arith.mulf %422, %420 : vector<8x512xf32>
    %424 = arith.addf %411, %423 : vector<8x512xf32>
    %c30_91 = arith.constant 30 : index
    %425 = memref.load %arg4[%c30_91] : memref<36xf32, #tpu.memory_space<smem>>
    %426 = vector.broadcast %425 : f32 to vector<8x512xf32>
    %427 = arith.mulf %426, %420 : vector<8x512xf32>
    %428 = arith.addf %415, %427 : vector<8x512xf32>
    %429 = vector.extract_strided_slice %380 {offsets = [0, 128], sizes = [8, 512], strides = [1, 1]} : vector<8x768xf32> to vector<8x512xf32>
    %c13_92 = arith.constant 13 : index
    %430 = memref.load %arg4[%c13_92] : memref<36xf32, #tpu.memory_space<smem>>
    %431 = vector.broadcast %430 : f32 to vector<8x512xf32>
    %432 = arith.mulf %431, %429 : vector<8x512xf32>
    %433 = arith.addf %424, %432 : vector<8x512xf32>
    %c31_93 = arith.constant 31 : index
    %434 = memref.load %arg4[%c31_93] : memref<36xf32, #tpu.memory_space<smem>>
    %435 = vector.broadcast %434 : f32 to vector<8x512xf32>
    %436 = arith.mulf %435, %429 : vector<8x512xf32>
    %437 = arith.addf %428, %436 : vector<8x512xf32>
    %438 = vector.extract_strided_slice %380 {offsets = [0, 129], sizes = [8, 512], strides = [1, 1]} : vector<8x768xf32> to vector<8x512xf32>
    %cst_94 = arith.constant 0.000000e+00 : f32
    %439 = vector.shape_cast %20 : vector<1x512xi1> to vector<1x512xi1>
    %440 = vector.broadcast %439 : vector<1x512xi1> to vector<8x512xi1>
    %441 = vector.broadcast %cst_94 : f32 to vector<8x512xf32>
    %442 = arith.select %440, %438, %441 : vector<8x512xi1>, vector<8x512xf32>
    %c14_95 = arith.constant 14 : index
    %443 = memref.load %arg4[%c14_95] : memref<36xf32, #tpu.memory_space<smem>>
    %444 = vector.broadcast %443 : f32 to vector<8x512xf32>
    %445 = arith.mulf %444, %442 : vector<8x512xf32>
    %446 = arith.addf %433, %445 : vector<8x512xf32>
    %c32_96 = arith.constant 32 : index
    %447 = memref.load %arg4[%c32_96] : memref<36xf32, #tpu.memory_space<smem>>
    %448 = vector.broadcast %447 : f32 to vector<8x512xf32>
    %449 = arith.mulf %448, %442 : vector<8x512xf32>
    %450 = arith.addf %437, %449 : vector<8x512xf32>
    %451 = vector.extract_strided_slice %380 {offsets = [0, 159], sizes = [8, 512], strides = [1, 1]} : vector<8x768xf32> to vector<8x512xf32>
    %cst_97 = arith.constant 0.000000e+00 : f32
    %452 = vector.shape_cast %18 : vector<1x512xi1> to vector<1x512xi1>
    %453 = vector.broadcast %452 : vector<1x512xi1> to vector<8x512xi1>
    %454 = vector.broadcast %cst_97 : f32 to vector<8x512xf32>
    %455 = arith.select %453, %451, %454 : vector<8x512xi1>, vector<8x512xf32>
    %c15_98 = arith.constant 15 : index
    %456 = memref.load %arg4[%c15_98] : memref<36xf32, #tpu.memory_space<smem>>
    %457 = vector.broadcast %456 : f32 to vector<8x512xf32>
    %458 = arith.mulf %457, %455 : vector<8x512xf32>
    %459 = arith.addf %446, %458 : vector<8x512xf32>
    %c33_99 = arith.constant 33 : index
    %460 = memref.load %arg4[%c33_99] : memref<36xf32, #tpu.memory_space<smem>>
    %461 = vector.broadcast %460 : f32 to vector<8x512xf32>
    %462 = arith.mulf %461, %455 : vector<8x512xf32>
    %463 = arith.addf %450, %462 : vector<8x512xf32>
    %464 = vector.extract_strided_slice %380 {offsets = [0, 160], sizes = [8, 512], strides = [1, 1]} : vector<8x768xf32> to vector<8x512xf32>
    %c16_100 = arith.constant 16 : index
    %465 = memref.load %arg4[%c16_100] : memref<36xf32, #tpu.memory_space<smem>>
    %466 = vector.broadcast %465 : f32 to vector<8x512xf32>
    %467 = arith.mulf %466, %464 : vector<8x512xf32>
    %468 = arith.addf %459, %467 : vector<8x512xf32>
    %c34_101 = arith.constant 34 : index
    %469 = memref.load %arg4[%c34_101] : memref<36xf32, #tpu.memory_space<smem>>
    %470 = vector.broadcast %469 : f32 to vector<8x512xf32>
    %471 = arith.mulf %470, %464 : vector<8x512xf32>
    %472 = arith.addf %463, %471 : vector<8x512xf32>
    %473 = vector.extract_strided_slice %380 {offsets = [0, 161], sizes = [8, 512], strides = [1, 1]} : vector<8x768xf32> to vector<8x512xf32>
    %cst_102 = arith.constant 0.000000e+00 : f32
    %474 = vector.shape_cast %20 : vector<1x512xi1> to vector<1x512xi1>
    %475 = vector.broadcast %474 : vector<1x512xi1> to vector<8x512xi1>
    %476 = vector.broadcast %cst_102 : f32 to vector<8x512xf32>
    %477 = arith.select %475, %473, %476 : vector<8x512xi1>, vector<8x512xf32>
    %c17_103 = arith.constant 17 : index
    %478 = memref.load %arg4[%c17_103] : memref<36xf32, #tpu.memory_space<smem>>
    %479 = vector.broadcast %478 : f32 to vector<8x512xf32>
    %480 = arith.mulf %479, %477 : vector<8x512xf32>
    %481 = arith.addf %468, %480 : vector<8x512xf32>
    %c35_104 = arith.constant 35 : index
    %482 = memref.load %arg4[%c35_104] : memref<36xf32, #tpu.memory_space<smem>>
    %483 = vector.broadcast %482 : f32 to vector<8x512xf32>
    %484 = arith.mulf %483, %477 : vector<8x512xf32>
    %485 = arith.addf %472, %484 : vector<8x512xf32>
    %cst_105 = arith.constant 0.000000e+00 : f32
    %486 = vector.broadcast %cst_105 : f32 to vector<8x512xf32>
    %487 = arith.maximumf %481, %486 : vector<8x512xf32>
    %cst_106 = arith.constant 0.000000e+00 : f32
    %488 = vector.broadcast %cst_106 : f32 to vector<8x512xf32>
    %489 = arith.maximumf %485, %488 : vector<8x512xf32>
    %c0_107 = arith.constant 0 : index
    %c0_108 = arith.constant 0 : index
    %c0_109 = arith.constant 0 : index
    %490 = vector.load %arg6[%c0_107, %c0_108, %c0_109] : memref<2x512x128xf32, #tpu.memory_space<vmem>>, vector<1x512x128xf32>
    %491 = vector.shape_cast %490 : vector<1x512x128xf32> to vector<512x128xf32>
    %cst_110 = arith.constant dense<0.000000e+00> : vector<8x128xf32>
    %492 = tpu.matmul %487, %491, %cst_110 {dimension_numbers = #tpu.dot_dimension_numbers<[1], [0], [0], [1], [0, 0, 1, 1], [], []>} : vector<8x512xf32>, vector<512x128xf32>, vector<8x128xf32> -> vector<8x128xf32>
    %c1_111 = arith.constant 1 : index
    %c0_112 = arith.constant 0 : index
    %c0_113 = arith.constant 0 : index
    %493 = vector.load %arg6[%c1_111, %c0_112, %c0_113] : memref<2x512x128xf32, #tpu.memory_space<vmem>>, vector<1x512x128xf32>
    %494 = vector.shape_cast %493 : vector<1x512x128xf32> to vector<512x128xf32>
    %cst_114 = arith.constant dense<0.000000e+00> : vector<8x128xf32>
    %495 = tpu.matmul %489, %494, %cst_114 {dimension_numbers = #tpu.dot_dimension_numbers<[1], [0], [0], [1], [0, 0, 1, 1], [], []>} : vector<8x512xf32>, vector<512x128xf32>, vector<8x128xf32> -> vector<8x128xf32>
    %496 = arith.addf %492, %495 : vector<8x128xf32>
    %c0_115 = arith.constant 0 : index
    %c0_116 = arith.constant 0 : index
    %497 = vector.load %arg7[%c0_115, %c0_116] : memref<1x128xf32, #tpu.memory_space<vmem>>, vector<1x128xf32>
    %498 = vector.broadcast %497 : vector<1x128xf32> to vector<8x128xf32>
    %499 = arith.addf %496, %498 : vector<8x128xf32>
    %500 = arith.negf %499 : vector<8x128xf32>
    %501 = math.exp %500 : vector<8x128xf32>
    %cst_117 = arith.constant 1.000000e+00 : f32
    %502 = vector.broadcast %cst_117 : f32 to vector<8x128xf32>
    %503 = arith.addf %502, %501 : vector<8x128xf32>
    %504 = arith.divf %502, %503 : vector<8x128xf32>
    %c0_118 = arith.constant 0 : index
    %c0_119 = arith.constant 0 : index
    %505 = vector.load %arg9[%c0_118, %c0_119] : memref<8x128xf32, #tpu.memory_space<vmem>>, vector<8x128xf32>
    tpu.vector_store %arg9[%c0_118, %c0_119], %504 {strides = array<i32>} : memref<8x128xf32, #tpu.memory_space<vmem>>, vector<8x128xf32>,
    %cst_120 = arith.constant 2.000000e+00 : f32
    %506 = vector.broadcast %cst_120 : f32 to vector<8x128xf32>
    %507 = arith.mulf %504, %506 : vector<8x128xf32>
    %cst_121 = arith.constant 5.000000e-01 : f32
    %508 = vector.broadcast %cst_121 : f32 to vector<8x128xf32>
    %509 = arith.subf %507, %508 : vector<8x128xf32>
    %510 = math.roundeven %509 : vector<8x128xf32>
    %511 = arith.fptosi %510 : vector<8x128xf32> to vector<8x128xi32>
    %c1_i32_122 = arith.constant 1 : i32
    %512 = vector.broadcast %c1_i32_122 : i32 to vector<8x128xi32>
    %513 = arith.andi %511, %512 : vector<8x128xi32>
    %514 = arith.sitofp %513 : vector<8x128xi32> to vector<8x128xf32>
    %c0_123 = arith.constant 0 : index
    %c0_124 = arith.constant 0 : index
    %515 = vector.load %arg8[%c0_123, %c0_124] : memref<8x128xf32, #tpu.memory_space<vmem>>, vector<8x128xf32>
    tpu.vector_store %arg8[%c0_123, %c0_124], %514 {strides = array<i32>} : memref<8x128xf32, #tpu.memory_space<vmem>>, vector<8x128xf32>,
    return
  }
  func.func @transform_0(%arg0: i32) -> (i32, i32) {
    %c0_i32 = arith.constant 0 : i32
    %c0_i32_0 = arith.constant 0 : i32
    return %arg0, %c0_i32 : i32, i32
  }
  func.func @transform_1(%arg0: i32) -> i32 {
    %c0_i32 = arith.constant 0 : i32
    %c0_i32_0 = arith.constant 0 : i32
    return %c0_i32 : i32
  }
  func.func @transform_2(%arg0: i32) -> i32 {
    %c0_i32 = arith.constant 0 : i32
    %c0_i32_0 = arith.constant 0 : i32
    return %c0_i32 : i32
  }
  func.func @transform_3(%arg0: i32) -> i32 {
    %c0_i32 = arith.constant 0 : i32
    %c0_i32_0 = arith.constant 0 : i32
    return %c0_i32 : i32
  }
  func.func @transform_4(%arg0: i32) -> i32 {
    %c0_i32 = arith.constant 0 : i32
    %c0_i32_0 = arith.constant 0 : i32
    return %c0_i32 : i32
  }
  func.func @transform_5(%arg0: i32) -> (i32, i32, i32) {
    %c0_i32 = arith.constant 0 : i32
    %c0_i32_0 = arith.constant 0 : i32
    %c0_i32_1 = arith.constant 0 : i32
    %c0_i32_2 = arith.constant 0 : i32
    return %c0_i32, %c0_i32_0, %c0_i32_1 : i32, i32, i32
  }
  func.func @transform_6(%arg0: i32) -> (i32, i32) {
    %c0_i32 = arith.constant 0 : i32
    %c0_i32_0 = arith.constant 0 : i32
    %c0_i32_1 = arith.constant 0 : i32
    return %c0_i32, %c0_i32_0 : i32, i32
  }
  func.func @transform_7(%arg0: i32) -> (i32, i32) {
    %c0_i32 = arith.constant 0 : i32
    %c0_i32_0 = arith.constant 0 : i32
    return %arg0, %c0_i32 : i32, i32
  }
  func.func @transform_8(%arg0: i32) -> (i32, i32) {
    %c0_i32 = arith.constant 0 : i32
    %c0_i32_0 = arith.constant 0 : i32
    return %arg0, %c0_i32 : i32, i32
  }
}

</mosaic_0001>

<llo_original>
// kernel: tpu_custom_call.1
$region0: #{tpu_custom_call.1}
  #allocation0 [shape = 'u32[]', space=smem, size = 0x4, offset = 0x4, fixed_abs, tag = 'smem constant byte address 0x4 - core index']
  #allocation1 [shape = 'u32[144,128]{1,0:T(1,128)}', space=vmem, size = 0x12000, scoped, tag = 'internal scratch']
  #allocation2 [shape = 'f32[2,8,768]{2,1,0:T(8,128)}', space=vmem, size = 0xc000, scoped, tag = 'scratch operand']
  %s0 = inlined_call_operand.hbm [shape: f32[16,1024], index: 0, kind: input, shape index: {}]
  %s1 = inlined_call_operand.vmem [shape: f32[36], index: 1, kind: input, shape index: {}]
  %s2 = inlined_call_operand.vmem [shape: f32[2], index: 2, kind: input, shape index: {}]
  %s3 = inlined_call_operand.vmem [shape: f32[36], index: 3, kind: input, shape index: {}]
  %s4 = inlined_call_operand.vmem [shape: f32[2], index: 4, kind: input, shape index: {}]
  %s5 = inlined_call_operand.hbm [shape: f32[2,512,128], index: 5, kind: input, shape index: {}]
  %s6 = inlined_call_operand.vmem [shape: f32[1,128], index: 6, kind: input, shape index: {}]
  %s7 = inlined_call_operand.hbm [shape: f32[16,128], index: 7, kind: output, shape index: {0}]
  %s8 = inlined_call_operand.hbm [shape: f32[16,128], index: 8, kind: output, shape index: {1}]
  %9 = xla_tuple %s7, %s8
  %s10 = sld [smem:[#allocation0]]
  $region93: #{tpu_custom_call.1} parent=0
    _
  %s12 = ssub.s32 1, %s10
  %s13 = scalar_select 0, %s12, %s10
  $region1: #{tpu_custom_call.1} parent=0
    #allocation3 [shape = 'u8[65536]{0}', space=vmem, size = 0x10000, scoped, tag = 'input window, operand 0']
    #allocation4 [shape = 's32[2]{0}', space=sflag, size = 0x8, scoped, tag = 'scoped memory for tpu_custom_call.1']
    #allocation5 [shape = 's32[2]{0}', space=sflag, size = 0x8, scoped, tag = 'scoped memory for tpu_custom_call.1']
    #allocation6 [shape = 's32[2]{0}', space=sflag, size = 0x8, scoped, tag = 'scoped memory for tpu_custom_call.1']
    #allocation7 [shape = 'u8[512]{0}', space=smem, size = 0x200, scoped, tag = 'input window, operand 1, single buffered']
    #allocation8 [shape = 'u8[512]{0}', space=smem, size = 0x200, scoped, tag = 'input window, operand 2, single buffered']
    #allocation9 [shape = 's32[1]{0}', space=sflag, size = 0x4, scoped, tag = 'scoped memory for tpu_custom_call.1']
    #allocation10 [shape = 'u8[512]{0}', space=smem, size = 0x200, scoped, tag = 'input window, operand 3, single buffered']
    #allocation11 [shape = 'u8[512]{0}', space=smem, size = 0x200, scoped, tag = 'input window, operand 4, single buffered']
    #allocation12 [shape = 's32[1]{0}', space=sflag, size = 0x4, scoped, tag = 'scoped memory for tpu_custom_call.1']
    #allocation13 [shape = 'u8[524288]{0}', space=vmem, size = 0x80000, scoped, tag = 'input window, operand 5, single buffered']
    #allocation14 [shape = 's32[1]{0}', space=sflag, size = 0x4, scoped, tag = 'scoped memory for tpu_custom_call.1']
    #allocation15 [shape = 'u8[8192]{0}', space=vmem, size = 0x2000, scoped, tag = 'output window, operand 0']
    #allocation16 [shape = 'u8[8192]{0}', space=vmem, size = 0x2000, scoped, tag = 'output window, operand 1']
    #allocation17 [shape = 's32[2]{0}', space=sflag, size = 0x8, scoped, tag = 'scoped memory for tpu_custom_call.1']
    %14 = vsyncpa [#allocation4], 0
    %s15 = scalar_lea.sflag [#allocation4], 1
    %16 = vsyncpa %s15, 0
    %17 = vsyncpa [#allocation6], 0
    %18 = vsyncpa [#allocation9], 0
    %19 = vsyncpa [#allocation12], 0
    %20 = vsyncpa [#allocation14], 0
    %21 = vsyncpa [#allocation5], 0
    %s22 = scalar_lea.sflag [#allocation5], 1
    %23 = vsyncpa %s22, 0
    %24 = vsyncpa [#allocation17], 0
    %s25 = scalar_lea.sflag [#allocation17], 1
    %26 = vsyncpa %s25, 0
    loop: start=0, step=1, limit=4
    $region2: #{tpu_custom_call.1} parent=1 // loop_pre_header
      _
    $region3: #{tpu_custom_call.1} parent=1 // loop_header
      %s28 = sphi 0, %s32
      %p29 = scmp.ge.s32.totalorder %s28, 4
      %s38 = sphi 0, %s40
      %s41 = sphi 0, %s38
      %s42 = sphi 0, %s41
      %s58 = sphi 0, %s42
      %s62 = sphi 0, %s62
      %s64 = sphi 0, %s62
      %s65 = sphi 0, %s64
      %s79 = sphi 0, %s65
      %s83 = sphi 0, %s83
      %s85 = sphi 0, %s83
      %s86 = sphi 0, %s85
      %s100 = sphi 0, %s86
      %s104 = sphi 0, %s104
      %s106 = sphi 0, %s104
      %s107 = sphi 0, %s106
      %s121 = sphi 0, %s107
      %s125 = sphi 0, %s125
      %s127 = sphi 0, %s125
      %s128 = sphi 0, %s127
      %s142 = sphi 0, %s128
      %s146 = sphi 0, %s146
      %s148 = sphi 0, %s146
      %s149 = sphi 0, %s148
      %s163 = sphi 0, %s149
      %s167 = sphi 0, %s167
      %s169 = sphi 0, %s167
      %s170 = sphi 0, %s169
      %s184 = sphi 0, %s170
      %s190 = sphi 0, %s192
      %s193 = sphi 0, %s190
      %s194 = sphi 0, %s193
      %s210 = sphi 0, %s194
      %s216 = sphi 0, %s218
      %s219 = sphi 0, %s216
      %s220 = sphi 0, %s219
      %s236 = sphi 0, %s220
    $region4: #{tpu_custom_call.1} parent=1 // loop_header_branch
      %31 = sbr.rel (%p29) target = $region8
    $region5: #{tpu_custom_call.1} parent=1 // loop_body
      %s33 = ssub.s32 %s28, 1
      %s34 = ssub.s32 %s28, 2
      %s35 = sadd.s32 %s28, 1
      %s36 = ssub.s32 %s28, %s35
      %p37 = scmp.eq.s32.totalorder %s36, 0
      %s39 = sadd.s32 %s38, 1
      %s40 = scalar_select %p37, %s38, %s39
      %p43 = pneg %p37
      %p44 = scmp.eq.s32.totalorder %s28, 1
      %p45 = por %p43, %p44
      %p46 = scmp.ne.s32.totalorder %s38, %s41
      %p47 = scmp.eq.s32.totalorder %s28, 0
      %p48 = por %p46, %p47
      %p49 = scmp.ne.s32.totalorder %s38, %s41
      %p50 = scmp.eq.s32.totalorder %s33, 1
      %p51 = por %p49, %p50
      %p52 = scmp.ne.s32.totalorder %s41, %s42
      %p53 = scmp.eq.s32.totalorder %s33, 0
      %p54 = por %p52, %p53
      %p55 = scmp.ne.s32.totalorder %s41, %s42
      %p56 = scmp.eq.s32.totalorder %s34, 1
      %p57 = por %p55, %p56
      %p59 = scmp.ne.s32.totalorder %s42, %s58
      %p60 = scmp.eq.s32.totalorder %s34, 0
      %p61 = por %p59, %p60
      %s63 = sadd.s32 %s62, 1
      %p66 = scmp.eq.s32.totalorder %s28, 1
      %p67 = scmp.ne.s32.totalorder %s62, %s64
      %p68 = scmp.eq.s32.totalorder %s28, 0
      %p69 = por %p67, %p68
      %p70 = scmp.ne.s32.totalorder %s62, %s64
      %p71 = scmp.eq.s32.totalorder %s33, 1
      %p72 = por %p70, %p71
      %p73 = scmp.ne.s32.totalorder %s64, %s65
      %p74 = scmp.eq.s32.totalorder %s33, 0
      %p75 = por %p73, %p74
      %p76 = scmp.ne.s32.totalorder %s64, %s65
      %p77 = scmp.eq.s32.totalorder %s34, 1
      %p78 = por %p76, %p77
      %p80 = scmp.ne.s32.totalorder %s65, %s79
      %p81 = scmp.eq.s32.totalorder %s34, 0
      %p82 = por %p80, %p81
      %s84 = sadd.s32 %s83, 1
      %p87 = scmp.eq.s32.totalorder %s28, 1
      %p88 = scmp.ne.s32.totalorder %s83, %s85
      %p89 = scmp.eq.s32.totalorder %s28, 0
      %p90 = por %p88, %p89
      %p91 = scmp.ne.s32.totalorder %s83, %s85
      %p92 = scmp.eq.s32.totalorder %s33, 1
      %p93 = por %p91, %p92
      %p94 = scmp.ne.s32.totalorder %s85, %s86
      %p95 = scmp.eq.s32.totalorder %s33, 0
      %p96 = por %p94, %p95
      %p97 = scmp.ne.s32.totalorder %s85, %s86
      %p98 = scmp.eq.s32.totalorder %s34, 1
      %p99 = por %p97, %p98
      %p101 = scmp.ne.s32.totalorder %s86, %s100
      %p102 = scmp.eq.s32.totalorder %s34, 0
      %p103 = por %p101, %p102
      %s105 = sadd.s32 %s104, 1
      %p108 = scmp.eq.s32.totalorder %s28, 1
      %p109 = scmp.ne.s32.totalorder %s104, %s106
      %p110 = scmp.eq.s32.totalorder %s28, 0
      %p111 = por %p109, %p110
      %p112 = scmp.ne.s32.totalorder %s104, %s106
      %p113 = scmp.eq.s32.totalorder %s33, 1
      %p114 = por %p112, %p113
      %p115 = scmp.ne.s32.totalorder %s106, %s107
      %p116 = scmp.eq.s32.totalorder %s33, 0
      %p117 = por %p115, %p116
      %p118 = scmp.ne.s32.totalorder %s106, %s107
      %p119 = scmp.eq.s32.totalorder %s34, 1
      %p120 = por %p118, %p119
      %p122 = scmp.ne.s32.totalorder %s107, %s121
      %p123 = scmp.eq.s32.totalorder %s34, 0
      %p124 = por %p122, %p123
      %s126 = sadd.s32 %s125, 1
      %p129 = scmp.eq.s32.totalorder %s28, 1
      %p130 = scmp.ne.s32.totalorder %s125, %s127
      %p131 = scmp.eq.s32.totalorder %s28, 0
      %p132 = por %p130, %p131
      %p133 = scmp.ne.s32.totalorder %s125, %s127
      %p134 = scmp.eq.s32.totalorder %s33, 1
      %p135 = por %p133, %p134
      %p136 = scmp.ne.s32.totalorder %s127, %s128
      %p137 = scmp.eq.s32.totalorder %s33, 0
      %p138 = por %p136, %p137
      %p139 = scmp.ne.s32.totalorder %s127, %s128
      %p140 = scmp.eq.s32.totalorder %s34, 1
      %p141 = por %p139, %p140
      %p143 = scmp.ne.s32.totalorder %s128, %s142
      %p144 = scmp.eq.s32.totalorder %s34, 0
      %p145 = por %p143, %p144
      %s147 = sadd.s32 %s146, 1
      %p150 = scmp.eq.s32.totalorder %s28, 1
      %p151 = scmp.ne.s32.totalorder %s146, %s148
      %p152 = scmp.eq.s32.totalorder %s28, 0
      %p153 = por %p151, %p152
      %p154 = scmp.ne.s32.totalorder %s146, %s148
      %p155 = scmp.eq.s32.totalorder %s33, 1
      %p156 = por %p154, %p155
      %p157 = scmp.ne.s32.totalorder %s148, %s149
      %p158 = scmp.eq.s32.totalorder %s33, 0
      %p159 = por %p157, %p158
      %p160 = scmp.ne.s32.totalorder %s148, %s149
      %p161 = scmp.eq.s32.totalorder %s34, 1
      %p162 = por %p160, %p161
      %p164 = scmp.ne.s32.totalorder %s149, %s163
      %p165 = scmp.eq.s32.totalorder %s34, 0
      %p166 = por %p164, %p165
      %s168 = sadd.s32 %s167, 1
      %p171 = scmp.eq.s32.totalorder %s28, 1
      %p172 = scmp.ne.s32.totalorder %s167, %s169
      %p173 = scmp.eq.s32.totalorder %s28, 0
      %p174 = por %p172, %p173
      %p175 = scmp.ne.s32.totalorder %s167, %s169
      %p176 = scmp.eq.s32.totalorder %s33, 1
      %p177 = por %p175, %p176
      %p178 = scmp.ne.s32.totalorder %s169, %s170
      %p179 = scmp.eq.s32.totalorder %s33, 0
      %p180 = por %p178, %p179
      %p181 = scmp.ne.s32.totalorder %s169, %s170
      %p182 = scmp.eq.s32.totalorder %s34, 1
      %p183 = por %p181, %p182
      %p185 = scmp.ne.s32.totalorder %s170, %s184
      %p186 = scmp.eq.s32.totalorder %s34, 0
      %p187 = por %p185, %p186
      %s188 = ssub.s32 %s28, %s35
      %p189 = scmp.eq.s32.totalorder %s188, 0
      %s191 = sadd.s32 %s190, 1
      %s192 = scalar_select %p189, %s190, %s191
      %p195 = pneg %p189
      %p196 = scmp.eq.s32.totalorder %s28, 1
      %p197 = por %p195, %p196
      %p198 = scmp.ne.s32.totalorder %s190, %s193
      %p199 = scmp.eq.s32.totalorder %s28, 0
      %p200 = por %p198, %p199
      %p201 = scmp.ne.s32.totalorder %s190, %s193
      %p202 = scmp.eq.s32.totalorder %s33, 1
      %p203 = por %p201, %p202
      %p204 = scmp.ne.s32.totalorder %s193, %s194
      %p205 = scmp.eq.s32.totalorder %s33, 0
      %p206 = por %p204, %p205
      %p207 = scmp.ne.s32.totalorder %s193, %s194
      %p208 = scmp.eq.s32.totalorder %s34, 1
      %p209 = por %p207, %p208
      %p211 = scmp.ne.s32.totalorder %s194, %s210
      %p212 = scmp.eq.s32.totalorder %s34, 0
      %p213 = por %p211, %p212
      %s214 = ssub.s32 %s28, %s35
      %p215 = scmp.eq.s32.totalorder %s214, 0
      %s217 = sadd.s32 %s216, 1
      %s218 = scalar_select %p215, %s216, %s217
      %p221 = pneg %p215
      %p222 = scmp.eq.s32.totalorder %s28, 1
      %p223 = por %p221, %p222
      %p224 = scmp.ne.s32.totalorder %s216, %s219
      %p225 = scmp.eq.s32.totalorder %s28, 0
      %p226 = por %p224, %p225
      %p227 = scmp.ne.s32.totalorder %s216, %s219
      %p228 = scmp.eq.s32.totalorder %s33, 1
      %p229 = por %p227, %p228
      %p230 = scmp.ne.s32.totalorder %s219, %s220
      %p231 = scmp.eq.s32.totalorder %s33, 0
      %p232 = por %p230, %p231
      %p233 = scmp.ne.s32.totalorder %s219, %s220
      %p234 = scmp.eq.s32.totalorder %s34, 1
      %p235 = por %p233, %p234
      %p237 = scmp.ne.s32.totalorder %s220, %s236
      %p238 = scmp.eq.s32.totalorder %s34, 0
      %p239 = por %p237, %p238
      %p240 = scmp.le.s32.totalorder 1, %s28
      %p241 = scmp.lt.s32.totalorder %s28, 3
      %p242 = pnand %p240, %p241
      %p243 = pneg %p242
      // Predicated region
      $region9: #{tpu_custom_call.1} parent=5 // pred_check
        _
      $region10: #{tpu_custom_call.1} parent=5 // pred_check_branch
        %245 = sbr.rel (%p242) target = $region12
      $region11: #{tpu_custom_call.1} parent=5 // pred_region
        %s246 = ssub.s32 %s28, 1
        // Predicated region
        $region13: #{tpu_custom_call.1} parent=11 // pred_check
          %p247 = pneg %p75
        $region14: #{tpu_custom_call.1} parent=11 // pred_check_branch
          %249 = sbr.rel (%p247) target = $region16
        $region15: #{tpu_custom_call.1} parent=11 // pred_region
          %s251 = ssub.s32 16, 16
          %252 = vsyncadd [#allocation6], %s251
          %s254 = sshll.u32 %s1, 4
          %s255 = int_to_ptr.vmem [resolvable:$true] %s254
          %257 = dma.vmem_to_smem %s255, 16, [#allocation7], [#allocation6]
        $region16: #{tpu_custom_call.1} parent=11 // pred_fallthru
          _
        // Predicated region
        $region17: #{tpu_custom_call.1} parent=11 // pred_check
          %p258 = pneg %p96
        $region18: #{tpu_custom_call.1} parent=11 // pred_check_branch
          %260 = sbr.rel (%p258) target = $region20
        $region19: #{tpu_custom_call.1} parent=11 // pred_region
          %s262 = ssub.s32 16, 16
          %263 = vsyncadd [#allocation9], %s262
          %s265 = sshll.u32 %s2, 4
          %s266 = int_to_ptr.vmem [resolvable:$true] %s265
          %268 = dma.vmem_to_smem %s266, 16, [#allocation8], [#allocation9]
        $region20: #{tpu_custom_call.1} parent=11 // pred_fallthru
          _
        // Predicated region
        $region21: #{tpu_custom_call.1} parent=11 // pred_check
          %p269 = pneg %p117
        $region22: #{tpu_custom_call.1} parent=11 // pred_check_branch
          %271 = sbr.rel (%p269) target = $region24
        $region23: #{tpu_custom_call.1} parent=11 // pred_region
          %s273 = ssub.s32 16, 16
          %274 = vsyncadd [#allocation9], %s273
          %s276 = sshll.u32 %s3, 4
          %s277 = int_to_ptr.vmem [resolvable:$true] %s276
          %279 = dma.vmem_to_smem %s277, 16, [#allocation10], [#allocation9]
        $region24: #{tpu_custom_call.1} parent=11 // pred_fallthru
          _
        // Predicated region
        $region25: #{tpu_custom_call.1} parent=11 // pred_check
          %p280 = pneg %p138
        $region26: #{tpu_custom_call.1} parent=11 // pred_check_branch
          %282 = sbr.rel (%p280) target = $region28
        $region27: #{tpu_custom_call.1} parent=11 // pred_region
          %s284 = ssub.s32 16, 16
          %285 = vsyncadd [#allocation12], %s284
          %s287 = sshll.u32 %s4, 4
          %s288 = int_to_ptr.vmem [resolvable:$true] %s287
          %290 = dma.vmem_to_smem %s288, 16, [#allocation11], [#allocation12]
        $region28: #{tpu_custom_call.1} parent=11 // pred_fallthru
          _
        // Predicated region
        $region29: #{tpu_custom_call.1} parent=11 // pred_check
          %p291 = pneg %p159
        $region30: #{tpu_custom_call.1} parent=11 // pred_check_branch
          %293 = sbr.rel (%p291) target = $region32
        $region31: #{tpu_custom_call.1} parent=11 // pred_region
          %s295 = ssub.s32 16384, 16384
          %296 = vsyncadd [#allocation14], %s295
          %s297 = sshll.u32 [#allocation13], 4
          %s298 = int_to_ptr.vmem [resolvable:$true] %s297
          %303 = dma.hbm_to_vmem [thread:$0]  %s5, 16384, %s298, [#allocation14], 128, 128, 8
        $region32: #{tpu_custom_call.1} parent=11 // pred_fallthru
          _
        // Predicated region
        $region33: #{tpu_custom_call.1} parent=11 // pred_check
          %p304 = pneg %p180
        $region34: #{tpu_custom_call.1} parent=11 // pred_check_branch
          %306 = sbr.rel (%p304) target = $region36
        $region35: #{tpu_custom_call.1} parent=11 // pred_region
          _
        $region36: #{tpu_custom_call.1} parent=11 // pred_fallthru
          _
      $region12: #{tpu_custom_call.1} parent=5 // pred_fallthru
        _
      %p307 = scmp.lt.s32.totalorder %s28, 2
      // Predicated region
      $region37: #{tpu_custom_call.1} parent=5 // pred_check
        %p308 = pneg %p307
      $region38: #{tpu_custom_call.1} parent=5 // pred_check_branch
        %310 = sbr.rel (%p308) target = $region40
      $region39: #{tpu_custom_call.1} parent=5 // pred_region
        // Predicated region
        $region41: #{tpu_custom_call.1} parent=39 // pred_check
          %p311 = pneg %p48
        $region42: #{tpu_custom_call.1} parent=39 // pred_check_branch
          %313 = sbr.rel (%p311) target = $region44
        $region43: #{tpu_custom_call.1} parent=39 // pred_region
          %s314 = sand.u32 %s38, 1
          %s315 = scalar_lea.sflag [#allocation4], %s314
          %s316 = sand.u32 %s38, 1
          %s317 = smul.addr %s316, 64
          %s318 = scalar_lea.vmem [#allocation3], %s317
          %s320 = ssub.s32 1024, 1024
          %321 = vsyncadd %s315, %s320
          %s322 = smul.addr %s28, 8
          %s323 = smul.addr %s322, 128
          %s324 = scalar_lea.hbm %s0, %s323
          %s326 = sshll.u32 %s318, 4
          %s327 = int_to_ptr.vmem [resolvable:$true] %s326
          %329 = dma.hbm_to_vmem [thread:$0]  %s324, 1024, %s327, %s315
        $region44: #{tpu_custom_call.1} parent=39 // pred_fallthru
          _
      $region40: #{tpu_custom_call.1} parent=5 // pred_fallthru
        _
      %p330 = scmp.le.s32.totalorder 1, %s28
      %p331 = scmp.lt.s32.totalorder %s28, 3
      %p332 = pnand %p330, %p331
      %p333 = pneg %p332
      // Predicated region
      $region45: #{tpu_custom_call.1} parent=5 // pred_check
        _
      $region46: #{tpu_custom_call.1} parent=5 // pred_check_branch
        %335 = sbr.rel (%p332) target = $region48
      $region47: #{tpu_custom_call.1} parent=5 // pred_region
        %s336 = ssub.s32 %s28, 1
        %s337 = sand.u32 %s41, 1
        %s338 = scalar_lea.sflag [#allocation4], %s337
        %s339 = sand.u32 %s41, 1
        %s340 = smul.addr %s339, 64
        %s341 = scalar_lea.vmem [#allocation3], %s340
        // Predicated region
        $region49: #{tpu_custom_call.1} parent=47 // pred_check
          %p342 = pneg %p54
        $region50: #{tpu_custom_call.1} parent=47 // pred_check_branch
          %344 = sbr.rel (%p342) target = $region52
        $region51: #{tpu_custom_call.1} parent=47 // pred_region
          %345 = dma.done %s338, 1024
        $region52: #{tpu_custom_call.1} parent=47 // pred_fallthru
          _
        // Predicated region
        $region53: #{tpu_custom_call.1} parent=47 // pred_check
          %p346 = pneg %p75
        $region54: #{tpu_custom_call.1} parent=47 // pred_check_branch
          %348 = sbr.rel (%p346) target = $region56
        $region55: #{tpu_custom_call.1} parent=47 // pred_region
          %349 = dma.done [#allocation6], 16
        $region56: #{tpu_custom_call.1} parent=47 // pred_fallthru
          _
        // Predicated region
        $region57: #{tpu_custom_call.1} parent=47 // pred_check
          %p350 = pneg %p96
        $region58: #{tpu_custom_call.1} parent=47 // pred_check_branch
          %352 = sbr.rel (%p350) target = $region60
        $region59: #{tpu_custom_call.1} parent=47 // pred_region
          %353 = dma.done [#allocation9], 16
        $region60: #{tpu_custom_call.1} parent=47 // pred_fallthru
          _
        // Predicated region
        $region61: #{tpu_custom_call.1} parent=47 // pred_check
          %p354 = pneg %p117
        $region62: #{tpu_custom_call.1} parent=47 // pred_check_branch
          %356 = sbr.rel (%p354) target = $region64
        $region63: #{tpu_custom_call.1} parent=47 // pred_region
          %357 = dma.done [#allocation9], 16
        $region64: #{tpu_custom_call.1} parent=47 // pred_fallthru
          _
        // Predicated region
        $region65: #{tpu_custom_call.1} parent=47 // pred_check
          %p358 = pneg %p138
        $region66: #{tpu_custom_call.1} parent=47 // pred_check_branch
          %360 = sbr.rel (%p358) target = $region68
        $region67: #{tpu_custom_call.1} parent=47 // pred_region
          %361 = dma.done [#allocation12], 16
        $region68: #{tpu_custom_call.1} parent=47 // pred_fallthru
          _
        // Predicated region
        $region69: #{tpu_custom_call.1} parent=47 // pred_check
          %p362 = pneg %p159
        $region70: #{tpu_custom_call.1} parent=47 // pred_check_branch
          %364 = sbr.rel (%p362) target = $region72
        $region71: #{tpu_custom_call.1} parent=47 // pred_region
          %365 = dma.done [#allocation14], 16384
        $region72: #{tpu_custom_call.1} parent=47 // pred_fallthru
          _
        %366 = sfence
        %s367 = sand.u32 %s41, 1
        %s368 = scalar_lea.sflag [#allocation4], %s367
        %s369 = sand.u32 %s41, 1
        %s370 = smul.addr %s369, 64
        %s371 = scalar_lea.vmem [#allocation3], %s370
        %p372 = pneg %p54
        %p373 = pneg %p51
        %p374 = pneg %p75
        %p375 = pneg %p72
        %p376 = pneg %p96
        %p377 = pneg %p93
        %p378 = pneg %p117
        %p379 = pneg %p114
        %p380 = pneg %p138
        %p381 = pneg %p135
        %p382 = pneg %p159
        %p383 = pneg %p156
        %p384 = pneg %p180
        %p385 = pneg %p177
        %p386 = pneg %p206
        %p387 = pneg %p203
        %s388 = sand.u32 %s193, 1
        %s389 = scalar_lea.sflag [#allocation5], %s388
        %s390 = sand.u32 %s193, 1
        %s391 = smul.addr %s390, 8
        %s392 = scalar_lea.vmem [#allocation15], %s391
        %p393 = pneg %p232
        %p394 = pneg %p229
        %s395 = sand.u32 %s219, 1
        %s396 = scalar_lea.sflag [#allocation17], %s395
        %s397 = sand.u32 %s219, 1
        %s398 = smul.addr %s397, 8
        %s399 = scalar_lea.vmem [#allocation16], %s398
        %v400 = vlaneseq
        %v401 = vand.u32 %v400, 127
        %v402 = vadd.s32 %v401, 128
        %v403 = vadd.s32 %v401, 256
        %v404 = vadd.s32 %v401, 384
        %vm405 = vcmp.lt.s32.totalorder %v401, 0
        %v406 = vsub.s32 0, %v401
        %v407 = vsel %vm405, %v406, %v401
        %v408 = vshrl.u32 %v407, 5
        %v409 = vand.u32 %v407, 31
        %v410 = vsub.s32 0, %v409
        %v411 = vsel %vm405, %v410, %v409
        %vm412 = vcmp.lt.s32.totalorder %v402, 0
        %v413 = vsub.s32 0, %v402
        %v414 = vsel %vm412, %v413, %v402
        %v415 = vshrl.u32 %v414, 5
        %v416 = vand.u32 %v414, 31
        %v417 = vsub.s32 0, %v416
        %v418 = vsel %vm412, %v417, %v416
        %vm419 = vcmp.lt.s32.totalorder %v403, 0
        %v420 = vsub.s32 0, %v403
        %v421 = vsel %vm419, %v420, %v403
        %v422 = vshrl.u32 %v421, 5
        %v423 = vand.u32 %v421, 31
        %v424 = vsub.s32 0, %v423
        %v425 = vsel %vm419, %v424, %v423
        %vm426 = vcmp.lt.s32.totalorder %v404, 0
        %v427 = vsub.s32 0, %v404
        %v428 = vsel %vm426, %v427, %v404
        %v429 = vshrl.u32 %v428, 5
        %v430 = vand.u32 %v428, 31
        %v431 = vsub.s32 0, %v430
        %v432 = vsel %vm426, %v431, %v430
        %vm433 = vcmp.ne.s32.totalorder %v411, 0
        %vm434 = vcmp.ne.s32.totalorder %v418, 0
        %vm435 = vcmp.ne.s32.totalorder %v425, 0
        %vm436 = vcmp.ne.s32.totalorder %v432, 0
        %vm437 = vcmp.lt.s32.totalorder %v411, 0
        %vm438 = vcmp.lt.s32.totalorder %v418, 0
        %vm439 = vcmp.lt.s32.totalorder %v425, 0
        %vm440 = vcmp.lt.s32.totalorder %v432, 0
        %vm441 = vmand %vm437, %vm433
        %vm442 = vmand %vm438, %vm434
        %vm443 = vmand %vm439, %vm435
        %vm444 = vmand %vm440, %vm436
        %v445 = vadd.s32 %v411, 32
        %v446 = vadd.s32 %v418, 32
        %v447 = vadd.s32 %v425, 32
        %v448 = vadd.s32 %v432, 32
        %v449 = vsel %vm441, %v445, %v411
        %v450 = vsel %vm442, %v446, %v418
        %v451 = vsel %vm443, %v447, %v425
        %v452 = vsel %vm444, %v448, %v432
        %vm453 = vcmp.ge.s32.totalorder %v449, 1
        %vm454 = vcmp.ge.s32.totalorder %v450, 1
        %vm455 = vcmp.ge.s32.totalorder %v451, 1
        %vm456 = vcmp.ge.s32.totalorder %v452, 1
        %vm457 = vcmp.le.s32.totalorder %v449, 30
        %vm458 = vcmp.le.s32.totalorder %v450, 30
        %vm459 = vcmp.le.s32.totalorder %v451, 30
        %vm460 = vcmp.le.s32.totalorder %v452, 30
        %461 = vst [vmem:[#allocation2] sm:$0xff] 0.0
        %462 = vst [vmem:[#allocation2 + $0x30] sm:$0xff] 0.0
        %463 = vst [vmem:[#allocation2 + $0x28] sm:$0xff] 0.0
        %464 = vst [vmem:[#allocation2 + $0x58] sm:$0xff] 0.0
        %v465 = vld [vmem:[%s341] sm:$0xff]
        %v466 = vld [vmem:[%s341 + $0x8] sm:$0xff]
        %v467 = vld [vmem:[%s341 + $0x10] sm:$0xff]
        %v468 = vld [vmem:[%s341 + $0x18] sm:$0xff]
        %v469 = vld [vmem:[%s341 + $0x20] sm:$0xff]
        %v470 = vld [vmem:[%s341 + $0x28] sm:$0xff]
        %v471 = vld [vmem:[%s341 + $0x30] sm:$0xff]
        %v472 = vld [vmem:[%s341 + $0x38] sm:$0xff]
        %473 = vst [vmem:[#allocation2 + $0x8] sm:$0xff] %v465
        %474 = vst [vmem:[#allocation2 + $0x10] sm:$0xff] %v466
        %475 = vst [vmem:[#allocation2 + $0x18] sm:$0xff] %v467
        %476 = vst [vmem:[#allocation2 + $0x20] sm:$0xff] %v468
        %s477 = scalar_lea.vmem [#allocation2], 48
        %478 = vst [vmem:[%s477 + $0x8] sm:$0xff] %v469
        %479 = vst [vmem:[%s477 + $0x10] sm:$0xff] %v470
        %480 = vst [vmem:[%s477 + $0x18] sm:$0xff] %v471
        %481 = vst [vmem:[%s477 + $0x20] sm:$0xff] %v472
        %s482 = sld [smem:[#allocation8]]
        %v483 = vstv %s482
        %v484 = vadd.f32 %v483, 0.0
        %s485 = sld [smem:[#allocation8 + $0x1]]
        %v486 = vstv %s485
        %v487 = vadd.f32 %v486, 0.0
        %v488 = vld [vmem:[#allocation2] sm:$0xff]
        %v489 = vld [vmem:[#allocation2 + $0x8] sm:$0xff]
        %v490 = vld [vmem:[#allocation2 + $0x10] sm:$0xff]
        %v491 = vld [vmem:[#allocation2 + $0x18] sm:$0xff]
        %v492 = vld [vmem:[#allocation2 + $0x20] sm:$0xff]
        %v493 = vld [vmem:[#allocation2 + $0x28] sm:$0xff]
        %v494 = vsel %vm453, 1, 0
        %v495 = vsel %vm454, 1, 0
        %v496 = vsel %vm455, 1, 0
        %v497 = vsel %vm456, 1, 0
        %vm498 = vcmp.eq.s32.totalorder %v494, 1
        %vm499 = vcmp.eq.s32.totalorder %v495, 1
        %vm500 = vcmp.eq.s32.totalorder %v496, 1
        %vm501 = vcmp.eq.s32.totalorder %v497, 1
        %507 = vrot.lane.b32.xlu0 %v488, 33
        %v508 = vpop.permute.xlu0 %507
        %509 = vrot.lane.b32.xlu0 %v489, 33
        %v510 = vpop.permute.xlu0 %509
        %511 = vrot.lane.b32.xlu0 %v490, 33
        %v512 = vpop.permute.xlu0 %511
        %513 = vrot.lane.b32.xlu0 %v491, 33
        %v514 = vpop.permute.xlu0 %513
        %515 = vrot.lane.b32.xlu0 %v492, 33
        %v516 = vpop.permute.xlu0 %515
        %vm517 = vcmask 269312
        %v518 = vsel %vm517, %v508, %v510
        %v519 = vsel %vm517, %v510, %v512
        %v520 = vsel %vm517, %v512, %v514
        %v521 = vsel %vm517, %v514, %v516
        %v526 = vsel %vm498, %v518, 0.0
        %v527 = vsel %vm499, %v519, 0.0
        %v528 = vsel %vm500, %v520, 0.0
        %v529 = vsel %vm501, %v521, 0.0
        %s530 = sld [smem:[#allocation7]]
        %v531 = vstv %s530
        %v532 = vmul.f32 %v531, %v526
        %v533 = vmul.f32 %v531, %v527
        %v534 = vmul.f32 %v531, %v528
        %v535 = vmul.f32 %v531, %v529
        %v536 = vadd.f32 %v484, %v532
        %v537 = vadd.f32 %v484, %v533
        %v538 = vadd.f32 %v484, %v534
        %v539 = vadd.f32 %v484, %v535
        %s540 = sld [smem:[#allocation7 + $0x12]]
        %v541 = vstv %s540
        %v542 = vmul.f32 %v541, %v526
        %v543 = vmul.f32 %v541, %v527
        %v544 = vmul.f32 %v541, %v528
        %v545 = vmul.f32 %v541, %v529
        %v546 = vadd.f32 %v487, %v542
        %v547 = vadd.f32 %v487, %v543
        %v548 = vadd.f32 %v487, %v544
        %v549 = vadd.f32 %v487, %v545
        %s550 = sld [smem:[#allocation7 + $0x1]]
        %v551 = vstv %s550
        %v552 = vmul.f32 %v551, %v488
        %v553 = vmul.f32 %v551, %v489
        %v554 = vmul.f32 %v551, %v490
        %v555 = vmul.f32 %v551, %v491
        %v556 = vmul.f32 %v551, %v492
        %562 = vrot.lane.b32.xlu0 %v552, 32
        %v563 = vpop.permute.xlu0 %562
        %564 = vrot.lane.b32.xlu0 %v553, 32
        %v565 = vpop.permute.xlu0 %564
        %566 = vrot.lane.b32.xlu0 %v554, 32
        %v567 = vpop.permute.xlu0 %566
        %568 = vrot.lane.b32.xlu0 %v555, 32
        %v569 = vpop.permute.xlu0 %568
        %570 = vrot.lane.b32.xlu0 %v556, 32
        %v571 = vpop.permute.xlu0 %570
        %vm572 = vcmask 261120
        %v573 = vsel %vm572, %v563, %v565
        %v574 = vsel %vm572, %v565, %v567
        %v575 = vsel %vm572, %v567, %v569
        %v576 = vsel %vm572, %v569, %v571
        %v581 = vadd.f32 %v536, %v573
        %v582 = vadd.f32 %v537, %v574
        %v583 = vadd.f32 %v538, %v575
        %v584 = vadd.f32 %v539, %v576
        %s585 = sld [smem:[#allocation7 + $0x13]]
        %v586 = vstv %s585
        %v587 = vmul.f32 %v586, %v488
        %v588 = vmul.f32 %v586, %v489
        %v589 = vmul.f32 %v586, %v490
        %v590 = vmul.f32 %v586, %v491
        %v591 = vmul.f32 %v586, %v492
        %597 = vrot.lane.b32.xlu0 %v587, 32
        %v598 = vpop.permute.xlu0 %597
        %599 = vrot.lane.b32.xlu0 %v588, 32
        %v600 = vpop.permute.xlu0 %599
        %601 = vrot.lane.b32.xlu0 %v589, 32
        %v602 = vpop.permute.xlu0 %601
        %603 = vrot.lane.b32.xlu0 %v590, 32
        %v604 = vpop.permute.xlu0 %603
        %605 = vrot.lane.b32.xlu0 %v591, 32
        %v606 = vpop.permute.xlu0 %605
        %v607 = vsel %vm572, %v598, %v600
        %v608 = vsel %vm572, %v600, %v602
        %v609 = vsel %vm572, %v602, %v604
        %v610 = vsel %vm572, %v604, %v606
        %v615 = vadd.f32 %v546, %v607
        %v616 = vadd.f32 %v547, %v608
        %v617 = vadd.f32 %v548, %v609
        %v618 = vadd.f32 %v549, %v610
        %v619 = vsel %vm457, 1, 0
        %v620 = vsel %vm458, 1, 0
        %v621 = vsel %vm459, 1, 0
        %v622 = vsel %vm460, 1, 0
        %vm623 = vcmp.eq.s32.totalorder %v619, 1
        %vm624 = vcmp.eq.s32.totalorder %v620, 1
        %vm625 = vcmp.eq.s32.totalorder %v621, 1
        %vm626 = vcmp.eq.s32.totalorder %v622, 1
        %627 = vrot.lane.b32.xlu0 %v488, 31
        %v628 = vpop.permute.xlu0 %627
        %629 = vrot.lane.b32.xlu0 %v489, 31
        %v630 = vpop.permute.xlu0 %629
        %631 = vrot.lane.b32.xlu0 %v490, 31
        %v632 = vpop.permute.xlu0 %631
        %633 = vrot.lane.b32.xlu0 %v491, 31
        %v634 = vpop.permute.xlu0 %633
        %635 = vrot.lane.b32.xlu0 %v492, 31
        %v636 = vpop.permute.xlu0 %635
        %vm637 = vcmask 252928
        %v638 = vsel %vm637, %v628, %v630
        %v639 = vsel %vm637, %v630, %v632
        %v640 = vsel %vm637, %v632, %v634
        %v641 = vsel %vm637, %v634, %v636
        %v646 = vsel %vm623, %v638, 0.0
        %v647 = vsel %vm624, %v639, 0.0
        %v648 = vsel %vm625, %v640, 0.0
        %v649 = vsel %vm626, %v641, 0.0
        %s650 = sld [smem:[#allocation7 + $0x2]]
        %v651 = vstv %s650
        %v652 = vmul.f32 %v651, %v646
        %v653 = vmul.f32 %v651, %v647
        %v654 = vmul.f32 %v651, %v648
        %v655 = vmul.f32 %v651, %v649
        %v656 = vadd.f32 %v581, %v652
        %v657 = vadd.f32 %v582, %v653
        %v658 = vadd.f32 %v583, %v654
        %v659 = vadd.f32 %v584, %v655
        %s660 = sld [smem:[#allocation7 + $0x14]]
        %v661 = vstv %s660
        %v662 = vmul.f32 %v661, %v646
        %v663 = vmul.f32 %v661, %v647
        %v664 = vmul.f32 %v661, %v648
        %v665 = vmul.f32 %v661, %v649
        %v666 = vadd.f32 %v615, %v662
        %v667 = vadd.f32 %v616, %v663
        %v668 = vadd.f32 %v617, %v664
        %v669 = vadd.f32 %v618, %v665
        %670 = vrot.lane.b32.xlu0 %v488, 1
        %v671 = vpop.permute.xlu0 %670
        %672 = vrot.lane.b32.xlu0 %v489, 1
        %v673 = vpop.permute.xlu0 %672
        %674 = vrot.lane.b32.xlu0 %v490, 1
        %v675 = vpop.permute.xlu0 %674
        %676 = vrot.lane.b32.xlu0 %v491, 1
        %v677 = vpop.permute.xlu0 %676
        %678 = vrot.lane.b32.xlu0 %v492, 1
        %v679 = vpop.permute.xlu0 %678
        %vm680 = vcmask 7168
        %v681 = vsel %vm680, %v671, %v673
        %v682 = vsel %vm680, %v673, %v675
        %v683 = vsel %vm680, %v675, %v677
        %v684 = vsel %vm680, %v677, %v679
        %v689 = vsel %vm498, %v681, 0.0
        %v690 = vsel %vm499, %v682, 0.0
        %v691 = vsel %vm500, %v683, 0.0
        %v692 = vsel %vm501, %v684, 0.0
        %s693 = sld [smem:[#allocation7 + $0x3]]
        %v694 = vstv %s693
        %v695 = vmul.f32 %v694, %v689
        %v696 = vmul.f32 %v694, %v690
        %v697 = vmul.f32 %v694, %v691
        %v698 = vmul.f32 %v694, %v692
        %v699 = vadd.f32 %v656, %v695
        %v700 = vadd.f32 %v657, %v696
        %v701 = vadd.f32 %v658, %v697
        %v702 = vadd.f32 %v659, %v698
        %s703 = sld [smem:[#allocation7 + $0x15]]
        %v704 = vstv %s703
        %v705 = vmul.f32 %v704, %v689
        %v706 = vmul.f32 %v704, %v690
        %v707 = vmul.f32 %v704, %v691
        %v708 = vmul.f32 %v704, %v692
        %v709 = vadd.f32 %v666, %v705
        %v710 = vadd.f32 %v667, %v706
        %v711 = vadd.f32 %v668, %v707
        %v712 = vadd.f32 %v669, %v708
        %s713 = sld [smem:[#allocation7 + $0x4]]
        %v714 = vstv %s713
        %v715 = vmul.f32 %v714, %v489
        %v716 = vmul.f32 %v714, %v490
        %v717 = vmul.f32 %v714, %v491
        %v718 = vmul.f32 %v714, %v492
        %v719 = vadd.f32 %v699, %v715
        %v720 = vadd.f32 %v700, %v716
        %v721 = vadd.f32 %v701, %v717
        %v722 = vadd.f32 %v702, %v718
        %s723 = sld [smem:[#allocation7 + $0x16]]
        %v724 = vstv %s723
        %v725 = vmul.f32 %v724, %v489
        %v726 = vmul.f32 %v724, %v490
        %v727 = vmul.f32 %v724, %v491
        %v728 = vmul.f32 %v724, %v492
        %v729 = vadd.f32 %v709, %v725
        %v730 = vadd.f32 %v710, %v726
        %v731 = vadd.f32 %v711, %v727
        %v732 = vadd.f32 %v712, %v728
        %734 = vrot.lane.b32.xlu0 %v489, 127
        %v735 = vpop.permute.xlu0 %734
        %736 = vrot.lane.b32.xlu0 %v490, 127
        %v737 = vpop.permute.xlu0 %736
        %738 = vrot.lane.b32.xlu0 %v491, 127
        %v739 = vpop.permute.xlu0 %738
        %740 = vrot.lane.b32.xlu0 %v492, 127
        %v741 = vpop.permute.xlu0 %740
        %742 = vrot.lane.b32.xlu0 %v493, 127
        %v743 = vpop.permute.xlu0 %742
        %vm744 = vcmask 1039360
        %v745 = vsel %vm744, %v735, %v737
        %v746 = vsel %vm744, %v737, %v739
        %v747 = vsel %vm744, %v739, %v741
        %v748 = vsel %vm744, %v741, %v743
        %v753 = vsel %vm623, %v745, 0.0
        %v754 = vsel %vm624, %v746, 0.0
        %v755 = vsel %vm625, %v747, 0.0
        %v756 = vsel %vm626, %v748, 0.0
        %s757 = sld [smem:[#allocation7 + $0x5]]
        %v758 = vstv %s757
        %v759 = vmul.f32 %v758, %v753
        %v760 = vmul.f32 %v758, %v754
        %v761 = vmul.f32 %v758, %v755
        %v762 = vmul.f32 %v758, %v756
        %v763 = vadd.f32 %v719, %v759
        %v764 = vadd.f32 %v720, %v760
        %v765 = vadd.f32 %v721, %v761
        %v766 = vadd.f32 %v722, %v762
        %s767 = sld [smem:[#allocation7 + $0x17]]
        %v768 = vstv %s767
        %v769 = vmul.f32 %v768, %v753
        %v770 = vmul.f32 %v768, %v754
        %v771 = vmul.f32 %v768, %v755
        %v772 = vmul.f32 %v768, %v756
        %v773 = vadd.f32 %v729, %v769
        %v774 = vadd.f32 %v730, %v770
        %v775 = vadd.f32 %v731, %v771
        %v776 = vadd.f32 %v732, %v772
        %777 = vrot.lane.b32.xlu0 %v489, 97
        %v778 = vpop.permute.xlu0 %777
        %779 = vrot.lane.b32.xlu0 %v490, 97
        %v780 = vpop.permute.xlu0 %779
        %781 = vrot.lane.b32.xlu0 %v491, 97
        %v782 = vpop.permute.xlu0 %781
        %783 = vrot.lane.b32.xlu0 %v492, 97
        %v784 = vpop.permute.xlu0 %783
        %785 = vrot.lane.b32.xlu0 %v493, 97
        %v786 = vpop.permute.xlu0 %785
        %vm787 = vcmask 793600
        %v788 = vsel %vm787, %v778, %v780
        %v789 = vsel %vm787, %v780, %v782
        %v790 = vsel %vm787, %v782, %v784
        %v791 = vsel %vm787, %v784, %v786
        %v796 = vsel %vm498, %v788, 0.0
        %v797 = vsel %vm499, %v789, 0.0
        %v798 = vsel %vm500, %v790, 0.0
        %v799 = vsel %vm501, %v791, 0.0
        %s800 = sld [smem:[#allocation7 + $0x6]]
        %v801 = vstv %s800
        %v802 = vmul.f32 %v801, %v796
        %v803 = vmul.f32 %v801, %v797
        %v804 = vmul.f32 %v801, %v798
        %v805 = vmul.f32 %v801, %v799
        %v806 = vadd.f32 %v763, %v802
        %v807 = vadd.f32 %v764, %v803
        %v808 = vadd.f32 %v765, %v804
        %v809 = vadd.f32 %v766, %v805
        %s810 = sld [smem:[#allocation7 + $0x18]]
        %v811 = vstv %s810
        %v812 = vmul.f32 %v811, %v796
        %v813 = vmul.f32 %v811, %v797
        %v814 = vmul.f32 %v811, %v798
        %v815 = vmul.f32 %v811, %v799
        %v816 = vadd.f32 %v773, %v812
        %v817 = vadd.f32 %v774, %v813
        %v818 = vadd.f32 %v775, %v814
        %v819 = vadd.f32 %v776, %v815
        %s820 = sld [smem:[#allocation7 + $0x7]]
        %v821 = vstv %s820
        %v822 = vmul.f32 %v821, %v489
        %v823 = vmul.f32 %v821, %v490
        %v824 = vmul.f32 %v821, %v491
        %v825 = vmul.f32 %v821, %v492
        %v826 = vmul.f32 %v821, %v493
        %832 = vrot.lane.b32.xlu0 %v822, 96
        %v833 = vpop.permute.xlu0 %832
        %834 = vrot.lane.b32.xlu0 %v823, 96
        %v835 = vpop.permute.xlu0 %834
        %836 = vrot.lane.b32.xlu0 %v824, 96
        %v837 = vpop.permute.xlu0 %836
        %838 = vrot.lane.b32.xlu0 %v825, 96
        %v839 = vpop.permute.xlu0 %838
        %840 = vrot.lane.b32.xlu0 %v826, 96
        %v841 = vpop.permute.xlu0 %840
        %vm842 = vcmask 785408
        %v843 = vsel %vm842, %v833, %v835
        %v844 = vsel %vm842, %v835, %v837
        %v845 = vsel %vm842, %v837, %v839
        %v846 = vsel %vm842, %v839, %v841
        %v851 = vadd.f32 %v806, %v843
        %v852 = vadd.f32 %v807, %v844
        %v853 = vadd.f32 %v808, %v845
        %v854 = vadd.f32 %v809, %v846
        %s855 = sld [smem:[#allocation7 + $0x19]]
        %v856 = vstv %s855
        %v857 = vmul.f32 %v856, %v489
        %v858 = vmul.f32 %v856, %v490
        %v859 = vmul.f32 %v856, %v491
        %v860 = vmul.f32 %v856, %v492
        %v861 = vmul.f32 %v856, %v493
        %867 = vrot.lane.b32.xlu0 %v857, 96
        %v868 = vpop.permute.xlu0 %867
        %869 = vrot.lane.b32.xlu0 %v858, 96
        %v870 = vpop.permute.xlu0 %869
        %871 = vrot.lane.b32.xlu0 %v859, 96
        %v872 = vpop.permute.xlu0 %871
        %873 = vrot.lane.b32.xlu0 %v860, 96
        %v874 = vpop.permute.xlu0 %873
        %875 = vrot.lane.b32.xlu0 %v861, 96
        %v876 = vpop.permute.xlu0 %875
        %v877 = vsel %vm842, %v868, %v870
        %v878 = vsel %vm842, %v870, %v872
        %v879 = vsel %vm842, %v872, %v874
        %v880 = vsel %vm842, %v874, %v876
        %v885 = vadd.f32 %v816, %v877
        %v886 = vadd.f32 %v817, %v878
        %v887 = vadd.f32 %v818, %v879
        %v888 = vadd.f32 %v819, %v880
        %889 = vrot.lane.b32.xlu0 %v489, 95
        %v890 = vpop.permute.xlu0 %889
        %891 = vrot.lane.b32.xlu0 %v490, 95
        %v892 = vpop.permute.xlu0 %891
        %893 = vrot.lane.b32.xlu0 %v491, 95
        %v894 = vpop.permute.xlu0 %893
        %895 = vrot.lane.b32.xlu0 %v492, 95
        %v896 = vpop.permute.xlu0 %895
        %897 = vrot.lane.b32.xlu0 %v493, 95
        %v898 = vpop.permute.xlu0 %897
        %vm899 = vcmask 777216
        %v900 = vsel %vm899, %v890, %v892
        %v901 = vsel %vm899, %v892, %v894
        %v902 = vsel %vm899, %v894, %v896
        %v903 = vsel %vm899, %v896, %v898
        %v908 = vsel %vm623, %v900, 0.0
        %v909 = vsel %vm624, %v901, 0.0
        %v910 = vsel %vm625, %v902, 0.0
        %v911 = vsel %vm626, %v903, 0.0
        %s912 = sld [smem:[#allocation7 + $0x8]]
        %v913 = vstv %s912
        %v914 = vmul.f32 %v913, %v908
        %v915 = vmul.f32 %v913, %v909
        %v916 = vmul.f32 %v913, %v910
        %v917 = vmul.f32 %v913, %v911
        %v918 = vadd.f32 %v851, %v914
        %v919 = vadd.f32 %v852, %v915
        %v920 = vadd.f32 %v853, %v916
        %v921 = vadd.f32 %v854, %v917
        %s922 = sld [smem:[#allocation7 + $0x1a]]
        %v923 = vstv %s922
        %v924 = vmul.f32 %v923, %v908
        %v925 = vmul.f32 %v923, %v909
        %v926 = vmul.f32 %v923, %v910
        %v927 = vmul.f32 %v923, %v911
        %v928 = vadd.f32 %v885, %v924
        %v929 = vadd.f32 %v886, %v925
        %v930 = vadd.f32 %v887, %v926
        %v931 = vadd.f32 %v888, %v927
        %v932 = vld [vmem:[%s477] sm:$0xff]
        %v933 = vld [vmem:[%s477 + $0x8] sm:$0xff]
        %v934 = vld [vmem:[%s477 + $0x10] sm:$0xff]
        %v935 = vld [vmem:[%s477 + $0x18] sm:$0xff]
        %v936 = vld [vmem:[%s477 + $0x20] sm:$0xff]
        %v937 = vld [vmem:[%s477 + $0x28] sm:$0xff]
        %943 = vrot.lane.b32.xlu0 %v932, 33
        %v944 = vpop.permute.xlu0 %943
        %945 = vrot.lane.b32.xlu0 %v933, 33
        %v946 = vpop.permute.xlu0 %945
        %947 = vrot.lane.b32.xlu0 %v934, 33
        %v948 = vpop.permute.xlu0 %947
        %949 = vrot.lane.b32.xlu0 %v935, 33
        %v950 = vpop.permute.xlu0 %949
        %951 = vrot.lane.b32.xlu0 %v936, 33
        %v952 = vpop.permute.xlu0 %951
        %v953 = vsel %vm517, %v944, %v946
        %v954 = vsel %vm517, %v946, %v948
        %v955 = vsel %vm517, %v948, %v950
        %v956 = vsel %vm517, %v950, %v952
        %v961 = vsel %vm498, %v953, 0.0
        %v962 = vsel %vm499, %v954, 0.0
        %v963 = vsel %vm500, %v955, 0.0
        %v964 = vsel %vm501, %v956, 0.0
        %s965 = sld [smem:[#allocation7 + $0x9]]
        %v966 = vstv %s965
        %v967 = vmul.f32 %v966, %v961
        %v968 = vmul.f32 %v966, %v962
        %v969 = vmul.f32 %v966, %v963
        %v970 = vmul.f32 %v966, %v964
        %v971 = vadd.f32 %v918, %v967
        %v972 = vadd.f32 %v919, %v968
        %v973 = vadd.f32 %v920, %v969
        %v974 = vadd.f32 %v921, %v970
        %s975 = sld [smem:[#allocation7 + $0x1b]]
        %v976 = vstv %s975
        %v977 = vmul.f32 %v976, %v961
        %v978 = vmul.f32 %v976, %v962
        %v979 = vmul.f32 %v976, %v963
        %v980 = vmul.f32 %v976, %v964
        %v981 = vadd.f32 %v928, %v977
        %v982 = vadd.f32 %v929, %v978
        %v983 = vadd.f32 %v930, %v979
        %v984 = vadd.f32 %v931, %v980
        %s985 = sld [smem:[#allocation7 + $0xa]]
        %v986 = vstv %s985
        %v987 = vmul.f32 %v986, %v932
        %v988 = vmul.f32 %v986, %v933
        %v989 = vmul.f32 %v986, %v934
        %v990 = vmul.f32 %v986, %v935
        %v991 = vmul.f32 %v986, %v936
        %997 = vrot.lane.b32.xlu0 %v987, 32
        %v998 = vpop.permute.xlu0 %997
        %999 = vrot.lane.b32.xlu0 %v988, 32
        %v1000 = vpop.permute.xlu0 %999
        %1001 = vrot.lane.b32.xlu0 %v989, 32
        %v1002 = vpop.permute.xlu0 %1001
        %1003 = vrot.lane.b32.xlu0 %v990, 32
        %v1004 = vpop.permute.xlu0 %1003
        %1005 = vrot.lane.b32.xlu0 %v991, 32
        %v1006 = vpop.permute.xlu0 %1005
        %v1007 = vsel %vm572, %v998, %v1000
        %v1008 = vsel %vm572, %v1000, %v1002
        %v1009 = vsel %vm572, %v1002, %v1004
        %v1010 = vsel %vm572, %v1004, %v1006
        %v1015 = vadd.f32 %v971, %v1007
        %v1016 = vadd.f32 %v972, %v1008
        %v1017 = vadd.f32 %v973, %v1009
        %v1018 = vadd.f32 %v974, %v1010
        %s1019 = sld [smem:[#allocation7 + $0x1c]]
        %v1020 = vstv %s1019
        %v1021 = vmul.f32 %v1020, %v932
        %v1022 = vmul.f32 %v1020, %v933
        %v1023 = vmul.f32 %v1020, %v934
        %v1024 = vmul.f32 %v1020, %v935
        %v1025 = vmul.f32 %v1020, %v936
        %1031 = vrot.lane.b32.xlu0 %v1021, 32
        %v1032 = vpop.permute.xlu0 %1031
        %1033 = vrot.lane.b32.xlu0 %v1022, 32
        %v1034 = vpop.permute.xlu0 %1033
        %1035 = vrot.lane.b32.xlu0 %v1023, 32
        %v1036 = vpop.permute.xlu0 %1035
        %1037 = vrot.lane.b32.xlu0 %v1024, 32
        %v1038 = vpop.permute.xlu0 %1037
        %1039 = vrot.lane.b32.xlu0 %v1025, 32
        %v1040 = vpop.permute.xlu0 %1039
        %v1041 = vsel %vm572, %v1032, %v1034
        %v1042 = vsel %vm572, %v1034, %v1036
        %v1043 = vsel %vm572, %v1036, %v1038
        %v1044 = vsel %vm572, %v1038, %v1040
        %v1049 = vadd.f32 %v981, %v1041
        %v1050 = vadd.f32 %v982, %v1042
        %v1051 = vadd.f32 %v983, %v1043
        %v1052 = vadd.f32 %v984, %v1044
        %1053 = vrot.lane.b32.xlu0 %v932, 31
        %v1054 = vpop.permute.xlu0 %1053
        %1055 = vrot.lane.b32.xlu0 %v933, 31
        %v1056 = vpop.permute.xlu0 %1055
        %1057 = vrot.lane.b32.xlu0 %v934, 31
        %v1058 = vpop.permute.xlu0 %1057
        %1059 = vrot.lane.b32.xlu0 %v935, 31
        %v1060 = vpop.permute.xlu0 %1059
        %1061 = vrot.lane.b32.xlu0 %v936, 31
        %v1062 = vpop.permute.xlu0 %1061
        %v1063 = vsel %vm637, %v1054, %v1056
        %v1064 = vsel %vm637, %v1056, %v1058
        %v1065 = vsel %vm637, %v1058, %v1060
        %v1066 = vsel %vm637, %v1060, %v1062
        %v1071 = vsel %vm623, %v1063, 0.0
        %v1072 = vsel %vm624, %v1064, 0.0
        %v1073 = vsel %vm625, %v1065, 0.0
        %v1074 = vsel %vm626, %v1066, 0.0
        %s1075 = sld [smem:[#allocation7 + $0xb]]
        %v1076 = vstv %s1075
        %v1077 = vmul.f32 %v1076, %v1071
        %v1078 = vmul.f32 %v1076, %v1072
        %v1079 = vmul.f32 %v1076, %v1073
        %v1080 = vmul.f32 %v1076, %v1074
        %v1081 = vadd.f32 %v1015, %v1077
        %v1082 = vadd.f32 %v1016, %v1078
        %v1083 = vadd.f32 %v1017, %v1079
        %v1084 = vadd.f32 %v1018, %v1080
        %s1085 = sld [smem:[#allocation7 + $0x1d]]
        %v1086 = vstv %s1085
        %v1087 = vmul.f32 %v1086, %v1071
        %v1088 = vmul.f32 %v1086, %v1072
        %v1089 = vmul.f32 %v1086, %v1073
        %v1090 = vmul.f32 %v1086, %v1074
        %v1091 = vadd.f32 %v1049, %v1087
        %v1092 = vadd.f32 %v1050, %v1088
        %v1093 = vadd.f32 %v1051, %v1089
        %v1094 = vadd.f32 %v1052, %v1090
        %1095 = vrot.lane.b32.xlu0 %v932, 1
        %v1096 = vpop.permute.xlu0 %1095
        %1097 = vrot.lane.b32.xlu0 %v933, 1
        %v1098 = vpop.permute.xlu0 %1097
        %1099 = vrot.lane.b32.xlu0 %v934, 1
        %v1100 = vpop.permute.xlu0 %1099
        %1101 = vrot.lane.b32.xlu0 %v935, 1
        %v1102 = vpop.permute.xlu0 %1101
        %1103 = vrot.lane.b32.xlu0 %v936, 1
        %v1104 = vpop.permute.xlu0 %1103
        %v1105 = vsel %vm680, %v1096, %v1098
        %v1106 = vsel %vm680, %v1098, %v1100
        %v1107 = vsel %vm680, %v1100, %v1102
        %v1108 = vsel %vm680, %v1102, %v1104
        %v1113 = vsel %vm498, %v1105, 0.0
        %v1114 = vsel %vm499, %v1106, 0.0
        %v1115 = vsel %vm500, %v1107, 0.0
        %v1116 = vsel %vm501, %v1108, 0.0
        %s1117 = sld [smem:[#allocation7 + $0xc]]
        %v1118 = vstv %s1117
        %v1119 = vmul.f32 %v1118, %v1113
        %v1120 = vmul.f32 %v1118, %v1114
        %v1121 = vmul.f32 %v1118, %v1115
        %v1122 = vmul.f32 %v1118, %v1116
        %v1123 = vadd.f32 %v1081, %v1119
        %v1124 = vadd.f32 %v1082, %v1120
        %v1125 = vadd.f32 %v1083, %v1121
        %v1126 = vadd.f32 %v1084, %v1122
        %s1127 = sld [smem:[#allocation7 + $0x1e]]
        %v1128 = vstv %s1127
        %v1129 = vmul.f32 %v1128, %v1113
        %v1130 = vmul.f32 %v1128, %v1114
        %v1131 = vmul.f32 %v1128, %v1115
        %v1132 = vmul.f32 %v1128, %v1116
        %v1133 = vadd.f32 %v1091, %v1129
        %v1134 = vadd.f32 %v1092, %v1130
        %v1135 = vadd.f32 %v1093, %v1131
        %v1136 = vadd.f32 %v1094, %v1132
        %s1137 = sld [smem:[#allocation7 + $0xd]]
        %v1138 = vstv %s1137
        %v1139 = vmul.f32 %v1138, %v933
        %v1140 = vmul.f32 %v1138, %v934
        %v1141 = vmul.f32 %v1138, %v935
        %v1142 = vmul.f32 %v1138, %v936
        %v1143 = vadd.f32 %v1123, %v1139
        %v1144 = vadd.f32 %v1124, %v1140
        %v1145 = vadd.f32 %v1125, %v1141
        %v1146 = vadd.f32 %v1126, %v1142
        %s1147 = sld [smem:[#allocation7 + $0x1f]]
        %v1148 = vstv %s1147
        %v1149 = vmul.f32 %v1148, %v933
        %v1150 = vmul.f32 %v1148, %v934
        %v1151 = vmul.f32 %v1148, %v935
        %v1152 = vmul.f32 %v1148, %v936
        %v1153 = vadd.f32 %v1133, %v1149
        %v1154 = vadd.f32 %v1134, %v1150
        %v1155 = vadd.f32 %v1135, %v1151
        %v1156 = vadd.f32 %v1136, %v1152
        %1158 = vrot.lane.b32.xlu0 %v933, 127
        %v1159 = vpop.permute.xlu0 %1158
        %1160 = vrot.lane.b32.xlu0 %v934, 127
        %v1161 = vpop.permute.xlu0 %1160
        %1162 = vrot.lane.b32.xlu0 %v935, 127
        %v1163 = vpop.permute.xlu0 %1162
        %1164 = vrot.lane.b32.xlu0 %v936, 127
        %v1165 = vpop.permute.xlu0 %1164
        %1166 = vrot.lane.b32.xlu0 %v937, 127
        %v1167 = vpop.permute.xlu0 %1166
        %v1168 = vsel %vm744, %v1159, %v1161
        %v1169 = vsel %vm744, %v1161, %v1163
        %v1170 = vsel %vm744, %v1163, %v1165
        %v1171 = vsel %vm744, %v1165, %v1167
        %v1176 = vsel %vm623, %v1168, 0.0
        %v1177 = vsel %vm624, %v1169, 0.0
        %v1178 = vsel %vm625, %v1170, 0.0
        %v1179 = vsel %vm626, %v1171, 0.0
        %s1180 = sld [smem:[#allocation7 + $0xe]]
        %v1181 = vstv %s1180
        %v1182 = vmul.f32 %v1181, %v1176
        %v1183 = vmul.f32 %v1181, %v1177
        %v1184 = vmul.f32 %v1181, %v1178
        %v1185 = vmul.f32 %v1181, %v1179
        %v1186 = vadd.f32 %v1143, %v1182
        %v1187 = vadd.f32 %v1144, %v1183
        %v1188 = vadd.f32 %v1145, %v1184
        %v1189 = vadd.f32 %v1146, %v1185
        %s1190 = sld [smem:[#allocation7 + $0x20]]
        %v1191 = vstv %s1190
        %v1192 = vmul.f32 %v1191, %v1176
        %v1193 = vmul.f32 %v1191, %v1177
        %v1194 = vmul.f32 %v1191, %v1178
        %v1195 = vmul.f32 %v1191, %v1179
        %v1196 = vadd.f32 %v1153, %v1192
        %v1197 = vadd.f32 %v1154, %v1193
        %v1198 = vadd.f32 %v1155, %v1194
        %v1199 = vadd.f32 %v1156, %v1195
        %1200 = vrot.lane.b32.xlu0 %v933, 97
        %v1201 = vpop.permute.xlu0 %1200
        %1202 = vrot.lane.b32.xlu0 %v934, 97
        %v1203 = vpop.permute.xlu0 %1202
        %1204 = vrot.lane.b32.xlu0 %v935, 97
        %v1205 = vpop.permute.xlu0 %1204
        %1206 = vrot.lane.b32.xlu0 %v936, 97
        %v1207 = vpop.permute.xlu0 %1206
        %1208 = vrot.lane.b32.xlu0 %v937, 97
        %v1209 = vpop.permute.xlu0 %1208
        %v1210 = vsel %vm787, %v1201, %v1203
        %v1211 = vsel %vm787, %v1203, %v1205
        %v1212 = vsel %vm787, %v1205, %v1207
        %v1213 = vsel %vm787, %v1207, %v1209
        %v1218 = vsel %vm498, %v1210, 0.0
        %v1219 = vsel %vm499, %v1211, 0.0
        %v1220 = vsel %vm500, %v1212, 0.0
        %v1221 = vsel %vm501, %v1213, 0.0
        %s1222 = sld [smem:[#allocation7 + $0xf]]
        %v1223 = vstv %s1222
        %v1224 = vmul.f32 %v1223, %v1218
        %v1225 = vmul.f32 %v1223, %v1219
        %v1226 = vmul.f32 %v1223, %v1220
        %v1227 = vmul.f32 %v1223, %v1221
        %v1228 = vadd.f32 %v1186, %v1224
        %v1229 = vadd.f32 %v1187, %v1225
        %v1230 = vadd.f32 %v1188, %v1226
        %v1231 = vadd.f32 %v1189, %v1227
        %s1232 = sld [smem:[#allocation7 + $0x21]]
        %v1233 = vstv %s1232
        %v1234 = vmul.f32 %v1233, %v1218
        %v1235 = vmul.f32 %v1233, %v1219
        %v1236 = vmul.f32 %v1233, %v1220
        %v1237 = vmul.f32 %v1233, %v1221
        %v1238 = vadd.f32 %v1196, %v1234
        %v1239 = vadd.f32 %v1197, %v1235
        %v1240 = vadd.f32 %v1198, %v1236
        %v1241 = vadd.f32 %v1199, %v1237
        %s1242 = sld [smem:[#allocation7 + $0x10]]
        %v1243 = vstv %s1242
        %v1244 = vmul.f32 %v1243, %v933
        %v1245 = vmul.f32 %v1243, %v934
        %v1246 = vmul.f32 %v1243, %v935
        %v1247 = vmul.f32 %v1243, %v936
        %v1248 = vmul.f32 %v1243, %v937
        %1254 = vrot.lane.b32.xlu0 %v1244, 96
        %v1255 = vpop.permute.xlu0 %1254
        %1256 = vrot.lane.b32.xlu0 %v1245, 96
        %v1257 = vpop.permute.xlu0 %1256
        %1258 = vrot.lane.b32.xlu0 %v1246, 96
        %v1259 = vpop.permute.xlu0 %1258
        %1260 = vrot.lane.b32.xlu0 %v1247, 96
        %v1261 = vpop.permute.xlu0 %1260
        %1262 = vrot.lane.b32.xlu0 %v1248, 96
        %v1263 = vpop.permute.xlu0 %1262
        %v1264 = vsel %vm842, %v1255, %v1257
        %v1265 = vsel %vm842, %v1257, %v1259
        %v1266 = vsel %vm842, %v1259, %v1261
        %v1267 = vsel %vm842, %v1261, %v1263
        %v1272 = vadd.f32 %v1228, %v1264
        %v1273 = vadd.f32 %v1229, %v1265
        %v1274 = vadd.f32 %v1230, %v1266
        %v1275 = vadd.f32 %v1231, %v1267
        %s1276 = sld [smem:[#allocation7 + $0x22]]
        %v1277 = vstv %s1276
        %v1278 = vmul.f32 %v1277, %v933
        %v1279 = vmul.f32 %v1277, %v934
        %v1280 = vmul.f32 %v1277, %v935
        %v1281 = vmul.f32 %v1277, %v936
        %v1282 = vmul.f32 %v1277, %v937
        %1288 = vrot.lane.b32.xlu0 %v1278, 96
        %v1289 = vpop.permute.xlu0 %1288
        %1290 = vrot.lane.b32.xlu0 %v1279, 96
        %v1291 = vpop.permute.xlu0 %1290
        %1292 = vrot.lane.b32.xlu0 %v1280, 96
        %v1293 = vpop.permute.xlu0 %1292
        %1294 = vrot.lane.b32.xlu0 %v1281, 96
        %v1295 = vpop.permute.xlu0 %1294
        %1296 = vrot.lane.b32.xlu0 %v1282, 96
        %v1297 = vpop.permute.xlu0 %1296
        %v1298 = vsel %vm842, %v1289, %v1291
        %v1299 = vsel %vm842, %v1291, %v1293
        %v1300 = vsel %vm842, %v1293, %v1295
        %v1301 = vsel %vm842, %v1295, %v1297
        %v1306 = vadd.f32 %v1238, %v1298
        %v1307 = vadd.f32 %v1239, %v1299
        %v1308 = vadd.f32 %v1240, %v1300
        %v1309 = vadd.f32 %v1241, %v1301
        %1310 = vrot.lane.b32.xlu0 %v933, 95
        %v1311 = vpop.permute.xlu0 %1310
        %1312 = vrot.lane.b32.xlu0 %v934, 95
        %v1313 = vpop.permute.xlu0 %1312
        %1314 = vrot.lane.b32.xlu0 %v935, 95
        %v1315 = vpop.permute.xlu0 %1314
        %1316 = vrot.lane.b32.xlu0 %v936, 95
        %v1317 = vpop.permute.xlu0 %1316
        %1318 = vrot.lane.b32.xlu0 %v937, 95
        %v1319 = vpop.permute.xlu0 %1318
        %v1320 = vsel %vm899, %v1311, %v1313
        %v1321 = vsel %vm899, %v1313, %v1315
        %v1322 = vsel %vm899, %v1315, %v1317
        %v1323 = vsel %vm899, %v1317, %v1319
        %v1328 = vsel %vm623, %v1320, 0.0
        %v1329 = vsel %vm624, %v1321, 0.0
        %v1330 = vsel %vm625, %v1322, 0.0
        %v1331 = vsel %vm626, %v1323, 0.0
        %s1332 = sld [smem:[#allocation7 + $0x11]]
        %v1333 = vstv %s1332
        %v1334 = vmul.f32 %v1333, %v1328
        %v1335 = vmul.f32 %v1333, %v1329
        %v1336 = vmul.f32 %v1333, %v1330
        %v1337 = vmul.f32 %v1333, %v1331
        %v1338 = vadd.f32 %v1272, %v1334
        %v1339 = vadd.f32 %v1273, %v1335
        %v1340 = vadd.f32 %v1274, %v1336
        %v1341 = vadd.f32 %v1275, %v1337
        %s1342 = sld [smem:[#allocation7 + $0x23]]
        %v1343 = vstv %s1342
        %v1344 = vmul.f32 %v1343, %v1328
        %v1345 = vmul.f32 %v1343, %v1329
        %v1346 = vmul.f32 %v1343, %v1330
        %v1347 = vmul.f32 %v1343, %v1331
        %v1348 = vadd.f32 %v1306, %v1344
        %v1349 = vadd.f32 %v1307, %v1345
        %v1350 = vadd.f32 %v1308, %v1346
        %v1351 = vadd.f32 %v1309, %v1347
        %v1352 = vmax.f32 %v1338, 0.0
        %v1353 = vmax.f32 %v1339, 0.0
        %v1354 = vmax.f32 %v1340, 0.0
        %v1355 = vmax.f32 %v1341, 0.0
        %v1356 = vmax.f32 %v1348, 0.0
        %v1357 = vmax.f32 %v1349, 0.0
        %v1358 = vmax.f32 %v1350, 0.0
        %v1359 = vmax.f32 %v1351, 0.0
        %1360 = vst [vmem:[#allocation2 + $0x8] sm:$0xff] %v1352
        %1361 = vst [vmem:[#allocation2 + $0x10] sm:$0xff] %v1353
        %1362 = vst [vmem:[#allocation2 + $0x18] sm:$0xff] %v1354
        %1363 = vst [vmem:[#allocation2 + $0x20] sm:$0xff] %v1355
        %1364 = vst [vmem:[%s477 + $0x8] sm:$0xff] %v1356
        %1365 = vst [vmem:[%s477 + $0x10] sm:$0xff] %v1357
        %1366 = vst [vmem:[%s477 + $0x18] sm:$0xff] %v1358
        %1367 = vst [vmem:[%s477 + $0x20] sm:$0xff] %v1359
        %s1368 = sld [smem:[#allocation11]]
        %v1369 = vstv %s1368
        %v1370 = vadd.f32 %v1369, 0.0
        %s1371 = sld [smem:[#allocation11 + $0x1]]
        %v1372 = vstv %s1371
        %v1373 = vadd.f32 %v1372, 0.0
        %v1374 = vld [vmem:[#allocation2] sm:$0xff]
        %v1375 = vld [vmem:[#allocation2 + $0x8] sm:$0xff]
        %v1376 = vld [vmem:[#allocation2 + $0x10] sm:$0xff]
        %v1377 = vld [vmem:[#allocation2 + $0x18] sm:$0xff]
        %v1378 = vld [vmem:[#allocation2 + $0x20] sm:$0xff]
        %v1379 = vld [vmem:[#allocation2 + $0x28] sm:$0xff]
        %1385 = vrot.lane.b32.xlu0 %v1374, 33
        %v1386 = vpop.permute.xlu0 %1385
        %1387 = vrot.lane.b32.xlu0 %v1375, 33
        %v1388 = vpop.permute.xlu0 %1387
        %1389 = vrot.lane.b32.xlu0 %v1376, 33
        %v1390 = vpop.permute.xlu0 %1389
        %1391 = vrot.lane.b32.xlu0 %v1377, 33
        %v1392 = vpop.permute.xlu0 %1391
        %1393 = vrot.lane.b32.xlu0 %v1378, 33
        %v1394 = vpop.permute.xlu0 %1393
        %v1395 = vsel %vm517, %v1386, %v1388
        %v1396 = vsel %vm517, %v1388, %v1390
        %v1397 = vsel %vm517, %v1390, %v1392
        %v1398 = vsel %vm517, %v1392, %v1394
        %v1403 = vsel %vm498, %v1395, 0.0
        %v1404 = vsel %vm499, %v1396, 0.0
        %v1405 = vsel %vm500, %v1397, 0.0
        %v1406 = vsel %vm501, %v1398, 0.0
        %s1407 = sld [smem:[#allocation10]]
        %v1408 = vstv %s1407
        %v1409 = vmul.f32 %v1408, %v1403
        %v1410 = vmul.f32 %v1408, %v1404
        %v1411 = vmul.f32 %v1408, %v1405
        %v1412 = vmul.f32 %v1408, %v1406
        %v1413 = vadd.f32 %v1370, %v1409
        %v1414 = vadd.f32 %v1370, %v1410
        %v1415 = vadd.f32 %v1370, %v1411
        %v1416 = vadd.f32 %v1370, %v1412
        %s1417 = sld [smem:[#allocation10 + $0x12]]
        %v1418 = vstv %s1417
        %v1419 = vmul.f32 %v1418, %v1403
        %v1420 = vmul.f32 %v1418, %v1404
        %v1421 = vmul.f32 %v1418, %v1405
        %v1422 = vmul.f32 %v1418, %v1406
        %v1423 = vadd.f32 %v1373, %v1419
        %v1424 = vadd.f32 %v1373, %v1420
        %v1425 = vadd.f32 %v1373, %v1421
        %v1426 = vadd.f32 %v1373, %v1422
        %s1427 = sld [smem:[#allocation10 + $0x1]]
        %v1428 = vstv %s1427
        %v1429 = vmul.f32 %v1428, %v1374
        %v1430 = vmul.f32 %v1428, %v1375
        %v1431 = vmul.f32 %v1428, %v1376
        %v1432 = vmul.f32 %v1428, %v1377
        %v1433 = vmul.f32 %v1428, %v1378
        %1439 = vrot.lane.b32.xlu0 %v1429, 32
        %v1440 = vpop.permute.xlu0 %1439
        %1441 = vrot.lane.b32.xlu0 %v1430, 32
        %v1442 = vpop.permute.xlu0 %1441
        %1443 = vrot.lane.b32.xlu0 %v1431, 32
        %v1444 = vpop.permute.xlu0 %1443
        %1445 = vrot.lane.b32.xlu0 %v1432, 32
        %v1446 = vpop.permute.xlu0 %1445
        %1447 = vrot.lane.b32.xlu0 %v1433, 32
        %v1448 = vpop.permute.xlu0 %1447
        %v1449 = vsel %vm572, %v1440, %v1442
        %v1450 = vsel %vm572, %v1442, %v1444
        %v1451 = vsel %vm572, %v1444, %v1446
        %v1452 = vsel %vm572, %v1446, %v1448
        %v1457 = vadd.f32 %v1413, %v1449
        %v1458 = vadd.f32 %v1414, %v1450
        %v1459 = vadd.f32 %v1415, %v1451
        %v1460 = vadd.f32 %v1416, %v1452
        %s1461 = sld [smem:[#allocation10 + $0x13]]
        %v1462 = vstv %s1461
        %v1463 = vmul.f32 %v1462, %v1374
        %v1464 = vmul.f32 %v1462, %v1375
        %v1465 = vmul.f32 %v1462, %v1376
        %v1466 = vmul.f32 %v1462, %v1377
        %v1467 = vmul.f32 %v1462, %v1378
        %1473 = vrot.lane.b32.xlu0 %v1463, 32
        %v1474 = vpop.permute.xlu0 %1473
        %1475 = vrot.lane.b32.xlu0 %v1464, 32
        %v1476 = vpop.permute.xlu0 %1475
        %1477 = vrot.lane.b32.xlu0 %v1465, 32
        %v1478 = vpop.permute.xlu0 %1477
        %1479 = vrot.lane.b32.xlu0 %v1466, 32
        %v1480 = vpop.permute.xlu0 %1479
        %1481 = vrot.lane.b32.xlu0 %v1467, 32
        %v1482 = vpop.permute.xlu0 %1481
        %v1483 = vsel %vm572, %v1474, %v1476
        %v1484 = vsel %vm572, %v1476, %v1478
        %v1485 = vsel %vm572, %v1478, %v1480
        %v1486 = vsel %vm572, %v1480, %v1482
        %v1491 = vadd.f32 %v1423, %v1483
        %v1492 = vadd.f32 %v1424, %v1484
        %v1493 = vadd.f32 %v1425, %v1485
        %v1494 = vadd.f32 %v1426, %v1486
        %1495 = vrot.lane.b32.xlu0 %v1374, 31
        %v1496 = vpop.permute.xlu0 %1495
        %1497 = vrot.lane.b32.xlu0 %v1375, 31
        %v1498 = vpop.permute.xlu0 %1497
        %1499 = vrot.lane.b32.xlu0 %v1376, 31
        %v1500 = vpop.permute.xlu0 %1499
        %1501 = vrot.lane.b32.xlu0 %v1377, 31
        %v1502 = vpop.permute.xlu0 %1501
        %1503 = vrot.lane.b32.xlu0 %v1378, 31
        %v1504 = vpop.permute.xlu0 %1503
        %v1505 = vsel %vm637, %v1496, %v1498
        %v1506 = vsel %vm637, %v1498, %v1500
        %v1507 = vsel %vm637, %v1500, %v1502
        %v1508 = vsel %vm637, %v1502, %v1504
        %v1513 = vsel %vm623, %v1505, 0.0
        %v1514 = vsel %vm624, %v1506, 0.0
        %v1515 = vsel %vm625, %v1507, 0.0
        %v1516 = vsel %vm626, %v1508, 0.0
        %s1517 = sld [smem:[#allocation10 + $0x2]]
        %v1518 = vstv %s1517
        %v1519 = vmul.f32 %v1518, %v1513
        %v1520 = vmul.f32 %v1518, %v1514
        %v1521 = vmul.f32 %v1518, %v1515
        %v1522 = vmul.f32 %v1518, %v1516
        %v1523 = vadd.f32 %v1457, %v1519
        %v1524 = vadd.f32 %v1458, %v1520
        %v1525 = vadd.f32 %v1459, %v1521
        %v1526 = vadd.f32 %v1460, %v1522
        %s1527 = sld [smem:[#allocation10 + $0x14]]
        %v1528 = vstv %s1527
        %v1529 = vmul.f32 %v1528, %v1513
        %v1530 = vmul.f32 %v1528, %v1514
        %v1531 = vmul.f32 %v1528, %v1515
        %v1532 = vmul.f32 %v1528, %v1516
        %v1533 = vadd.f32 %v1491, %v1529
        %v1534 = vadd.f32 %v1492, %v1530
        %v1535 = vadd.f32 %v1493, %v1531
        %v1536 = vadd.f32 %v1494, %v1532
        %1537 = vrot.lane.b32.xlu0 %v1374, 1
        %v1538 = vpop.permute.xlu0 %1537
        %1539 = vrot.lane.b32.xlu0 %v1375, 1
        %v1540 = vpop.permute.xlu0 %1539
        %1541 = vrot.lane.b32.xlu0 %v1376, 1
        %v1542 = vpop.permute.xlu0 %1541
        %1543 = vrot.lane.b32.xlu0 %v1377, 1
        %v1544 = vpop.permute.xlu0 %1543
        %1545 = vrot.lane.b32.xlu0 %v1378, 1
        %v1546 = vpop.permute.xlu0 %1545
        %v1547 = vsel %vm680, %v1538, %v1540
        %v1548 = vsel %vm680, %v1540, %v1542
        %v1549 = vsel %vm680, %v1542, %v1544
        %v1550 = vsel %vm680, %v1544, %v1546
        %v1555 = vsel %vm498, %v1547, 0.0
        %v1556 = vsel %vm499, %v1548, 0.0
        %v1557 = vsel %vm500, %v1549, 0.0
        %v1558 = vsel %vm501, %v1550, 0.0
        %s1559 = sld [smem:[#allocation10 + $0x3]]
        %v1560 = vstv %s1559
        %v1561 = vmul.f32 %v1560, %v1555
        %v1562 = vmul.f32 %v1560, %v1556
        %v1563 = vmul.f32 %v1560, %v1557
        %v1564 = vmul.f32 %v1560, %v1558
        %v1565 = vadd.f32 %v1523, %v1561
        %v1566 = vadd.f32 %v1524, %v1562
        %v1567 = vadd.f32 %v1525, %v1563
        %v1568 = vadd.f32 %v1526, %v1564
        %s1569 = sld [smem:[#allocation10 + $0x15]]
        %v1570 = vstv %s1569
        %v1571 = vmul.f32 %v1570, %v1555
        %v1572 = vmul.f32 %v1570, %v1556
        %v1573 = vmul.f32 %v1570, %v1557
        %v1574 = vmul.f32 %v1570, %v1558
        %v1575 = vadd.f32 %v1533, %v1571
        %v1576 = vadd.f32 %v1534, %v1572
        %v1577 = vadd.f32 %v1535, %v1573
        %v1578 = vadd.f32 %v1536, %v1574
        %s1579 = sld [smem:[#allocation10 + $0x4]]
        %v1580 = vstv %s1579
        %v1581 = vmul.f32 %v1580, %v1375
        %v1582 = vmul.f32 %v1580, %v1376
        %v1583 = vmul.f32 %v1580, %v1377
        %v1584 = vmul.f32 %v1580, %v1378
        %v1585 = vadd.f32 %v1565, %v1581
        %v1586 = vadd.f32 %v1566, %v1582
        %v1587 = vadd.f32 %v1567, %v1583
        %v1588 = vadd.f32 %v1568, %v1584
        %s1589 = sld [smem:[#allocation10 + $0x16]]
        %v1590 = vstv %s1589
        %v1591 = vmul.f32 %v1590, %v1375
        %v1592 = vmul.f32 %v1590, %v1376
        %v1593 = vmul.f32 %v1590, %v1377
        %v1594 = vmul.f32 %v1590, %v1378
        %v1595 = vadd.f32 %v1575, %v1591
        %v1596 = vadd.f32 %v1576, %v1592
        %v1597 = vadd.f32 %v1577, %v1593
        %v1598 = vadd.f32 %v1578, %v1594
        %1600 = vrot.lane.b32.xlu0 %v1375, 127
        %v1601 = vpop.permute.xlu0 %1600
        %1602 = vrot.lane.b32.xlu0 %v1376, 127
        %v1603 = vpop.permute.xlu0 %1602
        %1604 = vrot.lane.b32.xlu0 %v1377, 127
        %v1605 = vpop.permute.xlu0 %1604
        %1606 = vrot.lane.b32.xlu0 %v1378, 127
        %v1607 = vpop.permute.xlu0 %1606
        %1608 = vrot.lane.b32.xlu0 %v1379, 127
        %v1609 = vpop.permute.xlu0 %1608
        %v1610 = vsel %vm744, %v1601, %v1603
        %v1611 = vsel %vm744, %v1603, %v1605
        %v1612 = vsel %vm744, %v1605, %v1607
        %v1613 = vsel %vm744, %v1607, %v1609
        %v1618 = vsel %vm623, %v1610, 0.0
        %v1619 = vsel %vm624, %v1611, 0.0
        %v1620 = vsel %vm625, %v1612, 0.0
        %v1621 = vsel %vm626, %v1613, 0.0
        %s1622 = sld [smem:[#allocation10 + $0x5]]
        %v1623 = vstv %s1622
        %v1624 = vmul.f32 %v1623, %v1618
        %v1625 = vmul.f32 %v1623, %v1619
        %v1626 = vmul.f32 %v1623, %v1620
        %v1627 = vmul.f32 %v1623, %v1621
        %v1628 = vadd.f32 %v1585, %v1624
        %v1629 = vadd.f32 %v1586, %v1625
        %v1630 = vadd.f32 %v1587, %v1626
        %v1631 = vadd.f32 %v1588, %v1627
        %s1632 = sld [smem:[#allocation10 + $0x17]]
        %v1633 = vstv %s1632
        %v1634 = vmul.f32 %v1633, %v1618
        %v1635 = vmul.f32 %v1633, %v1619
        %v1636 = vmul.f32 %v1633, %v1620
        %v1637 = vmul.f32 %v1633, %v1621
        %v1638 = vadd.f32 %v1595, %v1634
        %v1639 = vadd.f32 %v1596, %v1635
        %v1640 = vadd.f32 %v1597, %v1636
        %v1641 = vadd.f32 %v1598, %v1637
        %1642 = vrot.lane.b32.xlu0 %v1375, 97
        %v1643 = vpop.permute.xlu0 %1642
        %1644 = vrot.lane.b32.xlu0 %v1376, 97
        %v1645 = vpop.permute.xlu0 %1644
        %1646 = vrot.lane.b32.xlu0 %v1377, 97
        %v1647 = vpop.permute.xlu0 %1646
        %1648 = vrot.lane.b32.xlu0 %v1378, 97
        %v1649 = vpop.permute.xlu0 %1648
        %1650 = vrot.lane.b32.xlu0 %v1379, 97
        %v1651 = vpop.permute.xlu0 %1650
        %v1652 = vsel %vm787, %v1643, %v1645
        %v1653 = vsel %vm787, %v1645, %v1647
        %v1654 = vsel %vm787, %v1647, %v1649
        %v1655 = vsel %vm787, %v1649, %v1651
        %v1660 = vsel %vm498, %v1652, 0.0
        %v1661 = vsel %vm499, %v1653, 0.0
        %v1662 = vsel %vm500, %v1654, 0.0
        %v1663 = vsel %vm501, %v1655, 0.0
        %s1664 = sld [smem:[#allocation10 + $0x6]]
        %v1665 = vstv %s1664
        %v1666 = vmul.f32 %v1665, %v1660
        %v1667 = vmul.f32 %v1665, %v1661
        %v1668 = vmul.f32 %v1665, %v1662
        %v1669 = vmul.f32 %v1665, %v1663
        %v1670 = vadd.f32 %v1628, %v1666
        %v1671 = vadd.f32 %v1629, %v1667
        %v1672 = vadd.f32 %v1630, %v1668
        %v1673 = vadd.f32 %v1631, %v1669
        %s1674 = sld [smem:[#allocation10 + $0x18]]
        %v1675 = vstv %s1674
        %v1676 = vmul.f32 %v1675, %v1660
        %v1677 = vmul.f32 %v1675, %v1661
        %v1678 = vmul.f32 %v1675, %v1662
        %v1679 = vmul.f32 %v1675, %v1663
        %v1680 = vadd.f32 %v1638, %v1676
        %v1681 = vadd.f32 %v1639, %v1677
        %v1682 = vadd.f32 %v1640, %v1678
        %v1683 = vadd.f32 %v1641, %v1679
        %s1684 = sld [smem:[#allocation10 + $0x7]]
        %v1685 = vstv %s1684
        %v1686 = vmul.f32 %v1685, %v1375
        %v1687 = vmul.f32 %v1685, %v1376
        %v1688 = vmul.f32 %v1685, %v1377
        %v1689 = vmul.f32 %v1685, %v1378
        %v1690 = vmul.f32 %v1685, %v1379
        %1696 = vrot.lane.b32.xlu0 %v1686, 96
        %v1697 = vpop.permute.xlu0 %1696
        %1698 = vrot.lane.b32.xlu0 %v1687, 96
        %v1699 = vpop.permute.xlu0 %1698
        %1700 = vrot.lane.b32.xlu0 %v1688, 96
        %v1701 = vpop.permute.xlu0 %1700
        %1702 = vrot.lane.b32.xlu0 %v1689, 96
        %v1703 = vpop.permute.xlu0 %1702
        %1704 = vrot.lane.b32.xlu0 %v1690, 96
        %v1705 = vpop.permute.xlu0 %1704
        %v1706 = vsel %vm842, %v1697, %v1699
        %v1707 = vsel %vm842, %v1699, %v1701
        %v1708 = vsel %vm842, %v1701, %v1703
        %v1709 = vsel %vm842, %v1703, %v1705
        %v1714 = vadd.f32 %v1670, %v1706
        %v1715 = vadd.f32 %v1671, %v1707
        %v1716 = vadd.f32 %v1672, %v1708
        %v1717 = vadd.f32 %v1673, %v1709
        %s1718 = sld [smem:[#allocation10 + $0x19]]
        %v1719 = vstv %s1718
        %v1720 = vmul.f32 %v1719, %v1375
        %v1721 = vmul.f32 %v1719, %v1376
        %v1722 = vmul.f32 %v1719, %v1377
        %v1723 = vmul.f32 %v1719, %v1378
        %v1724 = vmul.f32 %v1719, %v1379
        %1730 = vrot.lane.b32.xlu0 %v1720, 96
        %v1731 = vpop.permute.xlu0 %1730
        %1732 = vrot.lane.b32.xlu0 %v1721, 96
        %v1733 = vpop.permute.xlu0 %1732
        %1734 = vrot.lane.b32.xlu0 %v1722, 96
        %v1735 = vpop.permute.xlu0 %1734
        %1736 = vrot.lane.b32.xlu0 %v1723, 96
        %v1737 = vpop.permute.xlu0 %1736
        %1738 = vrot.lane.b32.xlu0 %v1724, 96
        %v1739 = vpop.permute.xlu0 %1738
        %v1740 = vsel %vm842, %v1731, %v1733
        %v1741 = vsel %vm842, %v1733, %v1735
        %v1742 = vsel %vm842, %v1735, %v1737
        %v1743 = vsel %vm842, %v1737, %v1739
        %v1748 = vadd.f32 %v1680, %v1740
        %v1749 = vadd.f32 %v1681, %v1741
        %v1750 = vadd.f32 %v1682, %v1742
        %v1751 = vadd.f32 %v1683, %v1743
        %1752 = vrot.lane.b32.xlu0 %v1375, 95
        %v1753 = vpop.permute.xlu0 %1752
        %1754 = vrot.lane.b32.xlu0 %v1376, 95
        %v1755 = vpop.permute.xlu0 %1754
        %1756 = vrot.lane.b32.xlu0 %v1377, 95
        %v1757 = vpop.permute.xlu0 %1756
        %1758 = vrot.lane.b32.xlu0 %v1378, 95
        %v1759 = vpop.permute.xlu0 %1758
        %1760 = vrot.lane.b32.xlu0 %v1379, 95
        %v1761 = vpop.permute.xlu0 %1760
        %v1762 = vsel %vm899, %v1753, %v1755
        %v1763 = vsel %vm899, %v1755, %v1757
        %v1764 = vsel %vm899, %v1757, %v1759
        %v1765 = vsel %vm899, %v1759, %v1761
        %v1770 = vsel %vm623, %v1762, 0.0
        %v1771 = vsel %vm624, %v1763, 0.0
        %v1772 = vsel %vm625, %v1764, 0.0
        %v1773 = vsel %vm626, %v1765, 0.0
        %s1774 = sld [smem:[#allocation10 + $0x8]]
        %v1775 = vstv %s1774
        %v1776 = vmul.f32 %v1775, %v1770
        %v1777 = vmul.f32 %v1775, %v1771
        %v1778 = vmul.f32 %v1775, %v1772
        %v1779 = vmul.f32 %v1775, %v1773
        %v1780 = vadd.f32 %v1714, %v1776
        %v1781 = vadd.f32 %v1715, %v1777
        %v1782 = vadd.f32 %v1716, %v1778
        %v1783 = vadd.f32 %v1717, %v1779
        %s1784 = sld [smem:[#allocation10 + $0x1a]]
        %v1785 = vstv %s1784
        %v1786 = vmul.f32 %v1785, %v1770
        %v1787 = vmul.f32 %v1785, %v1771
        %v1788 = vmul.f32 %v1785, %v1772
        %v1789 = vmul.f32 %v1785, %v1773
        %v1790 = vadd.f32 %v1748, %v1786
        %v1791 = vadd.f32 %v1749, %v1787
        %v1792 = vadd.f32 %v1750, %v1788
        %v1793 = vadd.f32 %v1751, %v1789
        %v1794 = vld [vmem:[%s477] sm:$0xff]
        %v1795 = vld [vmem:[%s477 + $0x8] sm:$0xff]
        %v1796 = vld [vmem:[%s477 + $0x10] sm:$0xff]
        %v1797 = vld [vmem:[%s477 + $0x18] sm:$0xff]
        %v1798 = vld [vmem:[%s477 + $0x20] sm:$0xff]
        %v1799 = vld [vmem:[%s477 + $0x28] sm:$0xff]
        %1805 = vrot.lane.b32.xlu0 %v1794, 33
        %v1806 = vpop.permute.xlu0 %1805
        %1807 = vrot.lane.b32.xlu0 %v1795, 33
        %v1808 = vpop.permute.xlu0 %1807
        %1809 = vrot.lane.b32.xlu0 %v1796, 33
        %v1810 = vpop.permute.xlu0 %1809
        %1811 = vrot.lane.b32.xlu0 %v1797, 33
        %v1812 = vpop.permute.xlu0 %1811
        %1813 = vrot.lane.b32.xlu0 %v1798, 33
        %v1814 = vpop.permute.xlu0 %1813
        %v1815 = vsel %vm517, %v1806, %v1808
        %v1816 = vsel %vm517, %v1808, %v1810
        %v1817 = vsel %vm517, %v1810, %v1812
        %v1818 = vsel %vm517, %v1812, %v1814
        %v1823 = vsel %vm498, %v1815, 0.0
        %v1824 = vsel %vm499, %v1816, 0.0
        %v1825 = vsel %vm500, %v1817, 0.0
        %v1826 = vsel %vm501, %v1818, 0.0
        %s1827 = sld [smem:[#allocation10 + $0x9]]
        %v1828 = vstv %s1827
        %v1829 = vmul.f32 %v1828, %v1823
        %v1830 = vmul.f32 %v1828, %v1824
        %v1831 = vmul.f32 %v1828, %v1825
        %v1832 = vmul.f32 %v1828, %v1826
        %v1833 = vadd.f32 %v1780, %v1829
        %v1834 = vadd.f32 %v1781, %v1830
        %v1835 = vadd.f32 %v1782, %v1831
        %v1836 = vadd.f32 %v1783, %v1832
        %s1837 = sld [smem:[#allocation10 + $0x1b]]
        %v1838 = vstv %s1837
        %v1839 = vmul.f32 %v1838, %v1823
        %v1840 = vmul.f32 %v1838, %v1824
        %v1841 = vmul.f32 %v1838, %v1825
        %v1842 = vmul.f32 %v1838, %v1826
        %v1843 = vadd.f32 %v1790, %v1839
        %v1844 = vadd.f32 %v1791, %v1840
        %v1845 = vadd.f32 %v1792, %v1841
        %v1846 = vadd.f32 %v1793, %v1842
        %s1847 = sld [smem:[#allocation10 + $0xa]]
        %v1848 = vstv %s1847
        %v1849 = vmul.f32 %v1848, %v1794
        %v1850 = vmul.f32 %v1848, %v1795
        %v1851 = vmul.f32 %v1848, %v1796
        %v1852 = vmul.f32 %v1848, %v1797
        %v1853 = vmul.f32 %v1848, %v1798
        %1859 = vrot.lane.b32.xlu0 %v1849, 32
        %v1860 = vpop.permute.xlu0 %1859
        %1861 = vrot.lane.b32.xlu0 %v1850, 32
        %v1862 = vpop.permute.xlu0 %1861
        %1863 = vrot.lane.b32.xlu0 %v1851, 32
        %v1864 = vpop.permute.xlu0 %1863
        %1865 = vrot.lane.b32.xlu0 %v1852, 32
        %v1866 = vpop.permute.xlu0 %1865
        %1867 = vrot.lane.b32.xlu0 %v1853, 32
        %v1868 = vpop.permute.xlu0 %1867
        %v1869 = vsel %vm572, %v1860, %v1862
        %v1870 = vsel %vm572, %v1862, %v1864
        %v1871 = vsel %vm572, %v1864, %v1866
        %v1872 = vsel %vm572, %v1866, %v1868
        %v1877 = vadd.f32 %v1833, %v1869
        %v1878 = vadd.f32 %v1834, %v1870
        %v1879 = vadd.f32 %v1835, %v1871
        %v1880 = vadd.f32 %v1836, %v1872
        %s1881 = sld [smem:[#allocation10 + $0x1c]]
        %v1882 = vstv %s1881
        %v1883 = vmul.f32 %v1882, %v1794
        %v1884 = vmul.f32 %v1882, %v1795
        %v1885 = vmul.f32 %v1882, %v1796
        %v1886 = vmul.f32 %v1882, %v1797
        %v1887 = vmul.f32 %v1882, %v1798
        %1893 = vrot.lane.b32.xlu0 %v1883, 32
        %v1894 = vpop.permute.xlu0 %1893
        %1895 = vrot.lane.b32.xlu0 %v1884, 32
        %v1896 = vpop.permute.xlu0 %1895
        %1897 = vrot.lane.b32.xlu0 %v1885, 32
        %v1898 = vpop.permute.xlu0 %1897
        %1899 = vrot.lane.b32.xlu0 %v1886, 32
        %v1900 = vpop.permute.xlu0 %1899
        %1901 = vrot.lane.b32.xlu0 %v1887, 32
        %v1902 = vpop.permute.xlu0 %1901
        %v1903 = vsel %vm572, %v1894, %v1896
        %v1904 = vsel %vm572, %v1896, %v1898
        %v1905 = vsel %vm572, %v1898, %v1900
        %v1906 = vsel %vm572, %v1900, %v1902
        %v1911 = vadd.f32 %v1843, %v1903
        %v1912 = vadd.f32 %v1844, %v1904
        %v1913 = vadd.f32 %v1845, %v1905
        %v1914 = vadd.f32 %v1846, %v1906
        %1915 = vrot.lane.b32.xlu0 %v1794, 31
        %v1916 = vpop.permute.xlu0 %1915
        %1917 = vrot.lane.b32.xlu0 %v1795, 31
        %v1918 = vpop.permute.xlu0 %1917
        %1919 = vrot.lane.b32.xlu0 %v1796, 31
        %v1920 = vpop.permute.xlu0 %1919
        %1921 = vrot.lane.b32.xlu0 %v1797, 31
        %v1922 = vpop.permute.xlu0 %1921
        %1923 = vrot.lane.b32.xlu0 %v1798, 31
        %v1924 = vpop.permute.xlu0 %1923
        %v1925 = vsel %vm637, %v1916, %v1918
        %v1926 = vsel %vm637, %v1918, %v1920
        %v1927 = vsel %vm637, %v1920, %v1922
        %v1928 = vsel %vm637, %v1922, %v1924
        %v1933 = vsel %vm623, %v1925, 0.0
        %v1934 = vsel %vm624, %v1926, 0.0
        %v1935 = vsel %vm625, %v1927, 0.0
        %v1936 = vsel %vm626, %v1928, 0.0
        %s1937 = sld [smem:[#allocation10 + $0xb]]
        %v1938 = vstv %s1937
        %v1939 = vmul.f32 %v1938, %v1933
        %v1940 = vmul.f32 %v1938, %v1934
        %v1941 = vmul.f32 %v1938, %v1935
        %v1942 = vmul.f32 %v1938, %v1936
        %v1943 = vadd.f32 %v1877, %v1939
        %v1944 = vadd.f32 %v1878, %v1940
        %v1945 = vadd.f32 %v1879, %v1941
        %v1946 = vadd.f32 %v1880, %v1942
        %s1947 = sld [smem:[#allocation10 + $0x1d]]
        %v1948 = vstv %s1947
        %v1949 = vmul.f32 %v1948, %v1933
        %v1950 = vmul.f32 %v1948, %v1934
        %v1951 = vmul.f32 %v1948, %v1935
        %v1952 = vmul.f32 %v1948, %v1936
        %v1953 = vadd.f32 %v1911, %v1949
        %v1954 = vadd.f32 %v1912, %v1950
        %v1955 = vadd.f32 %v1913, %v1951
        %v1956 = vadd.f32 %v1914, %v1952
        %1957 = vrot.lane.b32.xlu0 %v1794, 1
        %v1958 = vpop.permute.xlu0 %1957
        %1959 = vrot.lane.b32.xlu0 %v1795, 1
        %v1960 = vpop.permute.xlu0 %1959
        %1961 = vrot.lane.b32.xlu0 %v1796, 1
        %v1962 = vpop.permute.xlu0 %1961
        %1963 = vrot.lane.b32.xlu0 %v1797, 1
        %v1964 = vpop.permute.xlu0 %1963
        %1965 = vrot.lane.b32.xlu0 %v1798, 1
        %v1966 = vpop.permute.xlu0 %1965
        %v1967 = vsel %vm680, %v1958, %v1960
        %v1968 = vsel %vm680, %v1960, %v1962
        %v1969 = vsel %vm680, %v1962, %v1964
        %v1970 = vsel %vm680, %v1964, %v1966
        %v1975 = vsel %vm498, %v1967, 0.0
        %v1976 = vsel %vm499, %v1968, 0.0
        %v1977 = vsel %vm500, %v1969, 0.0
        %v1978 = vsel %vm501, %v1970, 0.0
        %s1979 = sld [smem:[#allocation10 + $0xc]]
        %v1980 = vstv %s1979
        %v1981 = vmul.f32 %v1980, %v1975
        %v1982 = vmul.f32 %v1980, %v1976
        %v1983 = vmul.f32 %v1980, %v1977
        %v1984 = vmul.f32 %v1980, %v1978
        %v1985 = vadd.f32 %v1943, %v1981
        %v1986 = vadd.f32 %v1944, %v1982
        %v1987 = vadd.f32 %v1945, %v1983
        %v1988 = vadd.f32 %v1946, %v1984
        %s1989 = sld [smem:[#allocation10 + $0x1e]]
        %v1990 = vstv %s1989
        %v1991 = vmul.f32 %v1990, %v1975
        %v1992 = vmul.f32 %v1990, %v1976
        %v1993 = vmul.f32 %v1990, %v1977
        %v1994 = vmul.f32 %v1990, %v1978
        %v1995 = vadd.f32 %v1953, %v1991
        %v1996 = vadd.f32 %v1954, %v1992
        %v1997 = vadd.f32 %v1955, %v1993
        %v1998 = vadd.f32 %v1956, %v1994
        %s1999 = sld [smem:[#allocation10 + $0xd]]
        %v2000 = vstv %s1999
        %v2001 = vmul.f32 %v2000, %v1795
        %v2002 = vmul.f32 %v2000, %v1796
        %v2003 = vmul.f32 %v2000, %v1797
        %v2004 = vmul.f32 %v2000, %v1798
        %v2005 = vadd.f32 %v1985, %v2001
        %v2006 = vadd.f32 %v1986, %v2002
        %v2007 = vadd.f32 %v1987, %v2003
        %v2008 = vadd.f32 %v1988, %v2004
        %s2009 = sld [smem:[#allocation10 + $0x1f]]
        %v2010 = vstv %s2009
        %v2011 = vmul.f32 %v2010, %v1795
        %v2012 = vmul.f32 %v2010, %v1796
        %v2013 = vmul.f32 %v2010, %v1797
        %v2014 = vmul.f32 %v2010, %v1798
        %v2015 = vadd.f32 %v1995, %v2011
        %v2016 = vadd.f32 %v1996, %v2012
        %v2017 = vadd.f32 %v1997, %v2013
        %v2018 = vadd.f32 %v1998, %v2014
        %2020 = vrot.lane.b32.xlu0 %v1795, 127
        %v2021 = vpop.permute.xlu0 %2020
        %2022 = vrot.lane.b32.xlu0 %v1796, 127
        %v2023 = vpop.permute.xlu0 %2022
        %2024 = vrot.lane.b32.xlu0 %v1797, 127
        %v2025 = vpop.permute.xlu0 %2024
        %2026 = vrot.lane.b32.xlu0 %v1798, 127
        %v2027 = vpop.permute.xlu0 %2026
        %2028 = vrot.lane.b32.xlu0 %v1799, 127
        %v2029 = vpop.permute.xlu0 %2028
        %v2030 = vsel %vm744, %v2021, %v2023
        %v2031 = vsel %vm744, %v2023, %v2025
        %v2032 = vsel %vm744, %v2025, %v2027
        %v2033 = vsel %vm744, %v2027, %v2029
        %v2038 = vsel %vm623, %v2030, 0.0
        %v2039 = vsel %vm624, %v2031, 0.0
        %v2040 = vsel %vm625, %v2032, 0.0
        %v2041 = vsel %vm626, %v2033, 0.0
        %s2042 = sld [smem:[#allocation10 + $0xe]]
        %v2043 = vstv %s2042
        %v2044 = vmul.f32 %v2043, %v2038
        %v2045 = vmul.f32 %v2043, %v2039
        %v2046 = vmul.f32 %v2043, %v2040
        %v2047 = vmul.f32 %v2043, %v2041
        %v2048 = vadd.f32 %v2005, %v2044
        %v2049 = vadd.f32 %v2006, %v2045
        %v2050 = vadd.f32 %v2007, %v2046
        %v2051 = vadd.f32 %v2008, %v2047
        %s2052 = sld [smem:[#allocation10 + $0x20]]
        %v2053 = vstv %s2052
        %v2054 = vmul.f32 %v2053, %v2038
        %v2055 = vmul.f32 %v2053, %v2039
        %v2056 = vmul.f32 %v2053, %v2040
        %v2057 = vmul.f32 %v2053, %v2041
        %v2058 = vadd.f32 %v2015, %v2054
        %v2059 = vadd.f32 %v2016, %v2055
        %v2060 = vadd.f32 %v2017, %v2056
        %v2061 = vadd.f32 %v2018, %v2057
        %2062 = vrot.lane.b32.xlu0 %v1795, 97
        %v2063 = vpop.permute.xlu0 %2062
        %2064 = vrot.lane.b32.xlu0 %v1796, 97
        %v2065 = vpop.permute.xlu0 %2064
        %2066 = vrot.lane.b32.xlu0 %v1797, 97
        %v2067 = vpop.permute.xlu0 %2066
        %2068 = vrot.lane.b32.xlu0 %v1798, 97
        %v2069 = vpop.permute.xlu0 %2068
        %2070 = vrot.lane.b32.xlu0 %v1799, 97
        %v2071 = vpop.permute.xlu0 %2070
        %v2072 = vsel %vm787, %v2063, %v2065
        %v2073 = vsel %vm787, %v2065, %v2067
        %v2074 = vsel %vm787, %v2067, %v2069
        %v2075 = vsel %vm787, %v2069, %v2071
        %v2080 = vsel %vm498, %v2072, 0.0
        %v2081 = vsel %vm499, %v2073, 0.0
        %v2082 = vsel %vm500, %v2074, 0.0
        %v2083 = vsel %vm501, %v2075, 0.0
        %s2084 = sld [smem:[#allocation10 + $0xf]]
        %v2085 = vstv %s2084
        %v2086 = vmul.f32 %v2085, %v2080
        %v2087 = vmul.f32 %v2085, %v2081
        %v2088 = vmul.f32 %v2085, %v2082
        %v2089 = vmul.f32 %v2085, %v2083
        %v2090 = vadd.f32 %v2048, %v2086
        %v2091 = vadd.f32 %v2049, %v2087
        %v2092 = vadd.f32 %v2050, %v2088
        %v2093 = vadd.f32 %v2051, %v2089
        %s2094 = sld [smem:[#allocation10 + $0x21]]
        %v2095 = vstv %s2094
        %v2096 = vmul.f32 %v2095, %v2080
        %v2097 = vmul.f32 %v2095, %v2081
        %v2098 = vmul.f32 %v2095, %v2082
        %v2099 = vmul.f32 %v2095, %v2083
        %v2100 = vadd.f32 %v2058, %v2096
        %v2101 = vadd.f32 %v2059, %v2097
        %v2102 = vadd.f32 %v2060, %v2098
        %v2103 = vadd.f32 %v2061, %v2099
        %s2104 = sld [smem:[#allocation10 + $0x10]]
        %v2105 = vstv %s2104
        %v2106 = vmul.f32 %v2105, %v1795
        %v2107 = vmul.f32 %v2105, %v1796
        %v2108 = vmul.f32 %v2105, %v1797
        %v2109 = vmul.f32 %v2105, %v1798
        %v2110 = vmul.f32 %v2105, %v1799
        %2116 = vrot.lane.b32.xlu0 %v2106, 96
        %v2117 = vpop.permute.xlu0 %2116
        %2118 = vrot.lane.b32.xlu0 %v2107, 96
        %v2119 = vpop.permute.xlu0 %2118
        %2120 = vrot.lane.b32.xlu0 %v2108, 96
        %v2121 = vpop.permute.xlu0 %2120
        %2122 = vrot.lane.b32.xlu0 %v2109, 96
        %v2123 = vpop.permute.xlu0 %2122
        %2124 = vrot.lane.b32.xlu0 %v2110, 96
        %v2125 = vpop.permute.xlu0 %2124
        %v2126 = vsel %vm842, %v2117, %v2119
        %v2127 = vsel %vm842, %v2119, %v2121
        %v2128 = vsel %vm842, %v2121, %v2123
        %v2129 = vsel %vm842, %v2123, %v2125
        %v2134 = vadd.f32 %v2090, %v2126
        %v2135 = vadd.f32 %v2091, %v2127
        %v2136 = vadd.f32 %v2092, %v2128
        %v2137 = vadd.f32 %v2093, %v2129
        %s2138 = sld [smem:[#allocation10 + $0x22]]
        %v2139 = vstv %s2138
        %v2140 = vmul.f32 %v2139, %v1795
        %v2141 = vmul.f32 %v2139, %v1796
        %v2142 = vmul.f32 %v2139, %v1797
        %v2143 = vmul.f32 %v2139, %v1798
        %v2144 = vmul.f32 %v2139, %v1799
        %2150 = vrot.lane.b32.xlu0 %v2140, 96
        %v2151 = vpop.permute.xlu0 %2150
        %2152 = vrot.lane.b32.xlu0 %v2141, 96
        %v2153 = vpop.permute.xlu0 %2152
        %2154 = vrot.lane.b32.xlu0 %v2142, 96
        %v2155 = vpop.permute.xlu0 %2154
        %2156 = vrot.lane.b32.xlu0 %v2143, 96
        %v2157 = vpop.permute.xlu0 %2156
        %2158 = vrot.lane.b32.xlu0 %v2144, 96
        %v2159 = vpop.permute.xlu0 %2158
        %v2160 = vsel %vm842, %v2151, %v2153
        %v2161 = vsel %vm842, %v2153, %v2155
        %v2162 = vsel %vm842, %v2155, %v2157
        %v2163 = vsel %vm842, %v2157, %v2159
        %v2168 = vadd.f32 %v2100, %v2160
        %v2169 = vadd.f32 %v2101, %v2161
        %v2170 = vadd.f32 %v2102, %v2162
        %v2171 = vadd.f32 %v2103, %v2163
        %2172 = vrot.lane.b32.xlu0 %v1795, 95
        %v2173 = vpop.permute.xlu0 %2172
        %2174 = vrot.lane.b32.xlu0 %v1796, 95
        %v2175 = vpop.permute.xlu0 %2174
        %2176 = vrot.lane.b32.xlu0 %v1797, 95
        %v2177 = vpop.permute.xlu0 %2176
        %2178 = vrot.lane.b32.xlu0 %v1798, 95
        %v2179 = vpop.permute.xlu0 %2178
        %2180 = vrot.lane.b32.xlu0 %v1799, 95
        %v2181 = vpop.permute.xlu0 %2180
        %v2182 = vsel %vm899, %v2173, %v2175
        %v2183 = vsel %vm899, %v2175, %v2177
        %v2184 = vsel %vm899, %v2177, %v2179
        %v2185 = vsel %vm899, %v2179, %v2181
        %v2190 = vsel %vm623, %v2182, 0.0
        %v2191 = vsel %vm624, %v2183, 0.0
        %v2192 = vsel %vm625, %v2184, 0.0
        %v2193 = vsel %vm626, %v2185, 0.0
        %s2194 = sld [smem:[#allocation10 + $0x11]]
        %v2195 = vstv %s2194
        %v2196 = vmul.f32 %v2195, %v2190
        %v2197 = vmul.f32 %v2195, %v2191
        %v2198 = vmul.f32 %v2195, %v2192
        %v2199 = vmul.f32 %v2195, %v2193
        %v2200 = vadd.f32 %v2134, %v2196
        %v2201 = vadd.f32 %v2135, %v2197
        %v2202 = vadd.f32 %v2136, %v2198
        %v2203 = vadd.f32 %v2137, %v2199
        %s2204 = sld [smem:[#allocation10 + $0x23]]
        %v2205 = vstv %s2204
        %v2206 = vmul.f32 %v2205, %v2190
        %v2207 = vmul.f32 %v2205, %v2191
        %v2208 = vmul.f32 %v2205, %v2192
        %v2209 = vmul.f32 %v2205, %v2193
        %v2210 = vadd.f32 %v2168, %v2206
        %v2211 = vadd.f32 %v2169, %v2207
        %v2212 = vadd.f32 %v2170, %v2208
        %v2213 = vadd.f32 %v2171, %v2209
        %v2214 = vmax.f32 %v2200, 0.0
        %v2215 = vmax.f32 %v2201, 0.0
        %v2216 = vmax.f32 %v2202, 0.0
        %v2217 = vmax.f32 %v2203, 0.0
        %v2218 = vmax.f32 %v2210, 0.0
        %v2219 = vmax.f32 %v2211, 0.0
        %v2220 = vmax.f32 %v2212, 0.0
        %v2221 = vmax.f32 %v2213, 0.0
        %v2222 = vld [vmem:[#allocation13] sm:$0xff]
        %v2223 = vld [vmem:[#allocation13 + $0x8] sm:$0xff]
        %v2224 = vld [vmem:[#allocation13 + $0x10] sm:$0xff]
        %v2225 = vld [vmem:[#allocation13 + $0x18] sm:$0xff]
        %v2226 = vld [vmem:[#allocation13 + $0x20] sm:$0xff]
        %v2227 = vld [vmem:[#allocation13 + $0x28] sm:$0xff]
        %v2228 = vld [vmem:[#allocation13 + $0x30] sm:$0xff]
        %v2229 = vld [vmem:[#allocation13 + $0x38] sm:$0xff]
        %v2230 = vld [vmem:[#allocation13 + $0x40] sm:$0xff]
        %v2231 = vld [vmem:[#allocation13 + $0x48] sm:$0xff]
        %v2232 = vld [vmem:[#allocation13 + $0x50] sm:$0xff]
        %v2233 = vld [vmem:[#allocation13 + $0x58] sm:$0xff]
        %v2234 = vld [vmem:[#allocation13 + $0x60] sm:$0xff]
        %v2235 = vld [vmem:[#allocation13 + $0x68] sm:$0xff]
        %v2236 = vld [vmem:[#allocation13 + $0x70] sm:$0xff]
        %v2237 = vld [vmem:[#allocation13 + $0x78] sm:$0xff]
        %v2238 = vld [vmem:[#allocation13 + $0x80] sm:$0xff]
        %v2239 = vld [vmem:[#allocation13 + $0x88] sm:$0xff]
        %v2240 = vld [vmem:[#allocation13 + $0x90] sm:$0xff]
        %v2241 = vld [vmem:[#allocation13 + $0x98] sm:$0xff]
        %v2242 = vld [vmem:[#allocation13 + $0xa0] sm:$0xff]
        %v2243 = vld [vmem:[#allocation13 + $0xa8] sm:$0xff]
        %v2244 = vld [vmem:[#allocation13 + $0xb0] sm:$0xff]
        %v2245 = vld [vmem:[#allocation13 + $0xb8] sm:$0xff]
        %v2246 = vld [vmem:[#allocation13 + $0xc0] sm:$0xff]
        %v2247 = vld [vmem:[#allocation13 + $0xc8] sm:$0xff]
        %v2248 = vld [vmem:[#allocation13 + $0xd0] sm:$0xff]
        %v2249 = vld [vmem:[#allocation13 + $0xd8] sm:$0xff]
        %v2250 = vld [vmem:[#allocation13 + $0xe0] sm:$0xff]
        %v2251 = vld [vmem:[#allocation13 + $0xe8] sm:$0xff]
        %v2252 = vld [vmem:[#allocation13 + $0xf0] sm:$0xff]
        %v2253 = vld [vmem:[#allocation13 + $0xf8] sm:$0xff]
        %v2254 = vld [vmem:[#allocation13 + $0x100] sm:$0xff]
        %v2255 = vld [vmem:[#allocation13 + $0x108] sm:$0xff]
        %v2256 = vld [vmem:[#allocation13 + $0x110] sm:$0xff]
        %v2257 = vld [vmem:[#allocation13 + $0x118] sm:$0xff]
        %v2258 = vld [vmem:[#allocation13 + $0x120] sm:$0xff]
        %v2259 = vld [vmem:[#allocation13 + $0x128] sm:$0xff]
        %v2260 = vld [vmem:[#allocation13 + $0x130] sm:$0xff]
        %v2261 = vld [vmem:[#allocation13 + $0x138] sm:$0xff]
        %v2262 = vld [vmem:[#allocation13 + $0x140] sm:$0xff]
        %v2263 = vld [vmem:[#allocation13 + $0x148] sm:$0xff]
        %v2264 = vld [vmem:[#allocation13 + $0x150] sm:$0xff]
        %v2265 = vld [vmem:[#allocation13 + $0x158] sm:$0xff]
        %v2266 = vld [vmem:[#allocation13 + $0x160] sm:$0xff]
        %v2267 = vld [vmem:[#allocation13 + $0x168] sm:$0xff]
        %v2268 = vld [vmem:[#allocation13 + $0x170] sm:$0xff]
        %v2269 = vld [vmem:[#allocation13 + $0x178] sm:$0xff]
        %v2270 = vld [vmem:[#allocation13 + $0x180] sm:$0xff]
        %v2271 = vld [vmem:[#allocation13 + $0x188] sm:$0xff]
        %v2272 = vld [vmem:[#allocation13 + $0x190] sm:$0xff]
        %v2273 = vld [vmem:[#allocation13 + $0x198] sm:$0xff]
        %v2274 = vld [vmem:[#allocation13 + $0x1a0] sm:$0xff]
        %v2275 = vld [vmem:[#allocation13 + $0x1a8] sm:$0xff]
        %v2276 = vld [vmem:[#allocation13 + $0x1b0] sm:$0xff]
        %v2277 = vld [vmem:[#allocation13 + $0x1b8] sm:$0xff]
        %v2278 = vld [vmem:[#allocation13 + $0x1c0] sm:$0xff]
        %v2279 = vld [vmem:[#allocation13 + $0x1c8] sm:$0xff]
        %v2280 = vld [vmem:[#allocation13 + $0x1d0] sm:$0xff]
        %v2281 = vld [vmem:[#allocation13 + $0x1d8] sm:$0xff]
        %v2282 = vld [vmem:[#allocation13 + $0x1e0] sm:$0xff]
        %v2283 = vld [vmem:[#allocation13 + $0x1e8] sm:$0xff]
        %v2284 = vld [vmem:[#allocation13 + $0x1f0] sm:$0xff]
        %v2285 = vld [vmem:[#allocation13 + $0x1f8] sm:$0xff]
        %s2286 = scalar_lea.vmem [#allocation13], 512
        %v2287 = vld [vmem:[%s2286] sm:$0xff]
        %v2288 = vld [vmem:[%s2286 + $0x8] sm:$0xff]
        %v2289 = vld [vmem:[%s2286 + $0x10] sm:$0xff]
        %v2290 = vld [vmem:[%s2286 + $0x18] sm:$0xff]
        %v2291 = vld [vmem:[%s2286 + $0x20] sm:$0xff]
        %v2292 = vld [vmem:[%s2286 + $0x28] sm:$0xff]
        %v2293 = vld [vmem:[%s2286 + $0x30] sm:$0xff]
        %v2294 = vld [vmem:[%s2286 + $0x38] sm:$0xff]
        %v2295 = vld [vmem:[%s2286 + $0x40] sm:$0xff]
        %v2296 = vld [vmem:[%s2286 + $0x48] sm:$0xff]
        %v2297 = vld [vmem:[%s2286 + $0x50] sm:$0xff]
        %v2298 = vld [vmem:[%s2286 + $0x58] sm:$0xff]
        %v2299 = vld [vmem:[%s2286 + $0x60] sm:$0xff]
        %v2300 = vld [vmem:[%s2286 + $0x68] sm:$0xff]
        %v2301 = vld [vmem:[%s2286 + $0x70] sm:$0xff]
        %v2302 = vld [vmem:[%s2286 + $0x78] sm:$0xff]
        %v2303 = vld [vmem:[%s2286 + $0x80] sm:$0xff]
        %v2304 = vld [vmem:[%s2286 + $0x88] sm:$0xff]
        %v2305 = vld [vmem:[%s2286 + $0x90] sm:$0xff]
        %v2306 = vld [vmem:[%s2286 + $0x98] sm:$0xff]
        %v2307 = vld [vmem:[%s2286 + $0xa0] sm:$0xff]
        %v2308 = vld [vmem:[%s2286 + $0xa8] sm:$0xff]
        %v2309 = vld [vmem:[%s2286 + $0xb0] sm:$0xff]
        %v2310 = vld [vmem:[%s2286 + $0xb8] sm:$0xff]
        %v2311 = vld [vmem:[%s2286 + $0xc0] sm:$0xff]
        %v2312 = vld [vmem:[%s2286 + $0xc8] sm:$0xff]
        %v2313 = vld [vmem:[%s2286 + $0xd0] sm:$0xff]
        %v2314 = vld [vmem:[%s2286 + $0xd8] sm:$0xff]
        %v2315 = vld [vmem:[%s2286 + $0xe0] sm:$0xff]
        %v2316 = vld [vmem:[%s2286 + $0xe8] sm:$0xff]
        %v2317 = vld [vmem:[%s2286 + $0xf0] sm:$0xff]
        %v2318 = vld [vmem:[%s2286 + $0xf8] sm:$0xff]
        %v2319 = vld [vmem:[%s2286 + $0x100] sm:$0xff]
        %v2320 = vld [vmem:[%s2286 + $0x108] sm:$0xff]
        %v2321 = vld [vmem:[%s2286 + $0x110] sm:$0xff]
        %v2322 = vld [vmem:[%s2286 + $0x118] sm:$0xff]
        %v2323 = vld [vmem:[%s2286 + $0x120] sm:$0xff]
        %v2324 = vld [vmem:[%s2286 + $0x128] sm:$0xff]
        %v2325 = vld [vmem:[%s2286 + $0x130] sm:$0xff]
        %v2326 = vld [vmem:[%s2286 + $0x138] sm:$0xff]
        %v2327 = vld [vmem:[%s2286 + $0x140] sm:$0xff]
        %v2328 = vld [vmem:[%s2286 + $0x148] sm:$0xff]
        %v2329 = vld [vmem:[%s2286 + $0x150] sm:$0xff]
        %v2330 = vld [vmem:[%s2286 + $0x158] sm:$0xff]
        %v2331 = vld [vmem:[%s2286 + $0x160] sm:$0xff]
        %v2332 = vld [vmem:[%s2286 + $0x168] sm:$0xff]
        %v2333 = vld [vmem:[%s2286 + $0x170] sm:$0xff]
        %v2334 = vld [vmem:[%s2286 + $0x178] sm:$0xff]
        %v2335 = vld [vmem:[%s2286 + $0x180] sm:$0xff]
        %v2336 = vld [vmem:[%s2286 + $0x188] sm:$0xff]
        %v2337 = vld [vmem:[%s2286 + $0x190] sm:$0xff]
        %v2338 = vld [vmem:[%s2286 + $0x198] sm:$0xff]
        %v2339 = vld [vmem:[%s2286 + $0x1a0] sm:$0xff]
        %v2340 = vld [vmem:[%s2286 + $0x1a8] sm:$0xff]
        %v2341 = vld [vmem:[%s2286 + $0x1b0] sm:$0xff]
        %v2342 = vld [vmem:[%s2286 + $0x1b8] sm:$0xff]
        %v2343 = vld [vmem:[%s2286 + $0x1c0] sm:$0xff]
        %v2344 = vld [vmem:[%s2286 + $0x1c8] sm:$0xff]
        %v2345 = vld [vmem:[%s2286 + $0x1d0] sm:$0xff]
        %v2346 = vld [vmem:[%s2286 + $0x1d8] sm:$0xff]
        %v2347 = vld [vmem:[%s2286 + $0x1e0] sm:$0xff]
        %v2348 = vld [vmem:[%s2286 + $0x1e8] sm:$0xff]
        %v2349 = vld [vmem:[%s2286 + $0x1f0] sm:$0xff]
        %v2350 = vld [vmem:[%s2286 + $0x1f8] sm:$0xff]
        %2351 = vmatprep.subr.mxu0 0.0
        %2352 = vmatpush1.msra.mxu0 %v2287
        %2353 = vmatprep.subr.mxu0 0.0
        %2354 = vmatpush1.msra.mxu0 %v2288
        %2355 = vmatprep.subr.mxu0 0.0
        %2356 = vmatpush1.msra.mxu0 %v2289
        %2357 = vmatprep.subr.mxu0 0.0
        %2358 = vmatpush1.msra.mxu0 %v2290
        %2359 = vmatprep.subr.mxu0 0.0
        %2360 = vmatpush1.msra.mxu0 %v2291
        %2361 = vmatprep.subr.mxu0 0.0
        %2362 = vmatpush1.msra.mxu0 %v2292
        %2363 = vmatprep.subr.mxu0 0.0
        %2364 = vmatpush1.msra.mxu0 %v2293
        %2365 = vmatprep.subr.mxu0 0.0
        %2366 = vmatpush1.msra.mxu0 %v2294
        %2367 = vmatprep.subr.mxu0 0.0
        %2368 = vmatpush1.msra.mxu0 %v2295
        %2369 = vmatprep.subr.mxu0 0.0
        %2370 = vmatpush1.msra.mxu0 %v2296
        %2371 = vmatprep.subr.mxu0 0.0
        %2372 = vmatpush1.msra.mxu0 %v2297
        %2373 = vmatprep.subr.mxu0 0.0
        %2374 = vmatpush1.msra.mxu0 %v2298
        %2375 = vmatprep.subr.mxu0 0.0
        %2376 = vmatpush1.msra.mxu0 %v2299
        %2377 = vmatprep.subr.mxu0 0.0
        %2378 = vmatpush1.msra.mxu0 %v2300
        %2379 = vmatprep.subr.mxu0 0.0
        %2380 = vmatpush1.msra.mxu0 %v2301
        %2381 = vmatprep.subr.mxu0 0.0
        %2382 = vmatpush1.msra.mxu0 %v2302
        %2383 = vmatprep.subr.mxu0 0.0
        %2384 = vmatpush1.msra.mxu0 %v2303
        %2385 = vmatprep.subr.mxu0 0.0
        %2386 = vmatpush1.msra.mxu0 %v2304
        %2387 = vmatprep.subr.mxu0 0.0
        %2388 = vmatpush1.msra.mxu0 %v2305
        %2389 = vmatprep.subr.mxu0 0.0
        %2390 = vmatpush1.msra.mxu0 %v2306
        %2391 = vmatprep.subr.mxu0 0.0
        %2392 = vmatpush1.msra.mxu0 %v2307
        %2393 = vmatprep.subr.mxu0 0.0
        %2394 = vmatpush1.msra.mxu0 %v2308
        %2395 = vmatprep.subr.mxu0 0.0
        %2396 = vmatpush1.msra.mxu0 %v2309
        %2397 = vmatprep.subr.mxu0 0.0
        %2398 = vmatpush1.msra.mxu0 %v2310
        %2399 = vmatprep.subr.mxu0 0.0
        %2400 = vmatpush1.msra.mxu0 %v2311
        %2401 = vmatprep.subr.mxu0 0.0
        %2402 = vmatpush1.msra.mxu0 %v2312
        %2403 = vmatprep.subr.mxu0 0.0
        %2404 = vmatpush1.msra.mxu0 %v2313
        %2405 = vmatprep.subr.mxu0 0.0
        %2406 = vmatpush1.msra.mxu0 %v2314
        %2407 = vmatprep.subr.mxu0 0.0
        %2408 = vmatpush1.msra.mxu0 %v2315
        %2409 = vmatprep.subr.mxu0 0.0
        %2410 = vmatpush1.msra.mxu0 %v2316
        %2411 = vmatprep.subr.mxu0 0.0
        %2412 = vmatpush1.msra.mxu0 %v2317
        %2413 = vmatprep.subr.mxu0 0.0
        %2414 = vmatpush1.msra.mxu0 %v2318
        %2415 = vmatprep.mubr.f32.mxu0 %v2219
        %2416 = vmatmul.mubr.f32.gmra.mrb[0].mxu0 %v2218
        %v2417 = vpop.f32.mrb[0].mxu0
        %v2418 = vadd.f32 0.0, %v2417
        %v2419 = vpop.f32.mrb[0].mxu0
        %2420 = vdwg.mxu0
        %2421 = vmatprep.subr.mxu0 0.0
        %2422 = vmatpush1.msra.mxu0 %v2319
        %2423 = vmatprep.subr.mxu0 0.0
        %2424 = vmatpush1.msra.mxu0 %v2320
        %2425 = vmatprep.subr.mxu0 0.0
        %2426 = vmatpush1.msra.mxu0 %v2321
        %2427 = vmatprep.subr.mxu0 0.0
        %2428 = vmatpush1.msra.mxu0 %v2322
        %2429 = vmatprep.subr.mxu0 0.0
        %2430 = vmatpush1.msra.mxu0 %v2323
        %2431 = vmatprep.subr.mxu0 0.0
        %2432 = vmatpush1.msra.mxu0 %v2324
        %2433 = vmatprep.subr.mxu0 0.0
        %2434 = vmatpush1.msra.mxu0 %v2325
        %2435 = vmatprep.subr.mxu0 0.0
        %2436 = vmatpush1.msra.mxu0 %v2326
        %2437 = vmatprep.subr.mxu0 0.0
        %2438 = vmatpush1.msra.mxu0 %v2327
        %2439 = vmatprep.subr.mxu0 0.0
        %2440 = vmatpush1.msra.mxu0 %v2328
        %2441 = vmatprep.subr.mxu0 0.0
        %2442 = vmatpush1.msra.mxu0 %v2329
        %2443 = vmatprep.subr.mxu0 0.0
        %2444 = vmatpush1.msra.mxu0 %v2330
        %2445 = vmatprep.subr.mxu0 0.0
        %2446 = vmatpush1.msra.mxu0 %v2331
        %2447 = vmatprep.subr.mxu0 0.0
        %2448 = vmatpush1.msra.mxu0 %v2332
        %2449 = vmatprep.subr.mxu0 0.0
        %2450 = vmatpush1.msra.mxu0 %v2333
        %2451 = vmatprep.subr.mxu0 0.0
        %2452 = vmatpush1.msra.mxu0 %v2334
        %2453 = vmatprep.subr.mxu0 0.0
        %2454 = vmatpush1.msra.mxu0 %v2335
        %2455 = vmatprep.subr.mxu0 0.0
        %2456 = vmatpush1.msra.mxu0 %v2336
        %2457 = vmatprep.subr.mxu0 0.0
        %2458 = vmatpush1.msra.mxu0 %v2337
        %2459 = vmatprep.subr.mxu0 0.0
        %2460 = vmatpush1.msra.mxu0 %v2338
        %2461 = vmatprep.subr.mxu0 0.0
        %2462 = vmatpush1.msra.mxu0 %v2339
        %2463 = vmatprep.subr.mxu0 0.0
        %2464 = vmatpush1.msra.mxu0 %v2340
        %2465 = vmatprep.subr.mxu0 0.0
        %2466 = vmatpush1.msra.mxu0 %v2341
        %2467 = vmatprep.subr.mxu0 0.0
        %2468 = vmatpush1.msra.mxu0 %v2342
        %2469 = vmatprep.subr.mxu0 0.0
        %2470 = vmatpush1.msra.mxu0 %v2343
        %2471 = vmatprep.subr.mxu0 0.0
        %2472 = vmatpush1.msra.mxu0 %v2344
        %2473 = vmatprep.subr.mxu0 0.0
        %2474 = vmatpush1.msra.mxu0 %v2345
        %2475 = vmatprep.subr.mxu0 0.0
        %2476 = vmatpush1.msra.mxu0 %v2346
        %2477 = vmatprep.subr.mxu0 0.0
        %2478 = vmatpush1.msra.mxu0 %v2347
        %2479 = vmatprep.subr.mxu0 0.0
        %2480 = vmatpush1.msra.mxu0 %v2348
        %2481 = vmatprep.subr.mxu0 0.0
        %2482 = vmatpush1.msra.mxu0 %v2349
        %2483 = vmatprep.subr.mxu0 0.0
        %2484 = vmatpush1.msra.mxu0 %v2350
        %2485 = vmatprep.mubr.f32.mxu0 %v2221
        %2486 = vmatmul.mubr.f32.gmra.mrb[0].mxu0 %v2220
        %v2487 = vpop.f32.mrb[0].mxu0
        %v2488 = vadd.f32 %v2418, %v2487
        %v2489 = vpop.f32.mrb[0].mxu0
        %2490 = vdwg.mxu0
        %2491 = vmatprep.subr.mxu0 0.0
        %2492 = vmatpush1.msra.mxu0 %v2222
        %2493 = vmatprep.subr.mxu0 0.0
        %2494 = vmatpush1.msra.mxu0 %v2223
        %2495 = vmatprep.subr.mxu0 0.0
        %2496 = vmatpush1.msra.mxu0 %v2224
        %2497 = vmatprep.subr.mxu0 0.0
        %2498 = vmatpush1.msra.mxu0 %v2225
        %2499 = vmatprep.subr.mxu0 0.0
        %2500 = vmatpush1.msra.mxu0 %v2226
        %2501 = vmatprep.subr.mxu0 0.0
        %2502 = vmatpush1.msra.mxu0 %v2227
        %2503 = vmatprep.subr.mxu0 0.0
        %2504 = vmatpush1.msra.mxu0 %v2228
        %2505 = vmatprep.subr.mxu0 0.0
        %2506 = vmatpush1.msra.mxu0 %v2229
        %2507 = vmatprep.subr.mxu0 0.0
        %2508 = vmatpush1.msra.mxu0 %v2230
        %2509 = vmatprep.subr.mxu0 0.0
        %2510 = vmatpush1.msra.mxu0 %v2231
        %2511 = vmatprep.subr.mxu0 0.0
        %2512 = vmatpush1.msra.mxu0 %v2232
        %2513 = vmatprep.subr.mxu0 0.0
        %2514 = vmatpush1.msra.mxu0 %v2233
        %2515 = vmatprep.subr.mxu0 0.0
        %2516 = vmatpush1.msra.mxu0 %v2234
        %2517 = vmatprep.subr.mxu0 0.0
        %2518 = vmatpush1.msra.mxu0 %v2235
        %2519 = vmatprep.subr.mxu0 0.0
        %2520 = vmatpush1.msra.mxu0 %v2236
        %2521 = vmatprep.subr.mxu0 0.0
        %2522 = vmatpush1.msra.mxu0 %v2237
        %2523 = vmatprep.subr.mxu0 0.0
        %2524 = vmatpush1.msra.mxu0 %v2238
        %2525 = vmatprep.subr.mxu0 0.0
        %2526 = vmatpush1.msra.mxu0 %v2239
        %2527 = vmatprep.subr.mxu0 0.0
        %2528 = vmatpush1.msra.mxu0 %v2240
        %2529 = vmatprep.subr.mxu0 0.0
        %2530 = vmatpush1.msra.mxu0 %v2241
        %2531 = vmatprep.subr.mxu0 0.0
        %2532 = vmatpush1.msra.mxu0 %v2242
        %2533 = vmatprep.subr.mxu0 0.0
        %2534 = vmatpush1.msra.mxu0 %v2243
        %2535 = vmatprep.subr.mxu0 0.0
        %2536 = vmatpush1.msra.mxu0 %v2244
        %2537 = vmatprep.subr.mxu0 0.0
        %2538 = vmatpush1.msra.mxu0 %v2245
        %2539 = vmatprep.subr.mxu0 0.0
        %2540 = vmatpush1.msra.mxu0 %v2246
        %2541 = vmatprep.subr.mxu0 0.0
        %2542 = vmatpush1.msra.mxu0 %v2247
        %2543 = vmatprep.subr.mxu0 0.0
        %2544 = vmatpush1.msra.mxu0 %v2248
        %2545 = vmatprep.subr.mxu0 0.0
        %2546 = vmatpush1.msra.mxu0 %v2249
        %2547 = vmatprep.subr.mxu0 0.0
        %2548 = vmatpush1.msra.mxu0 %v2250
        %2549 = vmatprep.subr.mxu0 0.0
        %2550 = vmatpush1.msra.mxu0 %v2251
        %2551 = vmatprep.subr.mxu0 0.0
        %2552 = vmatpush1.msra.mxu0 %v2252
        %2553 = vmatprep.subr.mxu0 0.0
        %2554 = vmatpush1.msra.mxu0 %v2253
        %2555 = vmatprep.mubr.f32.mxu0 %v2215
        %2556 = vmatmul.mubr.f32.gmra.mrb[0].mxu0 %v2214
        %v2557 = vpop.f32.mrb[0].mxu0
        %v2558 = vadd.f32 %v2488, %v2557
        %v2559 = vpop.f32.mrb[0].mxu0
        %2560 = vdwg.mxu0
        %2561 = vmatprep.subr.mxu0 0.0
        %2562 = vmatpush1.msra.mxu0 %v2254
        %2563 = vmatprep.subr.mxu0 0.0
        %2564 = vmatpush1.msra.mxu0 %v2255
        %2565 = vmatprep.subr.mxu0 0.0
        %2566 = vmatpush1.msra.mxu0 %v2256
        %2567 = vmatprep.subr.mxu0 0.0
        %2568 = vmatpush1.msra.mxu0 %v2257
        %2569 = vmatprep.subr.mxu0 0.0
        %2570 = vmatpush1.msra.mxu0 %v2258
        %2571 = vmatprep.subr.mxu0 0.0
        %2572 = vmatpush1.msra.mxu0 %v2259
        %2573 = vmatprep.subr.mxu0 0.0
        %2574 = vmatpush1.msra.mxu0 %v2260
        %2575 = vmatprep.subr.mxu0 0.0
        %2576 = vmatpush1.msra.mxu0 %v2261
        %2577 = vmatprep.subr.mxu0 0.0
        %2578 = vmatpush1.msra.mxu0 %v2262
        %2579 = vmatprep.subr.mxu0 0.0
        %2580 = vmatpush1.msra.mxu0 %v2263
        %2581 = vmatprep.subr.mxu0 0.0
        %2582 = vmatpush1.msra.mxu0 %v2264
        %2583 = vmatprep.subr.mxu0 0.0
        %2584 = vmatpush1.msra.mxu0 %v2265
        %2585 = vmatprep.subr.mxu0 0.0
        %2586 = vmatpush1.msra.mxu0 %v2266
        %2587 = vmatprep.subr.mxu0 0.0
        %2588 = vmatpush1.msra.mxu0 %v2267
        %2589 = vmatprep.subr.mxu0 0.0
        %2590 = vmatpush1.msra.mxu0 %v2268
        %2591 = vmatprep.subr.mxu0 0.0
        %2592 = vmatpush1.msra.mxu0 %v2269
        %2593 = vmatprep.subr.mxu0 0.0
        %2594 = vmatpush1.msra.mxu0 %v2270
        %2595 = vmatprep.subr.mxu0 0.0
        %2596 = vmatpush1.msra.mxu0 %v2271
        %2597 = vmatprep.subr.mxu0 0.0
        %2598 = vmatpush1.msra.mxu0 %v2272
        %2599 = vmatprep.subr.mxu0 0.0
        %2600 = vmatpush1.msra.mxu0 %v2273
        %2601 = vmatprep.subr.mxu0 0.0
        %2602 = vmatpush1.msra.mxu0 %v2274
        %2603 = vmatprep.subr.mxu0 0.0
        %2604 = vmatpush1.msra.mxu0 %v2275
        %2605 = vmatprep.subr.mxu0 0.0
        %2606 = vmatpush1.msra.mxu0 %v2276
        %2607 = vmatprep.subr.mxu0 0.0
        %2608 = vmatpush1.msra.mxu0 %v2277
        %2609 = vmatprep.subr.mxu0 0.0
        %2610 = vmatpush1.msra.mxu0 %v2278
        %2611 = vmatprep.subr.mxu0 0.0
        %2612 = vmatpush1.msra.mxu0 %v2279
        %2613 = vmatprep.subr.mxu0 0.0
        %2614 = vmatpush1.msra.mxu0 %v2280
        %2615 = vmatprep.subr.mxu0 0.0
        %2616 = vmatpush1.msra.mxu0 %v2281
        %2617 = vmatprep.subr.mxu0 0.0
        %2618 = vmatpush1.msra.mxu0 %v2282
        %2619 = vmatprep.subr.mxu0 0.0
        %2620 = vmatpush1.msra.mxu0 %v2283
        %2621 = vmatprep.subr.mxu0 0.0
        %2622 = vmatpush1.msra.mxu0 %v2284
        %2623 = vmatprep.subr.mxu0 0.0
        %2624 = vmatpush1.msra.mxu0 %v2285
        %2625 = vmatprep.mubr.f32.mxu0 %v2217
        %2626 = vmatmul.mubr.f32.gmra.mrb[0].mxu0 %v2216
        %v2627 = vpop.f32.mrb[0].mxu0
        %v2628 = vadd.f32 %v2558, %v2627
        %v2629 = vpop.f32.mrb[0].mxu0
        %2630 = vdwg.mxu0
        %v2631 = vld [vmem:[%s6] sm:$0x1]
        %v2633 = vlaneseq
        %v2634 = vshrl.u32 %v2633, 7
        %v2635 = vsub.s32 0, %v2634
        %v2636 = vrot.slane %v2631, %v2635
        %v2638 = vadd.f32 %v2628, %v2636
        %v2639 = vxor.u32 %v2638, 2147483648
        %v2640 = vmul.f32 %v2639, 1.442695
        %v2641 = vpow.pop %v2640
        %v2642 = vadd.f32 %v2641, 1.0
        %v2643 = vrcp.pop %v2642
        %v2644 = vmul.f32 1.0, %v2643
        %2645 = vst [vmem:[%s399] sm:$0xff] %v2644
        %v2646 = vmul.f32 %v2644, 2.0
        %v2647 = vsub.f32 %v2646, 0.5
        %v2648 = vcvt.f32.s32.ties.to.even %v2647
        %v2649 = vand.u32 %v2648, 1
        %v2650 = vcvt.s32.f32 %v2649
        %2651 = vst [vmem:[%s392] sm:$0xff] %v2650
        %s2652 = sand.u32 %s193, 1
        %s2653 = scalar_lea.sflag [#allocation5], %s2652
        %s2654 = sand.u32 %s193, 1
        %s2655 = smul.addr %s2654, 8
        %s2656 = scalar_lea.vmem [#allocation15], %s2655
        %s2657 = sand.u32 %s219, 1
        %s2658 = scalar_lea.sflag [#allocation17], %s2657
        %s2659 = sand.u32 %s219, 1
        %s2660 = smul.addr %s2659, 8
        %s2661 = scalar_lea.vmem [#allocation16], %s2660
        // Predicated region
        $region73: #{tpu_custom_call.1} parent=47 // pred_check
          %p2662 = pneg %p203
        $region74: #{tpu_custom_call.1} parent=47 // pred_check_branch
          %2664 = sbr.rel (%p2662) target = $region76
        $region75: #{tpu_custom_call.1} parent=47 // pred_region
          %s2666 = ssub.s32 128, 128
          %2667 = vsyncadd %s2653, %s2666
          %s2668 = smul.addr %s33, 128
          %s2669 = scalar_lea.hbm %s7, %s2668
          %s2671 = sshll.u32 %s2656, 4
          %s2672 = int_to_ptr.vmem [resolvable:$true] %s2671
          %2674 = dma.vmem_to_hbm [thread:$0]  %s2672, 128, %s2669, %s2653
        $region76: #{tpu_custom_call.1} parent=47 // pred_fallthru
          _
        // Predicated region
        $region77: #{tpu_custom_call.1} parent=47 // pred_check
          %p2675 = pneg %p229
        $region78: #{tpu_custom_call.1} parent=47 // pred_check_branch
          %2677 = sbr.rel (%p2675) target = $region80
        $region79: #{tpu_custom_call.1} parent=47 // pred_region
          %s2679 = ssub.s32 128, 128
          %2680 = vsyncadd %s2658, %s2679
          %s2681 = smul.addr %s33, 128
          %s2682 = scalar_lea.hbm %s8, %s2681
          %s2684 = sshll.u32 %s2661, 4
          %s2685 = int_to_ptr.vmem [resolvable:$true] %s2684
          %2687 = dma.vmem_to_hbm [thread:$0]  %s2685, 128, %s2682, %s2658
        $region80: #{tpu_custom_call.1} parent=47 // pred_fallthru
          _
      $region48: #{tpu_custom_call.1} parent=5 // pred_fallthru
        _
      %p2688 = scmp.le.s32.totalorder 2, %s28
      // Predicated region
      $region81: #{tpu_custom_call.1} parent=5 // pred_check
        %p2689 = pneg %p2688
      $region82: #{tpu_custom_call.1} parent=5 // pred_check_branch
        %2691 = sbr.rel (%p2689) target = $region84
      $region83: #{tpu_custom_call.1} parent=5 // pred_region
        %s2692 = ssub.s32 %s28, 2
        // Predicated region
        $region85: #{tpu_custom_call.1} parent=83 // pred_check
          %p2693 = pneg %p209
        $region86: #{tpu_custom_call.1} parent=83 // pred_check_branch
          %2695 = sbr.rel (%p2693) target = $region88
        $region87: #{tpu_custom_call.1} parent=83 // pred_region
          %s2696 = sand.u32 %s194, 1
          %s2697 = scalar_lea.sflag [#allocation5], %s2696
          %s2698 = sand.u32 %s194, 1
          %s2699 = smul.addr %s2698, 8
          %s2700 = scalar_lea.vmem [#allocation15], %s2699
          %2701 = dma.done %s2697, 128
        $region88: #{tpu_custom_call.1} parent=83 // pred_fallthru
          _
        // Predicated region
        $region89: #{tpu_custom_call.1} parent=83 // pred_check
          %p2702 = pneg %p235
        $region90: #{tpu_custom_call.1} parent=83 // pred_check_branch
          %2704 = sbr.rel (%p2702) target = $region92
        $region91: #{tpu_custom_call.1} parent=83 // pred_region
          %s2705 = sand.u32 %s220, 1
          %s2706 = scalar_lea.sflag [#allocation17], %s2705
          %s2707 = sand.u32 %s220, 1
          %s2708 = smul.addr %s2707, 8
          %s2709 = scalar_lea.vmem [#allocation16], %s2708
          %2710 = dma.done %s2706, 128
        $region92: #{tpu_custom_call.1} parent=83 // pred_fallthru
          _
      $region84: #{tpu_custom_call.1} parent=5 // pred_fallthru
        _
    $region6: #{tpu_custom_call.1} parent=1 // loop_footer
      %s32 = sadd.s32 1, %s28
    $region7: #{tpu_custom_call.1} parent=1 // loop_footer_branch
      %27 = sbr.rel target = $region3
    $region8: #{tpu_custom_call.1} parent=1 // loop_exit
      _
    %2711 = vsyncpa [#allocation4], 1
    %s2712 = scalar_lea.sflag [#allocation4], 1
    %2713 = vsyncpa %s2712, 1
    %2714 = vsyncpa [#allocation14], 1
    %2715 = vsyncpa [#allocation5], 1
    %s2716 = scalar_lea.sflag [#allocation5], 1
    %2717 = vsyncpa %s2716, 1
    %2718 = vsyncpa [#allocation17], 1
    %s2719 = scalar_lea.sflag [#allocation17], 1
    %2720 = vsyncpa %s2719, 1
    %2721 = vsyncpa [#allocation6], 1
    %s2722 = scalar_lea.sflag [#allocation6], 1
    %2723 = vsyncpa %s2722, 1
    %2724 = vsyncpa [#allocation9], 1
    %2725 = vsyncpa [#allocation12], 1

</llo_original>
